<compile_context>
chip_gen: v7x
topology: tpu7x:2x2x1
jax: 0.10.0
libtpu: 0.0.40
codegen_flags: <defaults>
</compile_context>

<pallas_src>
import functools

import jax
import jax.numpy as jnp
from jax.experimental import pallas as pl
from jax.experimental.pallas import tpu as pltpu

EPS = 1e-5
_VMEM_LIMIT_BYTES = 48 * 1024 * 1024  # fits v5e/v6e/v7x; above scoped defaults


# ----------------------------------------------------------------------------
# Fused kernel: BN(scale,shift) + ReLU + zero-pad + 3x3 conv (stride) + bias
#               [+ identity residual  |  + fused 1x1 shortcut conv + add]
# ----------------------------------------------------------------------------
def _make_fused_conv_kernel(H, W, Ho, Wo, Cin, Cs, stride, row_tile, cout_tile,
                            mode, compute_dtype):
    """mode: "none" | "identity" (add residual) | "conv" (1x1 shortcut conv)."""
    TRo = row_tile

    def kernel(*refs):
        if mode == "none":
            x_ref, s_ref, h_ref, w_ref, b_ref, o_ref, yp_ref = refs
        elif mode == "identity":
            x_ref, s_ref, h_ref, w_ref, b_ref, r_ref, o_ref, yp_ref = refs
        else:  # "conv"
            (x_ref, s_ref, h_ref, w_ref, b_ref,
             sx_ref, ws_ref, bs_ref, o_ref, yp_ref) = refs

        r = pl.program_id(1)   # output-row-tile index
        c = pl.program_id(2)   # Cout-tile index

        # --- build the zero-padded BN+ReLU activation map once per image ----
        # (first inner grid step for this batch element).  Only the 1-pixel
        # border is zero-filled; the interior is fully overwritten.
        @pl.when((r == 0) & (c == 0))
        def _build():
            x = x_ref[...].astype(jnp.float32)              # (H, W, Cin)
            scale = s_ref[...].reshape(1, 1, Cin)
            shift = h_ref[...].reshape(1, 1, Cin)
            y = jnp.maximum(x * scale + shift, 0.0)
            zrow = jnp.zeros((1, W + 2, Cin), compute_dtype)
            yp_ref[pl.ds(0, 1), :, :] = zrow
            yp_ref[pl.ds(H + 1, 1), :, :] = zrow
            zcol = jnp.zeros((H, 1, Cin), compute_dtype)
            yp_ref[pl.ds(1, H), pl.ds(0, 1), :] = zcol
            yp_ref[pl.ds(1, H), pl.ds(W + 1, 1), :] = zcol
            yp_ref[pl.ds(1, H), pl.ds(1, W), :] = y.astype(compute_dtype)

        # --- 9 per-tap matmuls (K = Cin each) accumulated in f32 ------------
        # Taps are in-VMEM views of the padded map; strided reads compute only
        # the kept output pixels when stride > 1.
        acc = jnp.zeros((TRo * Wo, cout_tile), jnp.float32)
        row0 = r * (TRo * stride)   # padded-row offset of this output row tile
        for kh in range(3):
            for kw in range(3):
                if stride == 1:
                    t = yp_ref[pl.ds(row0 + kh, TRo), pl.ds(kw, Wo), :]
                else:
                    t = yp_ref[pl.ds(row0 + kh, TRo, stride=stride),
                               pl.ds(kw, Wo, stride=stride), :]
                t = t.reshape(TRo * Wo, Cin)                # already compute_dtype
                acc = acc + jnp.dot(t, w_ref[kh * 3 + kw],
                                    preferred_element_type=jnp.float32)
        acc = acc + b_ref[...].astype(jnp.float32)          # bias (1, cout_tile)

        # --- fused shortcut / residual ---------------------------------------
        if mode == "identity":
            acc = acc + r_ref[...].astype(jnp.float32)      # (TRo*Wo, cout_tile)
        elif mode == "conv":
            # strided 1x1 shortcut read directly from the full-resolution x tile
            if stride == 1:
                sx = sx_ref[pl.ds(r * TRo, TRo), pl.ds(0, Wo), :]
            else:
                sx = sx_ref[pl.ds(r * TRo * stride, TRo, stride=stride),
                            pl.ds(0, Wo, stride=stride), :]
            sx = sx.reshape(TRo * Wo, Cs).astype(compute_dtype)
            acc = acc + jnp.dot(sx, ws_ref[...],
                                preferred_element_type=jnp.float32)
            acc = acc + bs_ref[...].astype(jnp.float32)

        o_ref[...] = acc.astype(o_ref.dtype)                # (TRo*Wo, cout_tile)

    return kernel


# ----------------------------------------------------------------------------
# Pallas wrapper
# ----------------------------------------------------------------------------
def fused_bn_relu_conv3x3(x, scale, shift, w_hwio, b, *, stride=1,
                          residual=None, sc_x=None, sc_w=None, sc_b=None,
                          compute_dtype=jnp.bfloat16, out_dtype=None,
                          row_tile=None, cout_tile=None):
    """y = conv3x3(relu(x*scale+shift), stride, pad=1) + b [+ shortcut].

    x        : (N, H, W, Cin) NHWC
    residual : (N, Ho, Wo, Cout) identity-shortcut tensor to add (optional)
    sc_x     : (N, H, W, Cs) full-resolution input of a fused 1x1 *strided*
               shortcut conv (optional; strided in-kernel)
    """
    N, H, W, Cin = x.shape
    Cout = w_hwio.shape[-1]
    Ho = (H - 1) // stride + 1
    Wo = (W - 1) // stride + 1
    out_dtype = out_dtype if out_dtype is not None else x.dtype

    if residual is not None:
        mode = "identity"
    elif sc_w is not None:
        mode = "conv"
    else:
        mode = "none"

    # Row tile (output rows / grid step): halo rows come from the shared
    # per-image VMEM scratch, so any divisor of Ho works.
    if row_tile is None:
        row_tile = 8 if Ho % 8 == 0 else Ho
    assert Ho % row_tile == 0, (Ho, row_tile)
    n_row = Ho // row_tile

    if cout_tile is None:
        cout_tile = Cout if Cout <= 256 else 256
    assert Cout % cout_tile == 0, (Cout, cout_tile)
    n_co = Cout // cout_tile

    # weights as (9, Cin, Cout): per-tap (Cin, Cout) blocks, rows = (kh, kw)
    w3 = w_hwio.reshape(9, Cin, Cout).astype(compute_dtype)

    inputs = [x,
              scale.reshape(1, Cin).astype(jnp.float32),
              shift.reshape(1, Cin).astype(jnp.float32),
              w3,
              b.reshape(1, Cout).astype(jnp.float32)]
    in_specs = [
        pl.BlockSpec((None, H, W, Cin), lambda n, r, c: (n, 0, 0, 0)),
        pl.BlockSpec((1, Cin), lambda n, r, c: (0, 0)),
        pl.BlockSpec((1, Cin), lambda n, r, c: (0, 0)),
        pl.BlockSpec((9, Cin, cout_tile), lambda n, r, c: (0, 0, c)),
        pl.BlockSpec((1, cout_tile), lambda n, r, c: (0, c)),
    ]
    Cs = 0
    if mode == "identity":
        inputs.append(residual.reshape(N, Ho * Wo, Cout))
        in_specs.append(pl.BlockSpec((None, row_tile * Wo, cout_tile),
                                     lambda n, r, c: (n, r, c)))
    elif mode == "conv":
        Cs = sc_x.shape[-1]
        inputs += [sc_x,
                   sc_w.reshape(Cs, Cout).astype(compute_dtype),
                   sc_b.reshape(1, Cout).astype(jnp.float32)]
        in_specs += [
            pl.BlockSpec((None, H, W, Cs), lambda n, r, c: (n, 0, 0, 0)),
            pl.BlockSpec((Cs, cout_tile), lambda n, r, c: (0, c)),
            pl.BlockSpec((1, cout_tile), lambda n, r, c: (0, c)),
        ]

    kernel = _make_fused_conv_kernel(H, W, Ho, Wo, Cin, Cs, stride, row_tile,
                                     cout_tile, mode, compute_dtype)

    out = pl.pallas_call(
        kernel,
        out_shape=jax.ShapeDtypeStruct((N, Ho * Wo, Cout), out_dtype),
        grid=(N, n_row, n_co),
        in_specs=in_specs,
        out_specs=pl.BlockSpec((None, row_tile * Wo, cout_tile),
                               lambda n, r, c: (n, r, c)),
        scratch_shapes=[pltpu.VMEM((H + 2, W + 2, Cin), compute_dtype)],
        compiler_params=pltpu.CompilerParams(
            dimension_semantics=("parallel", "arbitrary", "arbitrary"),
            vmem_limit_bytes=_VMEM_LIMIT_BYTES),
    )(*inputs)
    return out.reshape(N, Ho, Wo, Cout)


# ----------------------------------------------------------------------------
# WideBlock forward (two fused pallas_calls)
# ----------------------------------------------------------------------------
def init_wide_block_params(key, in_planes, planes, stride=1):
    ks = jax.random.split(key, 16)

    def conv_w(k, shape):  # HWIO kaiming-ish init
        fan_in = shape[0] * shape[1] * shape[2]
        return (2.0 / fan_in) ** 0.5 * jax.random.normal(k, shape, jnp.float32)

    p = {
        "bn1_gamma": 1.0 + 0.1 * jax.random.normal(ks[0], (in_planes,), jnp.float32),
        "bn1_beta": 0.1 * jax.random.normal(ks[1], (in_planes,), jnp.float32),
        "bn1_mean": 0.1 * jax.random.normal(ks[2], (in_planes,), jnp.float32),
        "bn1_var": 1.0 + 0.1 * jax.random.uniform(ks[3], (in_planes,), jnp.float32),
        "w1": conv_w(ks[4], (3, 3, in_planes, planes)),
        "b1": 0.1 * jax.random.normal(ks[5], (planes,), jnp.float32),
        "bn2_gamma": 1.0 + 0.1 * jax.random.normal(ks[6], (planes,), jnp.float32),
        "bn2_beta": 0.1 * jax.random.normal(ks[7], (planes,), jnp.float32),
        "bn2_mean": 0.1 * jax.random.normal(ks[8], (planes,), jnp.float32),
        "bn2_var": 1.0 + 0.1 * jax.random.uniform(ks[9], (planes,), jnp.float32),
        "w2": conv_w(ks[10], (3, 3, planes, planes)),
        "b2": 0.1 * jax.random.normal(ks[11], (planes,), jnp.float32),
    }
    if stride != 1 or in_planes != planes:
        p["ws"] = conv_w(ks[12], (1, 1, in_planes, planes))
        p["bs"] = 0.1 * jax.random.normal(ks[13], (planes,), jnp.float32)
    return p


def wide_block_forward(x_nchw, p, in_planes, planes, stride=1,
                       compute_dtype=jnp.bfloat16):
    # single NCHW -> NHWC transpose at the module boundary (drop it when the
    # whole network stays NHWC).
    x = jnp.transpose(x_nchw, (0, 2, 3, 1))

    # fold BN running stats into per-channel scale/shift (eval-mode BN)
    s1 = p["bn1_gamma"] / jnp.sqrt(p["bn1_var"] + EPS)
    h1 = p["bn1_beta"] - p["bn1_mean"] * s1
    s2 = p["bn2_gamma"] / jnp.sqrt(p["bn2_var"] + EPS)
    h2 = p["bn2_beta"] - p["bn2_mean"] * s2

    # kernel 1: bn1 + relu + conv1 (stride 1).  nn.Dropout is identity in eval.
    # c1 is written in compute_dtype (bf16 fast path) -> half the inter-kernel
    # HBM traffic.
    c1 = fused_bn_relu_conv3x3(x, s1, h1, p["w1"], p["b1"], stride=1,
                               compute_dtype=compute_dtype,
                               out_dtype=compute_dtype)

    # kernel 2: bn2 + relu + conv2(stride) + fused shortcut / residual add.
    if stride != 1 or in_planes != planes:
        out = fused_bn_relu_conv3x3(c1, s2, h2, p["w2"], p["b2"], stride=stride,
                                    sc_x=x, sc_w=p["ws"], sc_b=p["bs"],
                                    compute_dtype=compute_dtype,
                                    out_dtype=x.dtype)
    else:
        out = fused_bn_relu_conv3x3(c1, s2, h2, p["w2"], p["b2"], stride=stride,
                                    residual=x, compute_dtype=compute_dtype,
                                    out_dtype=x.dtype)

    return jnp.transpose(out, (0, 3, 1, 2))  # back to NCHW (module contract)


# ----------------------------------------------------------------------------
# Pure-JAX reference (lax conv) for validation
# ----------------------------------------------------------------------------
def ref_forward(x_nchw, p, in_planes, planes, stride=1):
    dn = ("NHWC", "HWIO", "NHWC")
    x = jnp.transpose(x_nchw, (0, 2, 3, 1))

    def bn_relu_ref(z, g, b, m, v):
        return jax.nn.relu((z - m) / jnp.sqrt(v + EPS) * g + b)

    y = bn_relu_ref(x, p["bn1_gamma"], p["bn1_beta"], p["bn1_mean"], p["bn1_var"])
    c1 = jax.lax.conv_general_dilated(
        y, p["w1"], (1, 1), ((1, 1), (1, 1)), dimension_numbers=dn) + p["b1"]
    y2 = bn_relu_ref(c1, p["bn2_gamma"], p["bn2_beta"], p["bn2_mean"], p["bn2_var"])
    c2 = jax.lax.conv_general_dilated(
        y2, p["w2"], (stride, stride), ((1, 1), (1, 1)), dimension_numbers=dn) + p["b2"]
    if stride != 1 or in_planes != planes:
        sc = jax.lax.conv_general_dilated(
            x, p["ws"], (stride, stride), ((0, 0), (0, 0)), dimension_numbers=dn) + p["bs"]
    else:
        sc = x
    return jnp.transpose(c2 + sc, (0, 3, 1, 2))


# ----------------------------------------------------------------------------
if __name__ == "__main__":
    key = jax.random.PRNGKey(0)
    N, H, W = 2, 16, 16

    # (in_planes, planes, stride): exercises all kernel-2 variants
    #   (4, 8, 1): fused 1x1-conv shortcut path (stride 1)
    #   (8, 8, 1): fused identity-residual path
    #   (4, 8, 2): strided conv2 taps + strided in-kernel 1x1 shortcut
    configs = [(4, 8, 1), (8, 8, 1), (4, 8, 2)]

    for idx, (in_planes, planes, stride) in enumerate(configs):
        k_x, k_p = jax.random.split(jax.random.fold_in(key, idx))
        x = jax.random.normal(k_x, (N, in_planes, H, W), jnp.float32)
        params = init_wide_block_params(k_p, in_planes, planes, stride)

        ref = ref_forward(x, params, in_planes, planes, stride)

        # f32 MXU operands: tight tolerance
        fwd = jax.jit(functools.partial(
            wide_block_forward, in_planes=in_planes, planes=planes,
            stride=stride, compute_dtype=jnp.float32))
        out = jax.block_until_ready(fwd(x, params))
        assert out.shape == ref.shape == (N, planes, H // stride, W // stride)
        assert jnp.allclose(out, ref, atol=1e-4, rtol=1e-4), float(
            jnp.max(jnp.abs(out - ref)))

        # bf16 MXU operands + bf16 intermediate c1 (the fast path): validate
        # with a relative-L2 bound.
        fwd_bf16 = jax.jit(functools.partial(
            wide_block_forward, in_planes=in_planes, planes=planes,
            stride=stride, compute_dtype=jnp.bfloat16))
        out_bf16 = jax.block_until_ready(fwd_bf16(x, params))
        rel = float(jnp.sqrt(jnp.sum((out_bf16.astype(jnp.float32) - ref) ** 2) /
                             jnp.sum(ref ** 2)))
        assert rel < 5e-2, rel

    print("KERNEL_OK")
</pallas_src>

<mosaic_0001>
module attributes {stable_mosaic.version = 11 : i64} {
  func.func @kernel(%arg0: i32, %arg1: i32, %arg2: i32, %arg3: memref<1x16x16x4xf32, #tpu.memory_space<vmem>>, %arg4: memref<1x4xf32, #tpu.memory_space<vmem>>, %arg5: memref<1x4xf32, #tpu.memory_space<vmem>>, %arg6: memref<9x4x8xf32, #tpu.memory_space<vmem>>, %arg7: memref<1x8xf32, #tpu.memory_space<vmem>>, %arg8: memref<1x128x8xf32, #tpu.memory_space<vmem>>, %arg9: memref<18x18x4xf32, #tpu.memory_space<vmem>>) attributes {dimension_semantics = [#tpu.dimension_semantics<parallel>, #tpu.dimension_semantics<arbitrary>, #tpu.dimension_semantics<arbitrary>], iteration_bounds = array<i64: 2, 2, 1>, scalar_prefetch = 0 : i64, scratch_operands = 1 : i64, tpu.core_type = #tpu.core_type<tc>, window_params = [{transform_indices = @transform_0, window_bounds = array<i64: 1, 16, 16, 4>}, {pipeline_mode = #tpu.pipeline_mode<synchronous>, transform_indices = @transform_1, window_bounds = array<i64: 1, 4>}, {pipeline_mode = #tpu.pipeline_mode<synchronous>, transform_indices = @transform_2, window_bounds = array<i64: 1, 4>}, {transform_indices = @transform_3, window_bounds = array<i64: 9, 4, 8>}, {transform_indices = @transform_4, window_bounds = array<i64: 1, 8>}, {transform_indices = @transform_5, window_bounds = array<i64: 1, 128, 8>}]} {
    %c0_i32 = arith.constant 0 : i32
    %0 = arith.cmpi eq, %arg1, %c0_i32 : i32
    %c0_i32_0 = arith.constant 0 : i32
    %1 = arith.cmpi eq, %arg2, %c0_i32_0 : i32
    %2 = arith.andi %0, %1 : i1
    %3 = arith.extui %2 : i1 to i32
    %c0_i32_1 = arith.constant 0 : i32
    %4 = arith.cmpi ne, %3, %c0_i32_1 : i32
    scf.if %4 {
      %c0_59 = arith.constant 0 : index
      %c0_60 = arith.constant 0 : index
      %c0_61 = arith.constant 0 : index
      %c0_62 = arith.constant 0 : index
      %85 = vector.load %arg3[%c0_59, %c0_60, %c0_61, %c0_62] : memref<1x16x16x4xf32, #tpu.memory_space<vmem>>, vector<1x16x16x4xf32>
      %86 = vector.shape_cast %85 : vector<1x16x16x4xf32> to vector<16x16x4xf32>
      %c0_63 = arith.constant 0 : index
      %c0_64 = arith.constant 0 : index
      %87 = vector.load %arg4[%c0_63, %c0_64] : memref<1x4xf32, #tpu.memory_space<vmem>>, vector<1x4xf32>
      %88 = vector.shape_cast %87 : vector<1x4xf32> to vector<1x1x4xf32>
      %c0_65 = arith.constant 0 : index
      %c0_66 = arith.constant 0 : index
      %89 = vector.load %arg5[%c0_65, %c0_66] : memref<1x4xf32, #tpu.memory_space<vmem>>, vector<1x4xf32>
      %90 = vector.shape_cast %89 : vector<1x4xf32> to vector<1x1x4xf32>
      %91 = vector.broadcast %88 : vector<1x1x4xf32> to vector<16x16x4xf32>
      %92 = arith.mulf %86, %91 : vector<16x16x4xf32>
      %93 = vector.broadcast %90 : vector<1x1x4xf32> to vector<16x16x4xf32>
      %94 = arith.addf %92, %93 : vector<16x16x4xf32>
      %cst_67 = arith.constant 0.000000e+00 : f32
      %95 = vector.broadcast %cst_67 : f32 to vector<16x16x4xf32>
      %96 = arith.maximumf %94, %95 : vector<16x16x4xf32>
      %cst_68 = arith.constant 0.000000e+00 : f32
      %97 = vector.broadcast %cst_68 : f32 to vector<1x18x4xf32>
      %c0_69 = arith.constant 0 : index
      %c0_70 = arith.constant 0 : index
      %c0_71 = arith.constant 0 : index
      %98 = vector.load %arg9[%c0_69, %c0_70, %c0_71] : memref<18x18x4xf32, #tpu.memory_space<vmem>>, vector<1x18x4xf32>
      tpu.vector_store %arg9[%c0_69, %c0_70, %c0_71], %97 {strides = array<i32>} : memref<18x18x4xf32, #tpu.memory_space<vmem>>, vector<1x18x4xf32>,
      %c17 = arith.constant 17 : index
      %c0_72 = arith.constant 0 : index
      %c0_73 = arith.constant 0 : index
      %99 = vector.load %arg9[%c17, %c0_72, %c0_73] : memref<18x18x4xf32, #tpu.memory_space<vmem>>, vector<1x18x4xf32>
      tpu.vector_store %arg9[%c17, %c0_72, %c0_73], %97 {strides = array<i32>} : memref<18x18x4xf32, #tpu.memory_space<vmem>>, vector<1x18x4xf32>,
      %cst_74 = arith.constant 0.000000e+00 : f32
      %100 = vector.broadcast %cst_74 : f32 to vector<16x1x4xf32>
      %c1_75 = arith.constant 1 : index
      %c0_76 = arith.constant 0 : index
      %c0_77 = arith.constant 0 : index
      %101 = vector.load %arg9[%c1_75, %c0_76, %c0_77] : memref<18x18x4xf32, #tpu.memory_space<vmem>>, vector<16x1x4xf32>
      tpu.vector_store %arg9[%c1_75, %c0_76, %c0_77], %100 {strides = array<i32>} : memref<18x18x4xf32, #tpu.memory_space<vmem>>, vector<16x1x4xf32>,
      %c1_78 = arith.constant 1 : index
      %c17_79 = arith.constant 17 : index
      %c0_80 = arith.constant 0 : index
      %102 = vector.load %arg9[%c1_78, %c17_79, %c0_80] : memref<18x18x4xf32, #tpu.memory_space<vmem>>, vector<16x1x4xf32>
      tpu.vector_store %arg9[%c1_78, %c17_79, %c0_80], %100 {strides = array<i32>} : memref<18x18x4xf32, #tpu.memory_space<vmem>>, vector<16x1x4xf32>,
      %c1_81 = arith.constant 1 : index
      %c1_82 = arith.constant 1 : index
      %c0_83 = arith.constant 0 : index
      %103 = vector.load %arg9[%c1_81, %c1_82, %c0_83] : memref<18x18x4xf32, #tpu.memory_space<vmem>>, vector<16x16x4xf32>
      tpu.vector_store %arg9[%c1_81, %c1_82, %c0_83], %96 {strides = array<i32>} : memref<18x18x4xf32, #tpu.memory_space<vmem>>, vector<16x16x4xf32>,
    } else {
    }
    %cst = arith.constant 0.000000e+00 : f32
    %5 = vector.broadcast %cst : f32 to vector<128x8xf32>
    %c8_i32 = arith.constant 8 : i32
    %6 = arith.muli %arg1, %c8_i32 : i32
    %c0_i32_2 = arith.constant 0 : i32
    %7 = arith.addi %6, %c0_i32_2 : i32
    %8 = arith.index_cast %7 : i32 to index
    %c0 = arith.constant 0 : index
    %c0_3 = arith.constant 0 : index
    %9 = vector.load %arg9[%8, %c0, %c0_3] : memref<18x18x4xf32, #tpu.memory_space<vmem>>, vector<8x16x4xf32>
    %10 = vector.shape_cast %9 : vector<8x16x4xf32> to vector<128x4xf32>
    %c0_4 = arith.constant 0 : index
    %c0_5 = arith.constant 0 : index
    %c0_6 = arith.constant 0 : index
    %11 = vector.load %arg6[%c0_4, %c0_5, %c0_6] : memref<9x4x8xf32, #tpu.memory_space<vmem>>, vector<1x4x8xf32>
    %12 = vector.shape_cast %11 : vector<1x4x8xf32> to vector<4x8xf32>
    %cst_7 = arith.constant dense<0.000000e+00> : vector<128x8xf32>
    %13 = tpu.matmul %10, %12, %cst_7 {dimension_numbers = #tpu.dot_dimension_numbers<[1], [0], [0], [1], [0, 0, 1, 1], [], []>} : vector<128x4xf32>, vector<4x8xf32>, vector<128x8xf32> -> vector<128x8xf32>
    %14 = arith.addf %5, %13 : vector<128x8xf32>
    %c0_i32_8 = arith.constant 0 : i32
    %15 = arith.addi %6, %c0_i32_8 : i32
    %16 = arith.index_cast %15 : i32 to index
    %c1 = arith.constant 1 : index
    %c0_9 = arith.constant 0 : index
    %17 = vector.load %arg9[%16, %c1, %c0_9] : memref<18x18x4xf32, #tpu.memory_space<vmem>>, vector<8x16x4xf32>
    %18 = vector.shape_cast %17 : vector<8x16x4xf32> to vector<128x4xf32>
    %c1_10 = arith.constant 1 : index
    %c0_11 = arith.constant 0 : index
    %c0_12 = arith.constant 0 : index
    %19 = vector.load %arg6[%c1_10, %c0_11, %c0_12] : memref<9x4x8xf32, #tpu.memory_space<vmem>>, vector<1x4x8xf32>
    %20 = vector.shape_cast %19 : vector<1x4x8xf32> to vector<4x8xf32>
    %cst_13 = arith.constant dense<0.000000e+00> : vector<128x8xf32>
    %21 = tpu.matmul %18, %20, %cst_13 {dimension_numbers = #tpu.dot_dimension_numbers<[1], [0], [0], [1], [0, 0, 1, 1], [], []>} : vector<128x4xf32>, vector<4x8xf32>, vector<128x8xf32> -> vector<128x8xf32>
    %22 = arith.addf %14, %21 : vector<128x8xf32>
    %c0_i32_14 = arith.constant 0 : i32
    %23 = arith.addi %6, %c0_i32_14 : i32
    %24 = arith.index_cast %23 : i32 to index
    %c2 = arith.constant 2 : index
    %c0_15 = arith.constant 0 : index
    %25 = vector.load %arg9[%24, %c2, %c0_15] : memref<18x18x4xf32, #tpu.memory_space<vmem>>, vector<8x16x4xf32>
    %26 = vector.shape_cast %25 : vector<8x16x4xf32> to vector<128x4xf32>
    %c2_16 = arith.constant 2 : index
    %c0_17 = arith.constant 0 : index
    %c0_18 = arith.constant 0 : index
    %27 = vector.load %arg6[%c2_16, %c0_17, %c0_18] : memref<9x4x8xf32, #tpu.memory_space<vmem>>, vector<1x4x8xf32>
    %28 = vector.shape_cast %27 : vector<1x4x8xf32> to vector<4x8xf32>
    %cst_19 = arith.constant dense<0.000000e+00> : vector<128x8xf32>
    %29 = tpu.matmul %26, %28, %cst_19 {dimension_numbers = #tpu.dot_dimension_numbers<[1], [0], [0], [1], [0, 0, 1, 1], [], []>} : vector<128x4xf32>, vector<4x8xf32>, vector<128x8xf32> -> vector<128x8xf32>
    %30 = arith.addf %22, %29 : vector<128x8xf32>
    %c1_i32 = arith.constant 1 : i32
    %31 = arith.addi %6, %c1_i32 : i32
    %32 = arith.index_cast %31 : i32 to index
    %c0_20 = arith.constant 0 : index
    %c0_21 = arith.constant 0 : index
    %33 = vector.load %arg9[%32, %c0_20, %c0_21] : memref<18x18x4xf32, #tpu.memory_space<vmem>>, vector<8x16x4xf32>
    %34 = vector.shape_cast %33 : vector<8x16x4xf32> to vector<128x4xf32>
    %c3 = arith.constant 3 : index
    %c0_22 = arith.constant 0 : index
    %c0_23 = arith.constant 0 : index
    %35 = vector.load %arg6[%c3, %c0_22, %c0_23] : memref<9x4x8xf32, #tpu.memory_space<vmem>>, vector<1x4x8xf32>
    %36 = vector.shape_cast %35 : vector<1x4x8xf32> to vector<4x8xf32>
    %cst_24 = arith.constant dense<0.000000e+00> : vector<128x8xf32>
    %37 = tpu.matmul %34, %36, %cst_24 {dimension_numbers = #tpu.dot_dimension_numbers<[1], [0], [0], [1], [0, 0, 1, 1], [], []>} : vector<128x4xf32>, vector<4x8xf32>, vector<128x8xf32> -> vector<128x8xf32>
    %38 = arith.addf %30, %37 : vector<128x8xf32>
    %c1_i32_25 = arith.constant 1 : i32
    %39 = arith.addi %6, %c1_i32_25 : i32
    %40 = arith.index_cast %39 : i32 to index
    %c1_26 = arith.constant 1 : index
    %c0_27 = arith.constant 0 : index
    %41 = vector.load %arg9[%40, %c1_26, %c0_27] : memref<18x18x4xf32, #tpu.memory_space<vmem>>, vector<8x16x4xf32>
    %42 = vector.shape_cast %41 : vector<8x16x4xf32> to vector<128x4xf32>
    %c4 = arith.constant 4 : index
    %c0_28 = arith.constant 0 : index
    %c0_29 = arith.constant 0 : index
    %43 = vector.load %arg6[%c4, %c0_28, %c0_29] : memref<9x4x8xf32, #tpu.memory_space<vmem>>, vector<1x4x8xf32>
    %44 = vector.shape_cast %43 : vector<1x4x8xf32> to vector<4x8xf32>
    %cst_30 = arith.constant dense<0.000000e+00> : vector<128x8xf32>
    %45 = tpu.matmul %42, %44, %cst_30 {dimension_numbers = #tpu.dot_dimension_numbers<[1], [0], [0], [1], [0, 0, 1, 1], [], []>} : vector<128x4xf32>, vector<4x8xf32>, vector<128x8xf32> -> vector<128x8xf32>
    %46 = arith.addf %38, %45 : vector<128x8xf32>
    %c1_i32_31 = arith.constant 1 : i32
    %47 = arith.addi %6, %c1_i32_31 : i32
    %48 = arith.index_cast %47 : i32 to index
    %c2_32 = arith.constant 2 : index
    %c0_33 = arith.constant 0 : index
    %49 = vector.load %arg9[%48, %c2_32, %c0_33] : memref<18x18x4xf32, #tpu.memory_space<vmem>>, vector<8x16x4xf32>
    %50 = vector.shape_cast %49 : vector<8x16x4xf32> to vector<128x4xf32>
    %c5 = arith.constant 5 : index
    %c0_34 = arith.constant 0 : index
    %c0_35 = arith.constant 0 : index
    %51 = vector.load %arg6[%c5, %c0_34, %c0_35] : memref<9x4x8xf32, #tpu.memory_space<vmem>>, vector<1x4x8xf32>
    %52 = vector.shape_cast %51 : vector<1x4x8xf32> to vector<4x8xf32>
    %cst_36 = arith.constant dense<0.000000e+00> : vector<128x8xf32>
    %53 = tpu.matmul %50, %52, %cst_36 {dimension_numbers = #tpu.dot_dimension_numbers<[1], [0], [0], [1], [0, 0, 1, 1], [], []>} : vector<128x4xf32>, vector<4x8xf32>, vector<128x8xf32> -> vector<128x8xf32>
    %54 = arith.addf %46, %53 : vector<128x8xf32>
    %c2_i32 = arith.constant 2 : i32
    %55 = arith.addi %6, %c2_i32 : i32
    %56 = arith.index_cast %55 : i32 to index
    %c0_37 = arith.constant 0 : index
    %c0_38 = arith.constant 0 : index
    %57 = vector.load %arg9[%56, %c0_37, %c0_38] : memref<18x18x4xf32, #tpu.memory_space<vmem>>, vector<8x16x4xf32>
    %58 = vector.shape_cast %57 : vector<8x16x4xf32> to vector<128x4xf32>
    %c6 = arith.constant 6 : index
    %c0_39 = arith.constant 0 : index
    %c0_40 = arith.constant 0 : index
    %59 = vector.load %arg6[%c6, %c0_39, %c0_40] : memref<9x4x8xf32, #tpu.memory_space<vmem>>, vector<1x4x8xf32>
    %60 = vector.shape_cast %59 : vector<1x4x8xf32> to vector<4x8xf32>
    %cst_41 = arith.constant dense<0.000000e+00> : vector<128x8xf32>
    %61 = tpu.matmul %58, %60, %cst_41 {dimension_numbers = #tpu.dot_dimension_numbers<[1], [0], [0], [1], [0, 0, 1, 1], [], []>} : vector<128x4xf32>, vector<4x8xf32>, vector<128x8xf32> -> vector<128x8xf32>
    %62 = arith.addf %54, %61 : vector<128x8xf32>
    %c2_i32_42 = arith.constant 2 : i32
    %63 = arith.addi %6, %c2_i32_42 : i32
    %64 = arith.index_cast %63 : i32 to index
    %c1_43 = arith.constant 1 : index
    %c0_44 = arith.constant 0 : index
    %65 = vector.load %arg9[%64, %c1_43, %c0_44] : memref<18x18x4xf32, #tpu.memory_space<vmem>>, vector<8x16x4xf32>
    %66 = vector.shape_cast %65 : vector<8x16x4xf32> to vector<128x4xf32>
    %c7 = arith.constant 7 : index
    %c0_45 = arith.constant 0 : index
    %c0_46 = arith.constant 0 : index
    %67 = vector.load %arg6[%c7, %c0_45, %c0_46] : memref<9x4x8xf32, #tpu.memory_space<vmem>>, vector<1x4x8xf32>
    %68 = vector.shape_cast %67 : vector<1x4x8xf32> to vector<4x8xf32>
    %cst_47 = arith.constant dense<0.000000e+00> : vector<128x8xf32>
    %69 = tpu.matmul %66, %68, %cst_47 {dimension_numbers = #tpu.dot_dimension_numbers<[1], [0], [0], [1], [0, 0, 1, 1], [], []>} : vector<128x4xf32>, vector<4x8xf32>, vector<128x8xf32> -> vector<128x8xf32>
    %70 = arith.addf %62, %69 : vector<128x8xf32>
    %c2_i32_48 = arith.constant 2 : i32
    %71 = arith.addi %6, %c2_i32_48 : i32
    %72 = arith.index_cast %71 : i32 to index
    %c2_49 = arith.constant 2 : index
    %c0_50 = arith.constant 0 : index
    %73 = vector.load %arg9[%72, %c2_49, %c0_50] : memref<18x18x4xf32, #tpu.memory_space<vmem>>, vector<8x16x4xf32>
    %74 = vector.shape_cast %73 : vector<8x16x4xf32> to vector<128x4xf32>
    %c8 = arith.constant 8 : index
    %c0_51 = arith.constant 0 : index
    %c0_52 = arith.constant 0 : index
    %75 = vector.load %arg6[%c8, %c0_51, %c0_52] : memref<9x4x8xf32, #tpu.memory_space<vmem>>, vector<1x4x8xf32>
    %76 = vector.shape_cast %75 : vector<1x4x8xf32> to vector<4x8xf32>
    %cst_53 = arith.constant dense<0.000000e+00> : vector<128x8xf32>
    %77 = tpu.matmul %74, %76, %cst_53 {dimension_numbers = #tpu.dot_dimension_numbers<[1], [0], [0], [1], [0, 0, 1, 1], [], []>} : vector<128x4xf32>, vector<4x8xf32>, vector<128x8xf32> -> vector<128x8xf32>
    %78 = arith.addf %70, %77 : vector<128x8xf32>
    %c0_54 = arith.constant 0 : index
    %c0_55 = arith.constant 0 : index
    %79 = vector.load %arg7[%c0_54, %c0_55] : memref<1x8xf32, #tpu.memory_space<vmem>>, vector<1x8xf32>
    %80 = vector.broadcast %79 : vector<1x8xf32> to vector<128x8xf32>
    %81 = arith.addf %78, %80 : vector<128x8xf32>
    %c0_56 = arith.constant 0 : index
    %c0_57 = arith.constant 0 : index
    %c0_58 = arith.constant 0 : index
    %82 = vector.load %arg8[%c0_56, %c0_57, %c0_58] : memref<1x128x8xf32, #tpu.memory_space<vmem>>, vector<1x128x8xf32>
    %83 = vector.shape_cast %82 : vector<1x128x8xf32> to vector<128x8xf32>
    %84 = vector.shape_cast %81 : vector<128x8xf32> to vector<1x128x8xf32>
    tpu.vector_store %arg8[%c0_56, %c0_57, %c0_58], %84 {strides = array<i32>} : memref<1x128x8xf32, #tpu.memory_space<vmem>>, vector<1x128x8xf32>,
    return
  }
  func.func @transform_0(%arg0: i32, %arg1: i32, %arg2: i32) -> (i32, i32, i32, i32) {
    %c0_i32 = arith.constant 0 : i32
    %c0_i32_0 = arith.constant 0 : i32
    %c0_i32_1 = arith.constant 0 : i32
    %c0_i32_2 = arith.constant 0 : i32
    return %arg0, %c0_i32, %c0_i32_0, %c0_i32_1 : i32, i32, i32, i32
  }
  func.func @transform_1(%arg0: i32, %arg1: i32, %arg2: i32) -> (i32, i32) {
    %c0_i32 = arith.constant 0 : i32
    %c0_i32_0 = arith.constant 0 : i32
    %c0_i32_1 = arith.constant 0 : i32
    return %c0_i32, %c0_i32_0 : i32, i32
  }
  func.func @transform_2(%arg0: i32, %arg1: i32, %arg2: i32) -> (i32, i32) {
    %c0_i32 = arith.constant 0 : i32
    %c0_i32_0 = arith.constant 0 : i32
    %c0_i32_1 = arith.constant 0 : i32
    return %c0_i32, %c0_i32_0 : i32, i32
  }
  func.func @transform_3(%arg0: i32, %arg1: i32, %arg2: i32) -> (i32, i32, i32) {
    %c0_i32 = arith.constant 0 : i32
    %c0_i32_0 = arith.constant 0 : i32
    %c0_i32_1 = arith.constant 0 : i32
    return %c0_i32, %c0_i32_0, %arg2 : i32, i32, i32
  }
  func.func @transform_4(%arg0: i32, %arg1: i32, %arg2: i32) -> (i32, i32) {
    %c0_i32 = arith.constant 0 : i32
    %c0_i32_0 = arith.constant 0 : i32
    return %c0_i32, %arg2 : i32, i32
  }
  func.func @transform_5(%arg0: i32, %arg1: i32, %arg2: i32) -> (i32, i32, i32) {
    %c0_i32 = arith.constant 0 : i32
    return %arg0, %arg1, %arg2 : i32, i32, i32
  }
}

module attributes {stable_mosaic.version = 11 : i64} {
  func.func @kernel(%arg0: i32, %arg1: i32, %arg2: i32, %arg3: memref<1x16x16x8xf32, #tpu.memory_space<vmem>>, %arg4: memref<1x8xf32, #tpu.memory_space<vmem>>, %arg5: memref<1x8xf32, #tpu.memory_space<vmem>>, %arg6: memref<9x8x8xf32, #tpu.memory_space<vmem>>, %arg7: memref<1x8xf32, #tpu.memory_space<vmem>>, %arg8: memref<1x16x16x4xf32, #tpu.memory_space<vmem>>, %arg9: memref<4x8xf32, #tpu.memory_space<vmem>>, %arg10: memref<1x8xf32, #tpu.memory_space<vmem>>, %arg11: memref<1x128x8xf32, #tpu.memory_space<vmem>>, %arg12: memref<18x18x8xf32, #tpu.memory_space<vmem>>) attributes {dimension_semantics = [#tpu.dimension_semantics<parallel>, #tpu.dimension_semantics<arbitrary>, #tpu.dimension_semantics<arbitrary>], iteration_bounds = array<i64: 2, 2, 1>, scalar_prefetch = 0 : i64, scratch_operands = 1 : i64, tpu.core_type = #tpu.core_type<tc>, window_params = [{transform_indices = @transform_0, window_bounds = array<i64: 1, 16, 16, 8>}, {pipeline_mode = #tpu.pipeline_mode<synchronous>, transform_indices = @transform_1, window_bounds = array<i64: 1, 8>}, {pipeline_mode = #tpu.pipeline_mode<synchronous>, transform_indices = @transform_2, window_bounds = array<i64: 1, 8>}, {transform_indices = @transform_3, window_bounds = array<i64: 9, 8, 8>}, {transform_indices = @transform_4, window_bounds = array<i64: 1, 8>}, {transform_indices = @transform_5, window_bounds = array<i64: 1, 16, 16, 4>}, {transform_indices = @transform_6, window_bounds = array<i64: 4, 8>}, {transform_indices = @transform_7, window_bounds = array<i64: 1, 8>}, {transform_indices = @transform_8, window_bounds = array<i64: 1, 128, 8>}]} {
    %c0_i32 = arith.constant 0 : i32
    %0 = arith.cmpi eq, %arg1, %c0_i32 : i32
    %c0_i32_0 = arith.constant 0 : i32
    %1 = arith.cmpi eq, %arg2, %c0_i32_0 : i32
    %2 = arith.andi %0, %1 : i1
    %3 = arith.extui %2 : i1 to i32
    %c0_i32_1 = arith.constant 0 : i32
    %4 = arith.cmpi ne, %3, %c0_i32_1 : i32
    scf.if %4 {
      %c0_68 = arith.constant 0 : index
      %c0_69 = arith.constant 0 : index
      %c0_70 = arith.constant 0 : index
      %c0_71 = arith.constant 0 : index
      %96 = vector.load %arg3[%c0_68, %c0_69, %c0_70, %c0_71] : memref<1x16x16x8xf32, #tpu.memory_space<vmem>>, vector<1x16x16x8xf32>
      %97 = vector.shape_cast %96 : vector<1x16x16x8xf32> to vector<16x16x8xf32>
      %c0_72 = arith.constant 0 : index
      %c0_73 = arith.constant 0 : index
      %98 = vector.load %arg4[%c0_72, %c0_73] : memref<1x8xf32, #tpu.memory_space<vmem>>, vector<1x8xf32>
      %99 = vector.shape_cast %98 : vector<1x8xf32> to vector<1x1x8xf32>
      %c0_74 = arith.constant 0 : index
      %c0_75 = arith.constant 0 : index
      %100 = vector.load %arg5[%c0_74, %c0_75] : memref<1x8xf32, #tpu.memory_space<vmem>>, vector<1x8xf32>
      %101 = vector.shape_cast %100 : vector<1x8xf32> to vector<1x1x8xf32>
      %102 = vector.broadcast %99 : vector<1x1x8xf32> to vector<16x16x8xf32>
      %103 = arith.mulf %97, %102 : vector<16x16x8xf32>
      %104 = vector.broadcast %101 : vector<1x1x8xf32> to vector<16x16x8xf32>
      %105 = arith.addf %103, %104 : vector<16x16x8xf32>
      %cst_76 = arith.constant 0.000000e+00 : f32
      %106 = vector.broadcast %cst_76 : f32 to vector<16x16x8xf32>
      %107 = arith.maximumf %105, %106 : vector<16x16x8xf32>
      %cst_77 = arith.constant 0.000000e+00 : f32
      %108 = vector.broadcast %cst_77 : f32 to vector<1x18x8xf32>
      %c0_78 = arith.constant 0 : index
      %c0_79 = arith.constant 0 : index
      %c0_80 = arith.constant 0 : index
      %109 = vector.load %arg12[%c0_78, %c0_79, %c0_80] : memref<18x18x8xf32, #tpu.memory_space<vmem>>, vector<1x18x8xf32>
      tpu.vector_store %arg12[%c0_78, %c0_79, %c0_80], %108 {strides = array<i32>} : memref<18x18x8xf32, #tpu.memory_space<vmem>>, vector<1x18x8xf32>,
      %c17 = arith.constant 17 : index
      %c0_81 = arith.constant 0 : index
      %c0_82 = arith.constant 0 : index
      %110 = vector.load %arg12[%c17, %c0_81, %c0_82] : memref<18x18x8xf32, #tpu.memory_space<vmem>>, vector<1x18x8xf32>
      tpu.vector_store %arg12[%c17, %c0_81, %c0_82], %108 {strides = array<i32>} : memref<18x18x8xf32, #tpu.memory_space<vmem>>, vector<1x18x8xf32>,
      %cst_83 = arith.constant 0.000000e+00 : f32
      %111 = vector.broadcast %cst_83 : f32 to vector<16x1x8xf32>
      %c1_84 = arith.constant 1 : index
      %c0_85 = arith.constant 0 : index
      %c0_86 = arith.constant 0 : index
      %112 = vector.load %arg12[%c1_84, %c0_85, %c0_86] : memref<18x18x8xf32, #tpu.memory_space<vmem>>, vector<16x1x8xf32>
      tpu.vector_store %arg12[%c1_84, %c0_85, %c0_86], %111 {strides = array<i32>} : memref<18x18x8xf32, #tpu.memory_space<vmem>>, vector<16x1x8xf32>,
      %c1_87 = arith.constant 1 : index
      %c17_88 = arith.constant 17 : index
      %c0_89 = arith.constant 0 : index
      %113 = vector.load %arg12[%c1_87, %c17_88, %c0_89] : memref<18x18x8xf32, #tpu.memory_space<vmem>>, vector<16x1x8xf32>
      tpu.vector_store %arg12[%c1_87, %c17_88, %c0_89], %111 {strides = array<i32>} : memref<18x18x8xf32, #tpu.memory_space<vmem>>, vector<16x1x8xf32>,
      %c1_90 = arith.constant 1 : index
      %c1_91 = arith.constant 1 : index
      %c0_92 = arith.constant 0 : index
      %114 = vector.load %arg12[%c1_90, %c1_91, %c0_92] : memref<18x18x8xf32, #tpu.memory_space<vmem>>, vector<16x16x8xf32>
      tpu.vector_store %arg12[%c1_90, %c1_91, %c0_92], %107 {strides = array<i32>} : memref<18x18x8xf32, #tpu.memory_space<vmem>>, vector<16x16x8xf32>,
    } else {
    }
    %cst = arith.constant 0.000000e+00 : f32
    %5 = vector.broadcast %cst : f32 to vector<128x8xf32>
    %c8_i32 = arith.constant 8 : i32
    %6 = arith.muli %arg1, %c8_i32 : i32
    %c0_i32_2 = arith.constant 0 : i32
    %7 = arith.addi %6, %c0_i32_2 : i32
    %8 = arith.index_cast %7 : i32 to index
    %c0 = arith.constant 0 : index
    %c0_3 = arith.constant 0 : index
    %9 = vector.load %arg12[%8, %c0, %c0_3] : memref<18x18x8xf32, #tpu.memory_space<vmem>>, vector<8x16x8xf32>
    %10 = vector.shape_cast %9 : vector<8x16x8xf32> to vector<128x8xf32>
    %c0_4 = arith.constant 0 : index
    %c0_5 = arith.constant 0 : index
    %c0_6 = arith.constant 0 : index
    %11 = vector.load %arg6[%c0_4, %c0_5, %c0_6] : memref<9x8x8xf32, #tpu.memory_space<vmem>>, vector<1x8x8xf32>
    %12 = vector.shape_cast %11 : vector<1x8x8xf32> to vector<8x8xf32>
    %cst_7 = arith.constant dense<0.000000e+00> : vector<128x8xf32>
    %13 = tpu.matmul %10, %12, %cst_7 {dimension_numbers = #tpu.dot_dimension_numbers<[1], [0], [0], [1], [0, 0, 1, 1], [], []>} : vector<128x8xf32>, vector<8x8xf32>, vector<128x8xf32> -> vector<128x8xf32>
    %14 = arith.addf %5, %13 : vector<128x8xf32>
    %c0_i32_8 = arith.constant 0 : i32
    %15 = arith.addi %6, %c0_i32_8 : i32
    %16 = arith.index_cast %15 : i32 to index
    %c1 = arith.constant 1 : index
    %c0_9 = arith.constant 0 : index
    %17 = vector.load %arg12[%16, %c1, %c0_9] : memref<18x18x8xf32, #tpu.memory_space<vmem>>, vector<8x16x8xf32>
    %18 = vector.shape_cast %17 : vector<8x16x8xf32> to vector<128x8xf32>
    %c1_10 = arith.constant 1 : index
    %c0_11 = arith.constant 0 : index
    %c0_12 = arith.constant 0 : index
    %19 = vector.load %arg6[%c1_10, %c0_11, %c0_12] : memref<9x8x8xf32, #tpu.memory_space<vmem>>, vector<1x8x8xf32>
    %20 = vector.shape_cast %19 : vector<1x8x8xf32> to vector<8x8xf32>
    %cst_13 = arith.constant dense<0.000000e+00> : vector<128x8xf32>
    %21 = tpu.matmul %18, %20, %cst_13 {dimension_numbers = #tpu.dot_dimension_numbers<[1], [0], [0], [1], [0, 0, 1, 1], [], []>} : vector<128x8xf32>, vector<8x8xf32>, vector<128x8xf32> -> vector<128x8xf32>
    %22 = arith.addf %14, %21 : vector<128x8xf32>
    %c0_i32_14 = arith.constant 0 : i32
    %23 = arith.addi %6, %c0_i32_14 : i32
    %24 = arith.index_cast %23 : i32 to index
    %c2 = arith.constant 2 : index
    %c0_15 = arith.constant 0 : index
    %25 = vector.load %arg12[%24, %c2, %c0_15] : memref<18x18x8xf32, #tpu.memory_space<vmem>>, vector<8x16x8xf32>
    %26 = vector.shape_cast %25 : vector<8x16x8xf32> to vector<128x8xf32>
    %c2_16 = arith.constant 2 : index
    %c0_17 = arith.constant 0 : index
    %c0_18 = arith.constant 0 : index
    %27 = vector.load %arg6[%c2_16, %c0_17, %c0_18] : memref<9x8x8xf32, #tpu.memory_space<vmem>>, vector<1x8x8xf32>
    %28 = vector.shape_cast %27 : vector<1x8x8xf32> to vector<8x8xf32>
    %cst_19 = arith.constant dense<0.000000e+00> : vector<128x8xf32>
    %29 = tpu.matmul %26, %28, %cst_19 {dimension_numbers = #tpu.dot_dimension_numbers<[1], [0], [0], [1], [0, 0, 1, 1], [], []>} : vector<128x8xf32>, vector<8x8xf32>, vector<128x8xf32> -> vector<128x8xf32>
    %30 = arith.addf %22, %29 : vector<128x8xf32>
    %c1_i32 = arith.constant 1 : i32
    %31 = arith.addi %6, %c1_i32 : i32
    %32 = arith.index_cast %31 : i32 to index
    %c0_20 = arith.constant 0 : index
    %c0_21 = arith.constant 0 : index
    %33 = vector.load %arg12[%32, %c0_20, %c0_21] : memref<18x18x8xf32, #tpu.memory_space<vmem>>, vector<8x16x8xf32>
    %34 = vector.shape_cast %33 : vector<8x16x8xf32> to vector<128x8xf32>
    %c3 = arith.constant 3 : index
    %c0_22 = arith.constant 0 : index
    %c0_23 = arith.constant 0 : index
    %35 = vector.load %arg6[%c3, %c0_22, %c0_23] : memref<9x8x8xf32, #tpu.memory_space<vmem>>, vector<1x8x8xf32>
    %36 = vector.shape_cast %35 : vector<1x8x8xf32> to vector<8x8xf32>
    %cst_24 = arith.constant dense<0.000000e+00> : vector<128x8xf32>
    %37 = tpu.matmul %34, %36, %cst_24 {dimension_numbers = #tpu.dot_dimension_numbers<[1], [0], [0], [1], [0, 0, 1, 1], [], []>} : vector<128x8xf32>, vector<8x8xf32>, vector<128x8xf32> -> vector<128x8xf32>
    %38 = arith.addf %30, %37 : vector<128x8xf32>
    %c1_i32_25 = arith.constant 1 : i32
    %39 = arith.addi %6, %c1_i32_25 : i32
    %40 = arith.index_cast %39 : i32 to index
    %c1_26 = arith.constant 1 : index
    %c0_27 = arith.constant 0 : index
    %41 = vector.load %arg12[%40, %c1_26, %c0_27] : memref<18x18x8xf32, #tpu.memory_space<vmem>>, vector<8x16x8xf32>
    %42 = vector.shape_cast %41 : vector<8x16x8xf32> to vector<128x8xf32>
    %c4 = arith.constant 4 : index
    %c0_28 = arith.constant 0 : index
    %c0_29 = arith.constant 0 : index
    %43 = vector.load %arg6[%c4, %c0_28, %c0_29] : memref<9x8x8xf32, #tpu.memory_space<vmem>>, vector<1x8x8xf32>
    %44 = vector.shape_cast %43 : vector<1x8x8xf32> to vector<8x8xf32>
    %cst_30 = arith.constant dense<0.000000e+00> : vector<128x8xf32>
    %45 = tpu.matmul %42, %44, %cst_30 {dimension_numbers = #tpu.dot_dimension_numbers<[1], [0], [0], [1], [0, 0, 1, 1], [], []>} : vector<128x8xf32>, vector<8x8xf32>, vector<128x8xf32> -> vector<128x8xf32>
    %46 = arith.addf %38, %45 : vector<128x8xf32>
    %c1_i32_31 = arith.constant 1 : i32
    %47 = arith.addi %6, %c1_i32_31 : i32
    %48 = arith.index_cast %47 : i32 to index
    %c2_32 = arith.constant 2 : index
    %c0_33 = arith.constant 0 : index
    %49 = vector.load %arg12[%48, %c2_32, %c0_33] : memref<18x18x8xf32, #tpu.memory_space<vmem>>, vector<8x16x8xf32>
    %50 = vector.shape_cast %49 : vector<8x16x8xf32> to vector<128x8xf32>
    %c5 = arith.constant 5 : index
    %c0_34 = arith.constant 0 : index
    %c0_35 = arith.constant 0 : index
    %51 = vector.load %arg6[%c5, %c0_34, %c0_35] : memref<9x8x8xf32, #tpu.memory_space<vmem>>, vector<1x8x8xf32>
    %52 = vector.shape_cast %51 : vector<1x8x8xf32> to vector<8x8xf32>
    %cst_36 = arith.constant dense<0.000000e+00> : vector<128x8xf32>
    %53 = tpu.matmul %50, %52, %cst_36 {dimension_numbers = #tpu.dot_dimension_numbers<[1], [0], [0], [1], [0, 0, 1, 1], [], []>} : vector<128x8xf32>, vector<8x8xf32>, vector<128x8xf32> -> vector<128x8xf32>
    %54 = arith.addf %46, %53 : vector<128x8xf32>
    %c2_i32 = arith.constant 2 : i32
    %55 = arith.addi %6, %c2_i32 : i32
    %56 = arith.index_cast %55 : i32 to index
    %c0_37 = arith.constant 0 : index
    %c0_38 = arith.constant 0 : index
    %57 = vector.load %arg12[%56, %c0_37, %c0_38] : memref<18x18x8xf32, #tpu.memory_space<vmem>>, vector<8x16x8xf32>
    %58 = vector.shape_cast %57 : vector<8x16x8xf32> to vector<128x8xf32>
    %c6 = arith.constant 6 : index
    %c0_39 = arith.constant 0 : index
    %c0_40 = arith.constant 0 : index
    %59 = vector.load %arg6[%c6, %c0_39, %c0_40] : memref<9x8x8xf32, #tpu.memory_space<vmem>>, vector<1x8x8xf32>
    %60 = vector.shape_cast %59 : vector<1x8x8xf32> to vector<8x8xf32>
    %cst_41 = arith.constant dense<0.000000e+00> : vector<128x8xf32>
    %61 = tpu.matmul %58, %60, %cst_41 {dimension_numbers = #tpu.dot_dimension_numbers<[1], [0], [0], [1], [0, 0, 1, 1], [], []>} : vector<128x8xf32>, vector<8x8xf32>, vector<128x8xf32> -> vector<128x8xf32>
    %62 = arith.addf %54, %61 : vector<128x8xf32>
    %c2_i32_42 = arith.constant 2 : i32
    %63 = arith.addi %6, %c2_i32_42 : i32
    %64 = arith.index_cast %63 : i32 to index
    %c1_43 = arith.constant 1 : index
    %c0_44 = arith.constant 0 : index
    %65 = vector.load %arg12[%64, %c1_43, %c0_44] : memref<18x18x8xf32, #tpu.memory_space<vmem>>, vector<8x16x8xf32>
    %66 = vector.shape_cast %65 : vector<8x16x8xf32> to vector<128x8xf32>
    %c7 = arith.constant 7 : index
    %c0_45 = arith.constant 0 : index
    %c0_46 = arith.constant 0 : index
    %67 = vector.load %arg6[%c7, %c0_45, %c0_46] : memref<9x8x8xf32, #tpu.memory_space<vmem>>, vector<1x8x8xf32>
    %68 = vector.shape_cast %67 : vector<1x8x8xf32> to vector<8x8xf32>
    %cst_47 = arith.constant dense<0.000000e+00> : vector<128x8xf32>
    %69 = tpu.matmul %66, %68, %cst_47 {dimension_numbers = #tpu.dot_dimension_numbers<[1], [0], [0], [1], [0, 0, 1, 1], [], []>} : vector<128x8xf32>, vector<8x8xf32>, vector<128x8xf32> -> vector<128x8xf32>
    %70 = arith.addf %62, %69 : vector<128x8xf32>
    %c2_i32_48 = arith.constant 2 : i32
    %71 = arith.addi %6, %c2_i32_48 : i32
    %72 = arith.index_cast %71 : i32 to index
    %c2_49 = arith.constant 2 : index
    %c0_50 = arith.constant 0 : index
    %73 = vector.load %arg12[%72, %c2_49, %c0_50] : memref<18x18x8xf32, #tpu.memory_space<vmem>>, vector<8x16x8xf32>
    %74 = vector.shape_cast %73 : vector<8x16x8xf32> to vector<128x8xf32>
    %c8 = arith.constant 8 : index
    %c0_51 = arith.constant 0 : index
    %c0_52 = arith.constant 0 : index
    %75 = vector.load %arg6[%c8, %c0_51, %c0_52] : memref<9x8x8xf32, #tpu.memory_space<vmem>>, vector<1x8x8xf32>
    %76 = vector.shape_cast %75 : vector<1x8x8xf32> to vector<8x8xf32>
    %cst_53 = arith.constant dense<0.000000e+00> : vector<128x8xf32>
    %77 = tpu.matmul %74, %76, %cst_53 {dimension_numbers = #tpu.dot_dimension_numbers<[1], [0], [0], [1], [0, 0, 1, 1], [], []>} : vector<128x8xf32>, vector<8x8xf32>, vector<128x8xf32> -> vector<128x8xf32>
    %78 = arith.addf %70, %77 : vector<128x8xf32>
    %c0_54 = arith.constant 0 : index
    %c0_55 = arith.constant 0 : index
    %79 = vector.load %arg7[%c0_54, %c0_55] : memref<1x8xf32, #tpu.memory_space<vmem>>, vector<1x8xf32>
    %80 = vector.broadcast %79 : vector<1x8xf32> to vector<128x8xf32>
    %81 = arith.addf %78, %80 : vector<128x8xf32>
    %c8_i32_56 = arith.constant 8 : i32
    %82 = arith.muli %arg1, %c8_i32_56 : i32
    %c0_57 = arith.constant 0 : index
    %83 = arith.index_cast %82 : i32 to index
    %c0_58 = arith.constant 0 : index
    %c0_59 = arith.constant 0 : index
    %84 = vector.load %arg8[%c0_57, %83, %c0_58, %c0_59] : memref<1x16x16x4xf32, #tpu.memory_space<vmem>>, vector<1x8x16x4xf32>
    %85 = vector.shape_cast %84 : vector<1x8x16x4xf32> to vector<8x16x4xf32>
    %86 = vector.shape_cast %85 : vector<8x16x4xf32> to vector<128x4xf32>
    %c0_60 = arith.constant 0 : index
    %c0_61 = arith.constant 0 : index
    %87 = vector.load %arg9[%c0_60, %c0_61] : memref<4x8xf32, #tpu.memory_space<vmem>>, vector<4x8xf32>
    %cst_62 = arith.constant dense<0.000000e+00> : vector<128x8xf32>
    %88 = tpu.matmul %86, %87, %cst_62 {dimension_numbers = #tpu.dot_dimension_numbers<[1], [0], [0], [1], [0, 0, 1, 1], [], []>} : vector<128x4xf32>, vector<4x8xf32>, vector<128x8xf32> -> vector<128x8xf32>
    %89 = arith.addf %81, %88 : vector<128x8xf32>
    %c0_63 = arith.constant 0 : index
    %c0_64 = arith.constant 0 : index
    %90 = vector.load %arg10[%c0_63, %c0_64] : memref<1x8xf32, #tpu.memory_space<vmem>>, vector<1x8xf32>
    %91 = vector.broadcast %90 : vector<1x8xf32> to vector<128x8xf32>
    %92 = arith.addf %89, %91 : vector<128x8xf32>
    %c0_65 = arith.constant 0 : index
    %c0_66 = arith.constant 0 : index
    %c0_67 = arith.constant 0 : index
    %93 = vector.load %arg11[%c0_65, %c0_66, %c0_67] : memref<1x128x8xf32, #tpu.memory_space<vmem>>, vector<1x128x8xf32>
    %94 = vector.shape_cast %93 : vector<1x128x8xf32> to vector<128x8xf32>
    %95 = vector.shape_cast %92 : vector<128x8xf32> to vector<1x128x8xf32>
    tpu.vector_store %arg11[%c0_65, %c0_66, %c0_67], %95 {strides = array<i32>} : memref<1x128x8xf32, #tpu.memory_space<vmem>>, vector<1x128x8xf32>,
    return
  }
  func.func @transform_0(%arg0: i32, %arg1: i32, %arg2: i32) -> (i32, i32, i32, i32) {
    %c0_i32 = arith.constant 0 : i32
    %c0_i32_0 = arith.constant 0 : i32
    %c0_i32_1 = arith.constant 0 : i32
    %c0_i32_2 = arith.constant 0 : i32
    return %arg0, %c0_i32, %c0_i32_0, %c0_i32_1 : i32, i32, i32, i32
  }
  func.func @transform_1(%arg0: i32, %arg1: i32, %arg2: i32) -> (i32, i32) {
    %c0_i32 = arith.constant 0 : i32
    %c0_i32_0 = arith.constant 0 : i32
    %c0_i32_1 = arith.constant 0 : i32
    return %c0_i32, %c0_i32_0 : i32, i32
  }
  func.func @transform_2(%arg0: i32, %arg1: i32, %arg2: i32) -> (i32, i32) {
    %c0_i32 = arith.constant 0 : i32
    %c0_i32_0 = arith.constant 0 : i32
    %c0_i32_1 = arith.constant 0 : i32
    return %c0_i32, %c0_i32_0 : i32, i32
  }
  func.func @transform_3(%arg0: i32, %arg1: i32, %arg2: i32) -> (i32, i32, i32) {
    %c0_i32 = arith.constant 0 : i32
    %c0_i32_0 = arith.constant 0 : i32
    %c0_i32_1 = arith.constant 0 : i32
    return %c0_i32, %c0_i32_0, %arg2 : i32, i32, i32
  }
  func.func @transform_4(%arg0: i32, %arg1: i32, %arg2: i32) -> (i32, i32) {
    %c0_i32 = arith.constant 0 : i32
    %c0_i32_0 = arith.constant 0 : i32
    return %c0_i32, %arg2 : i32, i32
  }
  func.func @transform_5(%arg0: i32, %arg1: i32, %arg2: i32) -> (i32, i32, i32, i32) {
    %c0_i32 = arith.constant 0 : i32
    %c0_i32_0 = arith.constant 0 : i32
    %c0_i32_1 = arith.constant 0 : i32
    %c0_i32_2 = arith.constant 0 : i32
    return %arg0, %c0_i32, %c0_i32_0, %c0_i32_1 : i32, i32, i32, i32
  }
  func.func @transform_6(%arg0: i32, %arg1: i32, %arg2: i32) -> (i32, i32) {
    %c0_i32 = arith.constant 0 : i32
    %c0_i32_0 = arith.constant 0 : i32
    return %c0_i32, %arg2 : i32, i32
  }
  func.func @transform_7(%arg0: i32, %arg1: i32, %arg2: i32) -> (i32, i32) {
    %c0_i32 = arith.constant 0 : i32
    %c0_i32_0 = arith.constant 0 : i32
    return %c0_i32, %arg2 : i32, i32
  }
  func.func @transform_8(%arg0: i32, %arg1: i32, %arg2: i32) -> (i32, i32, i32) {
    %c0_i32 = arith.constant 0 : i32
    return %arg0, %arg1, %arg2 : i32, i32, i32
  }
}

</mosaic_0001>

<llo_original>
// kernel: wide_block_forward.2
$region0: #{wide_block_forward.2}
  #allocation0 [shape = 'u32[]', space=smem, size = 0x4, offset = 0x4, fixed_abs, tag = 'smem constant byte address 0x4 - core index']
  #allocation1 [shape = 'u32[144,128]{1,0:T(1,128)}', space=vmem, size = 0x12000, scoped, tag = 'internal scratch']
  #allocation2 [shape = 'f32[18,18,4]{2,1,0:T(8,128)}', space=vmem, size = 0x36000, scoped, tag = 'scratch operand']
  %s0 = inlined_call_operand.vmem [shape: f32[2,16,16,4], index: 0, kind: input, shape index: {}]
  %s1 = inlined_call_operand.vmem [shape: f32[1,4], index: 1, kind: input, shape index: {}]
  %s2 = inlined_call_operand.vmem [shape: f32[1,4], index: 2, kind: input, shape index: {}]
  %s3 = inlined_call_operand.vmem [shape: f32[9,4,8], index: 3, kind: input, shape index: {}]
  %s4 = inlined_call_operand.vmem [shape: f32[1,8], index: 4, kind: input, shape index: {}]
  %s5 = inlined_call_operand.vmem [shape: f32[2,256,8], index: 5, kind: output, shape index: {}]
  %s6 = sld [smem:[#allocation0]]
  $region57: #{wide_block_forward.2} parent=0
    _
  %s8 = ssub.s32 1, %s6
  %s9 = scalar_select 0, %s8, %s6
  loop: start=0, step=1, limit=6
  $region2: #{wide_block_forward.2} parent=0 // loop_pre_header
    _
  $region3: #{wide_block_forward.2} parent=0 // loop_header
    %s11 = sphi 0, %s15
    %p12 = scmp.ge.s32.totalorder %s11, 6
    %s18 = sphi 0, %s37
    %s19 = sphi 0, %s33
    %s20 = sphi 0, %s29
    %s21 = sphi 0, %s18
    %s22 = sphi 0, %s19
    %s23 = sphi 0, %s20
    %s24 = sphi 0, %s21
    %s25 = sphi 0, %s22
    %s26 = sphi 0, %s23
    %s40 = sphi 0, %s42
    %s43 = sphi 0, %s40
    %s44 = sphi 0, %s43
    %s60 = sphi 0, %s44
    %s64 = sphi 0, %s64
    %s66 = sphi 0, %s64
    %s67 = sphi 0, %s66
    %s81 = sphi 0, %s67
    %s85 = sphi 0, %s85
    %s87 = sphi 0, %s85
    %s88 = sphi 0, %s87
    %s102 = sphi 0, %s88
    %s108 = sphi 0, %s110
    %s111 = sphi 0, %s108
    %s112 = sphi 0, %s111
    %s128 = sphi 0, %s112
    %s134 = sphi 0, %s136
    %s137 = sphi 0, %s134
    %s138 = sphi 0, %s137
    %s154 = sphi 0, %s138
    %s164 = sphi 0, %s166
    %s167 = sphi 0, %s164
    %s168 = sphi 0, %s167
    %s184 = sphi 0, %s168
  $region4: #{wide_block_forward.2} parent=0 // loop_header_branch
    %14 = sbr.rel (%p12) target = $region8
  $region5: #{wide_block_forward.2} parent=0 // loop_body
    %s16 = ssub.s32 %s11, 1
    %s17 = ssub.s32 %s11, 2
    %s27 = sadd.s32 1, %s20
    %p28 = scmp.ge.s32.totalorder %s27, 1
    %s29 = scalar_select %p28, 0, %s27
    %s30 = sadd.s32 1, %s19
    %s31 = scalar_select %p28, %s30, %s19
    %p32 = scmp.ge.s32.totalorder %s31, 2
    %s33 = scalar_select %p32, 0, %s31
    %s34 = sadd.s32 1, %s18
    %s35 = scalar_select %p32, %s34, %s18
    %p36 = scmp.ge.s32.totalorder %s35, 2
    %s37 = scalar_select %p36, 0, %s35
    %s38 = ssub.s32 %s18, %s37
    %p39 = scmp.eq.s32.totalorder %s38, 0
    %s41 = sadd.s32 %s40, 1
    %s42 = scalar_select %p39, %s40, %s41
    %p45 = pneg %p39
    %p46 = scmp.eq.s32.totalorder %s11, 3
    %p47 = por %p45, %p46
    %p48 = scmp.ne.s32.totalorder %s40, %s43
    %p49 = scmp.eq.s32.totalorder %s11, 0
    %p50 = por %p48, %p49
    %p51 = scmp.ne.s32.totalorder %s40, %s43
    %p52 = scmp.eq.s32.totalorder %s16, 3
    %p53 = por %p51, %p52
    %p54 = scmp.ne.s32.totalorder %s43, %s44
    %p55 = scmp.eq.s32.totalorder %s16, 0
    %p56 = por %p54, %p55
    %p57 = scmp.ne.s32.totalorder %s43, %s44
    %p58 = scmp.eq.s32.totalorder %s17, 3
    %p59 = por %p57, %p58
    %p61 = scmp.ne.s32.totalorder %s44, %s60
    %p62 = scmp.eq.s32.totalorder %s17, 0
    %p63 = por %p61, %p62
    %s65 = sadd.s32 %s64, 1
    %p68 = scmp.eq.s32.totalorder %s11, 3
    %p69 = scmp.ne.s32.totalorder %s64, %s66
    %p70 = scmp.eq.s32.totalorder %s11, 0
    %p71 = por %p69, %p70
    %p72 = scmp.ne.s32.totalorder %s64, %s66
    %p73 = scmp.eq.s32.totalorder %s16, 3
    %p74 = por %p72, %p73
    %p75 = scmp.ne.s32.totalorder %s66, %s67
    %p76 = scmp.eq.s32.totalorder %s16, 0
    %p77 = por %p75, %p76
    %p78 = scmp.ne.s32.totalorder %s66, %s67
    %p79 = scmp.eq.s32.totalorder %s17, 3
    %p80 = por %p78, %p79
    %p82 = scmp.ne.s32.totalorder %s67, %s81
    %p83 = scmp.eq.s32.totalorder %s17, 0
    %p84 = por %p82, %p83
    %s86 = sadd.s32 %s85, 1
    %p89 = scmp.eq.s32.totalorder %s11, 3
    %p90 = scmp.ne.s32.totalorder %s85, %s87
    %p91 = scmp.eq.s32.totalorder %s11, 0
    %p92 = por %p90, %p91
    %p93 = scmp.ne.s32.totalorder %s85, %s87
    %p94 = scmp.eq.s32.totalorder %s16, 3
    %p95 = por %p93, %p94
    %p96 = scmp.ne.s32.totalorder %s87, %s88
    %p97 = scmp.eq.s32.totalorder %s16, 0
    %p98 = por %p96, %p97
    %p99 = scmp.ne.s32.totalorder %s87, %s88
    %p100 = scmp.eq.s32.totalorder %s17, 3
    %p101 = por %p99, %p100
    %p103 = scmp.ne.s32.totalorder %s88, %s102
    %p104 = scmp.eq.s32.totalorder %s17, 0
    %p105 = por %p103, %p104
    %s106 = ssub.s32 %s20, %s29
    %p107 = scmp.eq.s32.totalorder %s106, 0
    %s109 = sadd.s32 %s108, 1
    %s110 = scalar_select %p107, %s108, %s109
    %p113 = pneg %p107
    %p114 = scmp.eq.s32.totalorder %s11, 3
    %p115 = por %p113, %p114
    %p116 = scmp.ne.s32.totalorder %s108, %s111
    %p117 = scmp.eq.s32.totalorder %s11, 0
    %p118 = por %p116, %p117
    %p119 = scmp.ne.s32.totalorder %s108, %s111
    %p120 = scmp.eq.s32.totalorder %s16, 3
    %p121 = por %p119, %p120
    %p122 = scmp.ne.s32.totalorder %s111, %s112
    %p123 = scmp.eq.s32.totalorder %s16, 0
    %p124 = por %p122, %p123
    %p125 = scmp.ne.s32.totalorder %s111, %s112
    %p126 = scmp.eq.s32.totalorder %s17, 3
    %p127 = por %p125, %p126
    %p129 = scmp.ne.s32.totalorder %s112, %s128
    %p130 = scmp.eq.s32.totalorder %s17, 0
    %p131 = por %p129, %p130
    %s132 = ssub.s32 %s20, %s29
    %p133 = scmp.eq.s32.totalorder %s132, 0
    %s135 = sadd.s32 %s134, 1
    %s136 = scalar_select %p133, %s134, %s135
    %p139 = pneg %p133
    %p140 = scmp.eq.s32.totalorder %s11, 3
    %p141 = por %p139, %p140
    %p142 = scmp.ne.s32.totalorder %s134, %s137
    %p143 = scmp.eq.s32.totalorder %s11, 0
    %p144 = por %p142, %p143
    %p145 = scmp.ne.s32.totalorder %s134, %s137
    %p146 = scmp.eq.s32.totalorder %s16, 3
    %p147 = por %p145, %p146
    %p148 = scmp.ne.s32.totalorder %s137, %s138
    %p149 = scmp.eq.s32.totalorder %s16, 0
    %p150 = por %p148, %p149
    %p151 = scmp.ne.s32.totalorder %s137, %s138
    %p152 = scmp.eq.s32.totalorder %s17, 3
    %p153 = por %p151, %p152
    %p155 = scmp.ne.s32.totalorder %s138, %s154
    %p156 = scmp.eq.s32.totalorder %s17, 0
    %p157 = por %p155, %p156
    %s158 = ssub.s32 %s18, %s37
    %s159 = ssub.s32 %s19, %s33
    %s160 = sor.u32 %s158, %s159
    %s161 = ssub.s32 %s20, %s29
    %s162 = sor.u32 %s160, %s161
    %p163 = scmp.eq.s32.totalorder %s162, 0
    %s165 = sadd.s32 %s164, 1
    %s166 = scalar_select %p163, %s164, %s165
    %p169 = pneg %p163
    %p170 = scmp.eq.s32.totalorder %s11, 3
    %p171 = por %p169, %p170
    %p172 = scmp.ne.s32.totalorder %s164, %s167
    %p173 = scmp.eq.s32.totalorder %s11, 0
    %p174 = por %p172, %p173
    %p175 = scmp.ne.s32.totalorder %s164, %s167
    %p176 = scmp.eq.s32.totalorder %s16, 3
    %p177 = por %p175, %p176
    %p178 = scmp.ne.s32.totalorder %s167, %s168
    %p179 = scmp.eq.s32.totalorder %s16, 0
    %p180 = por %p178, %p179
    %p181 = scmp.ne.s32.totalorder %s167, %s168
    %p182 = scmp.eq.s32.totalorder %s17, 3
    %p183 = por %p181, %p182
    %p185 = scmp.ne.s32.totalorder %s168, %s184
    %p186 = scmp.eq.s32.totalorder %s17, 0
    %p187 = por %p185, %p186
    %p188 = scmp.le.s32.totalorder 1, %s11
    %p189 = scmp.lt.s32.totalorder %s11, 5
    %p190 = pnand %p188, %p189
    %p191 = pneg %p190
    // Predicated region
    $region9: #{wide_block_forward.2} parent=5 // pred_check
      _
    $region10: #{wide_block_forward.2} parent=5 // pred_check_branch
      %193 = sbr.rel (%p190) target = $region12
    $region11: #{wide_block_forward.2} parent=5 // pred_region
      %s194 = ssub.s32 %s11, 1
      // Predicated region
      $region13: #{wide_block_forward.2} parent=11 // pred_check
        %p195 = pneg %p77
      $region14: #{wide_block_forward.2} parent=11 // pred_check_branch
        %197 = sbr.rel (%p195) target = $region16
      $region15: #{wide_block_forward.2} parent=11 // pred_region
        _
      $region16: #{wide_block_forward.2} parent=11 // pred_fallthru
        _
      // Predicated region
      $region17: #{wide_block_forward.2} parent=11 // pred_check
        %p198 = pneg %p98
      $region18: #{wide_block_forward.2} parent=11 // pred_check_branch
        %200 = sbr.rel (%p198) target = $region20
      $region19: #{wide_block_forward.2} parent=11 // pred_region
        _
      $region20: #{wide_block_forward.2} parent=11 // pred_fallthru
        _
      // Predicated region
      $region21: #{wide_block_forward.2} parent=11 // pred_check
        %p201 = pneg %p124
      $region22: #{wide_block_forward.2} parent=11 // pred_check_branch
        %203 = sbr.rel (%p201) target = $region24
      $region23: #{wide_block_forward.2} parent=11 // pred_region
        %p204 = scmp.lt.s32.totalorder %s23, 0
        %s205 = scalar_select %p204, %s23, 0
        %s206 = smul.addr %s205, 4
        %s207 = scalar_lea.vmem %s3, %s206
      $region24: #{wide_block_forward.2} parent=11 // pred_fallthru
        _
      // Predicated region
      $region25: #{wide_block_forward.2} parent=11 // pred_check
        %p208 = pneg %p150
      $region26: #{wide_block_forward.2} parent=11 // pred_check_branch
        %210 = sbr.rel (%p208) target = $region28
      $region27: #{wide_block_forward.2} parent=11 // pred_region
        %p211 = scmp.lt.s32.totalorder %s23, 0
        %s212 = scalar_select %p211, %s23, 0
        %s213 = scalar_lea.vmem %s4, %s212
      $region28: #{wide_block_forward.2} parent=11 // pred_fallthru
        _
    $region12: #{wide_block_forward.2} parent=5 // pred_fallthru
      _
    %p214 = scmp.lt.s32.totalorder %s11, 4
    // Predicated region
    $region29: #{wide_block_forward.2} parent=5 // pred_check
      %p215 = pneg %p214
    $region30: #{wide_block_forward.2} parent=5 // pred_check_branch
      %217 = sbr.rel (%p215) target = $region32
    $region31: #{wide_block_forward.2} parent=5 // pred_region
      // Predicated region
      $region33: #{wide_block_forward.2} parent=31 // pred_check
        %p218 = pneg %p50
      $region34: #{wide_block_forward.2} parent=31 // pred_check_branch
        %220 = sbr.rel (%p218) target = $region36
      $region35: #{wide_block_forward.2} parent=31 // pred_region
        %p221 = scmp.lt.s32.totalorder %s18, 1
        %s222 = scalar_select %p221, %s18, 1
        %s223 = smul.addr %s222, 32
        %s224 = smul.addr %s223, 8
        %s225 = scalar_lea.vmem %s0, %s224
      $region36: #{wide_block_forward.2} parent=31 // pred_fallthru
        _
    $region32: #{wide_block_forward.2} parent=5 // pred_fallthru
      _
    %p226 = scmp.le.s32.totalorder 1, %s11
    %p227 = scmp.lt.s32.totalorder %s11, 5
    %p228 = pnand %p226, %p227
    %p229 = pneg %p228
    // Predicated region
    $region37: #{wide_block_forward.2} parent=5 // pred_check
      _
    $region38: #{wide_block_forward.2} parent=5 // pred_check_branch
      %231 = sbr.rel (%p228) target = $region40
    $region39: #{wide_block_forward.2} parent=5 // pred_region
      %s232 = ssub.s32 %s11, 1
      %p233 = scmp.lt.s32.totalorder %s21, 1
      %s234 = scalar_select %p233, %s21, 1
      %s235 = smul.addr %s234, 32
      %s236 = smul.addr %s235, 8
      %s237 = scalar_lea.vmem %s0, %s236
      %p238 = pneg %p56
      %p239 = pneg %p53
      %p240 = pneg %p77
      %p241 = pneg %p74
      %p242 = pneg %p98
      %p243 = pneg %p95
      %p244 = scmp.lt.s32.totalorder %s23, 0
      %s245 = scalar_select %p244, %s23, 0
      %s246 = smul.addr %s245, 4
      %s247 = scalar_lea.vmem %s3, %s246
      %p248 = pneg %p124
      %p249 = pneg %p121
      %p250 = scmp.lt.s32.totalorder %s23, 0
      %s251 = scalar_select %p250, %s23, 0
      %s252 = scalar_lea.vmem %s4, %s251
      %p253 = pneg %p150
      %p254 = pneg %p147
      %p255 = pneg %p180
      %p256 = pneg %p177
      %s257 = smul.u32 16, %s22
      %p258 = scmp.lt.s32.totalorder %s21, 1
      %s259 = scalar_select %p258, %s21, 1
      %p260 = scmp.lt.s32.totalorder %s257, 31
      %s261 = scalar_select %p260, %s257, 31
      %p262 = scmp.lt.s32.totalorder %s23, 0
      %s263 = scalar_select %p262, %s23, 0
      %s264 = sadd.s32 %s263, %s261
      %s265 = smul.addr %s259, 32
      %s266 = sadd.s32 %s264, %s265
      %s267 = smul.addr %s266, 8
      %s268 = scalar_lea.vmem %s5, %s267
      %p269 = scmp.lt.s32.totalorder %s21, 1
      %s270 = scalar_select %p269, %s21, 1
      %s271 = smul.addr %s270, 32
      %s272 = smul.addr %s271, 8
      %s273 = scalar_lea.vmem %s0, %s272
      %p274 = scmp.lt.s32.totalorder %s23, 0
      %s275 = scalar_select %p274, %s23, 0
      %s276 = smul.addr %s275, 4
      %s277 = scalar_lea.vmem %s3, %s276
      %p278 = scmp.lt.s32.totalorder %s23, 0
      %s279 = scalar_select %p278, %s23, 0
      %s280 = scalar_lea.vmem %s4, %s279
      %s281 = smul.u32 16, %s22
      %p282 = scmp.lt.s32.totalorder %s21, 1
      %s283 = scalar_select %p282, %s21, 1
      %p284 = scmp.lt.s32.totalorder %s281, 31
      %s285 = scalar_select %p284, %s281, 31
      %p286 = scmp.lt.s32.totalorder %s23, 0
      %s287 = scalar_select %p286, %s23, 0
      %s288 = sadd.s32 %s287, %s285
      %s289 = smul.addr %s283, 32
      %s290 = sadd.s32 %s288, %s289
      %s291 = smul.addr %s290, 8
      %s292 = scalar_lea.vmem %s5, %s291
      %s293 = smul.u32 16, %s22
      %p294 = scmp.eq.s32.totalorder %s22, 0
      %p295 = scmp.eq.s32.totalorder %s23, 0
      %p296 = pnand %p294, %p295
      %p297 = pneg %p296
      // Predicated region
      $region41: #{wide_block_forward.2} parent=39 // pred_check
        _
      $region42: #{wide_block_forward.2} parent=39 // pred_check_branch
        %299 = sbr.rel (%p296) target = $region44
      $region43: #{wide_block_forward.2} parent=39 // pred_region
        %v300 = vld [vmem:[%s273] sm:$0xff]
        %v301 = vld [vmem:[%s273 + $0x8] sm:$0xff]
        %v302 = vld [vmem:[%s273 + $0x10] sm:$0xff]
        %v303 = vld [vmem:[%s273 + $0x18] sm:$0xff]
        %v304 = vld [vmem:[%s273 + $0x20] sm:$0xff]
        %v305 = vld [vmem:[%s273 + $0x28] sm:$0xff]
        %v306 = vld [vmem:[%s273 + $0x30] sm:$0xff]
        %v307 = vld [vmem:[%s273 + $0x38] sm:$0xff]
        %v308 = vld [vmem:[%s273 + $0x40] sm:$0xff]
        %v309 = vld [vmem:[%s273 + $0x48] sm:$0xff]
        %v310 = vld [vmem:[%s273 + $0x50] sm:$0xff]
        %v311 = vld [vmem:[%s273 + $0x58] sm:$0xff]
        %v312 = vld [vmem:[%s273 + $0x60] sm:$0xff]
        %v313 = vld [vmem:[%s273 + $0x68] sm:$0xff]
        %v314 = vld [vmem:[%s273 + $0x70] sm:$0xff]
        %v315 = vld [vmem:[%s273 + $0x78] sm:$0xff]
        %v316 = vld [vmem:[%s273 + $0x80] sm:$0xff]
        %v317 = vld [vmem:[%s273 + $0x88] sm:$0xff]
        %v318 = vld [vmem:[%s273 + $0x90] sm:$0xff]
        %v319 = vld [vmem:[%s273 + $0x98] sm:$0xff]
        %v320 = vld [vmem:[%s273 + $0xa0] sm:$0xff]
        %v321 = vld [vmem:[%s273 + $0xa8] sm:$0xff]
        %v322 = vld [vmem:[%s273 + $0xb0] sm:$0xff]
        %v323 = vld [vmem:[%s273 + $0xb8] sm:$0xff]
        %v324 = vld [vmem:[%s273 + $0xc0] sm:$0xff]
        %v325 = vld [vmem:[%s273 + $0xc8] sm:$0xff]
        %v326 = vld [vmem:[%s273 + $0xd0] sm:$0xff]
        %v327 = vld [vmem:[%s273 + $0xd8] sm:$0xff]
        %v328 = vld [vmem:[%s273 + $0xe0] sm:$0xff]
        %v329 = vld [vmem:[%s273 + $0xe8] sm:$0xff]
        %v330 = vld [vmem:[%s273 + $0xf0] sm:$0xff]
        %v331 = vld [vmem:[%s273 + $0xf8] sm:$0xff]
        %v332 = vld [vmem:[%s1] sm:$0x1]
        %v333 = vld [vmem:[%s2] sm:$0x1]
        %v335 = vlaneseq
        %v336 = vshrl.u32 %v335, 7
        %v337 = vsub.s32 0, %v336
        %v338 = vrot.slane %v332, %v337
        %v340 = vmul.f32 %v300, %v338
        %v341 = vmul.f32 %v301, %v338
        %v342 = vmul.f32 %v302, %v338
        %v343 = vmul.f32 %v303, %v338
        %v344 = vmul.f32 %v304, %v338
        %v345 = vmul.f32 %v305, %v338
        %v346 = vmul.f32 %v306, %v338
        %v347 = vmul.f32 %v307, %v338
        %v348 = vmul.f32 %v308, %v338
        %v349 = vmul.f32 %v309, %v338
        %v350 = vmul.f32 %v310, %v338
        %v351 = vmul.f32 %v311, %v338
        %v352 = vmul.f32 %v312, %v338
        %v353 = vmul.f32 %v313, %v338
        %v354 = vmul.f32 %v314, %v338
        %v355 = vmul.f32 %v315, %v338
        %v356 = vmul.f32 %v316, %v338
        %v357 = vmul.f32 %v317, %v338
        %v358 = vmul.f32 %v318, %v338
        %v359 = vmul.f32 %v319, %v338
        %v360 = vmul.f32 %v320, %v338
        %v361 = vmul.f32 %v321, %v338
        %v362 = vmul.f32 %v322, %v338
        %v363 = vmul.f32 %v323, %v338
        %v364 = vmul.f32 %v324, %v338
        %v365 = vmul.f32 %v325, %v338
        %v366 = vmul.f32 %v326, %v338
        %v367 = vmul.f32 %v327, %v338
        %v368 = vmul.f32 %v328, %v338
        %v369 = vmul.f32 %v329, %v338
        %v370 = vmul.f32 %v330, %v338
        %v371 = vmul.f32 %v331, %v338
        %v373 = vlaneseq
        %v374 = vshrl.u32 %v373, 7
        %v375 = vsub.s32 0, %v374
        %v376 = vrot.slane %v333, %v375
        %v378 = vadd.f32 %v340, %v376
        %v379 = vadd.f32 %v341, %v376
        %v380 = vadd.f32 %v342, %v376
        %v381 = vadd.f32 %v343, %v376
        %v382 = vadd.f32 %v344, %v376
        %v383 = vadd.f32 %v345, %v376
        %v384 = vadd.f32 %v346, %v376
        %v385 = vadd.f32 %v347, %v376
        %v386 = vadd.f32 %v348, %v376
        %v387 = vadd.f32 %v349, %v376
        %v388 = vadd.f32 %v350, %v376
        %v389 = vadd.f32 %v351, %v376
        %v390 = vadd.f32 %v352, %v376
        %v391 = vadd.f32 %v353, %v376
        %v392 = vadd.f32 %v354, %v376
        %v393 = vadd.f32 %v355, %v376
        %v394 = vadd.f32 %v356, %v376
        %v395 = vadd.f32 %v357, %v376
        %v396 = vadd.f32 %v358, %v376
        %v397 = vadd.f32 %v359, %v376
        %v398 = vadd.f32 %v360, %v376
        %v399 = vadd.f32 %v361, %v376
        %v400 = vadd.f32 %v362, %v376
        %v401 = vadd.f32 %v363, %v376
        %v402 = vadd.f32 %v364, %v376
        %v403 = vadd.f32 %v365, %v376
        %v404 = vadd.f32 %v366, %v376
        %v405 = vadd.f32 %v367, %v376
        %v406 = vadd.f32 %v368, %v376
        %v407 = vadd.f32 %v369, %v376
        %v408 = vadd.f32 %v370, %v376
        %v409 = vadd.f32 %v371, %v376
        %v410 = vmax.f32 %v378, 0.0
        %v411 = vmax.f32 %v379, 0.0
        %v412 = vmax.f32 %v380, 0.0
        %v413 = vmax.f32 %v381, 0.0
        %v414 = vmax.f32 %v382, 0.0
        %v415 = vmax.f32 %v383, 0.0
        %v416 = vmax.f32 %v384, 0.0
        %v417 = vmax.f32 %v385, 0.0
        %v418 = vmax.f32 %v386, 0.0
        %v419 = vmax.f32 %v387, 0.0
        %v420 = vmax.f32 %v388, 0.0
        %v421 = vmax.f32 %v389, 0.0
        %v422 = vmax.f32 %v390, 0.0
        %v423 = vmax.f32 %v391, 0.0
        %v424 = vmax.f32 %v392, 0.0
        %v425 = vmax.f32 %v393, 0.0
        %v426 = vmax.f32 %v394, 0.0
        %v427 = vmax.f32 %v395, 0.0
        %v428 = vmax.f32 %v396, 0.0
        %v429 = vmax.f32 %v397, 0.0
        %v430 = vmax.f32 %v398, 0.0
        %v431 = vmax.f32 %v399, 0.0
        %v432 = vmax.f32 %v400, 0.0
        %v433 = vmax.f32 %v401, 0.0
        %v434 = vmax.f32 %v402, 0.0
        %v435 = vmax.f32 %v403, 0.0
        %v436 = vmax.f32 %v404, 0.0
        %v437 = vmax.f32 %v405, 0.0
        %v438 = vmax.f32 %v406, 0.0
        %v439 = vmax.f32 %v407, 0.0
        %v440 = vmax.f32 %v408, 0.0
        %v441 = vmax.f32 %v409, 0.0
        %vm442 = vcmask 31744
        %443 = vst.msk [vmem:[#allocation2] sm:$0xff] %vm442, 0.0
        %444 = vst.msk [vmem:[#allocation2 + $0x8] sm:$0xff] %vm442, 0.0
        %vm445 = vcmask 25600
        %446 = vst.msk [vmem:[#allocation2 + $0x10] sm:$0x3] %vm445, 0.0
        %s447 = scalar_lea.vmem [#allocation2], 408
        %448 = vst.msk [vmem:[%s447] sm:$0xff] %vm442, 0.0
        %449 = vst.msk [vmem:[%s447 + $0x8] sm:$0xff] %vm442, 0.0
        %450 = vst.msk [vmem:[%s447 + $0x10] sm:$0x3] %vm445, 0.0
        %s451 = scalar_lea.vmem [#allocation2], 24
        %vm452 = vcmask 24576
        %453 = vst.msk [vmem:[%s451] sm:$0x1] %vm452, 0.0
        %454 = vst.msk [vmem:[%s451 + $0x18] sm:$0x1] %vm452, 0.0
        %455 = vst.msk [vmem:[%s451 + $0x30] sm:$0x1] %vm452, 0.0
        %456 = vst.msk [vmem:[%s451 + $0x48] sm:$0x1] %vm452, 0.0
        %457 = vst.msk [vmem:[%s451 + $0x60] sm:$0x1] %vm452, 0.0
        %458 = vst.msk [vmem:[%s451 + $0x78] sm:$0x1] %vm452, 0.0
        %459 = vst.msk [vmem:[%s451 + $0x90] sm:$0x1] %vm452, 0.0
        %460 = vst.msk [vmem:[%s451 + $0xa8] sm:$0x1] %vm452, 0.0
        %461 = vst.msk [vmem:[%s451 + $0xc0] sm:$0x1] %vm452, 0.0
        %462 = vst.msk [vmem:[%s451 + $0xd8] sm:$0x1] %vm452, 0.0
        %463 = vst.msk [vmem:[%s451 + $0xf0] sm:$0x1] %vm452, 0.0
        %464 = vst.msk [vmem:[%s451 + $0x108] sm:$0x1] %vm452, 0.0
        %465 = vst.msk [vmem:[%s451 + $0x120] sm:$0x1] %vm452, 0.0
        %466 = vst.msk [vmem:[%s451 + $0x138] sm:$0x1] %vm452, 0.0
        %467 = vst.msk [vmem:[%s451 + $0x150] sm:$0x1] %vm452, 0.0
        %468 = vst.msk [vmem:[%s451 + $0x168] sm:$0x1] %vm452, 0.0
        %469 = vst.msk [vmem:[%s451 + $0x11] sm:$0x1] %vm452, 0.0
        %470 = vst.msk [vmem:[%s451 + $0x29] sm:$0x1] %vm452, 0.0
        %471 = vst.msk [vmem:[%s451 + $0x41] sm:$0x1] %vm452, 0.0
        %472 = vst.msk [vmem:[%s451 + $0x59] sm:$0x1] %vm452, 0.0
        %473 = vst.msk [vmem:[%s451 + $0x71] sm:$0x1] %vm452, 0.0
        %474 = vst.msk [vmem:[%s451 + $0x89] sm:$0x1] %vm452, 0.0
        %475 = vst.msk [vmem:[%s451 + $0xa1] sm:$0x1] %vm452, 0.0
        %476 = vst.msk [vmem:[%s451 + $0xb9] sm:$0x1] %vm452, 0.0
        %477 = vst.msk [vmem:[%s451 + $0xd1] sm:$0x1] %vm452, 0.0
        %478 = vst.msk [vmem:[%s451 + $0xe9] sm:$0x1] %vm452, 0.0
        %479 = vst.msk [vmem:[%s451 + $0x101] sm:$0x1] %vm452, 0.0
        %480 = vst.msk [vmem:[%s451 + $0x119] sm:$0x1] %vm452, 0.0
        %481 = vst.msk [vmem:[%s451 + $0x131] sm:$0x1] %vm452, 0.0
        %482 = vst.msk [vmem:[%s451 + $0x149] sm:$0x1] %vm452, 0.0
        %483 = vst.msk [vmem:[%s451 + $0x161] sm:$0x1] %vm452, 0.0
        %484 = vst.msk [vmem:[%s451 + $0x179] sm:$0x1] %vm452, 0.0
        %485 = vst.msk [vmem:[%s451 + $0x1] sm:$0xff] %vm442, %v410
        %486 = vst.msk [vmem:[%s451 + $0x9] sm:$0xff] %vm442, %v411
        %487 = vst.msk [vmem:[%s451 + $0x19] sm:$0xff] %vm442, %v412
        %488 = vst.msk [vmem:[%s451 + $0x21] sm:$0xff] %vm442, %v413
        %489 = vst.msk [vmem:[%s451 + $0x31] sm:$0xff] %vm442, %v414
        %490 = vst.msk [vmem:[%s451 + $0x39] sm:$0xff] %vm442, %v415
        %491 = vst.msk [vmem:[%s451 + $0x49] sm:$0xff] %vm442, %v416
        %492 = vst.msk [vmem:[%s451 + $0x51] sm:$0xff] %vm442, %v417
        %493 = vst.msk [vmem:[%s451 + $0x61] sm:$0xff] %vm442, %v418
        %494 = vst.msk [vmem:[%s451 + $0x69] sm:$0xff] %vm442, %v419
        %495 = vst.msk [vmem:[%s451 + $0x79] sm:$0xff] %vm442, %v420
        %496 = vst.msk [vmem:[%s451 + $0x81] sm:$0xff] %vm442, %v421
        %497 = vst.msk [vmem:[%s451 + $0x91] sm:$0xff] %vm442, %v422
        %498 = vst.msk [vmem:[%s451 + $0x99] sm:$0xff] %vm442, %v423
        %499 = vst.msk [vmem:[%s451 + $0xa9] sm:$0xff] %vm442, %v424
        %500 = vst.msk [vmem:[%s451 + $0xb1] sm:$0xff] %vm442, %v425
        %501 = vst.msk [vmem:[%s451 + $0xc1] sm:$0xff] %vm442, %v426
        %502 = vst.msk [vmem:[%s451 + $0xc9] sm:$0xff] %vm442, %v427
        %503 = vst.msk [vmem:[%s451 + $0xd9] sm:$0xff] %vm442, %v428
        %504 = vst.msk [vmem:[%s451 + $0xe1] sm:$0xff] %vm442, %v429
        %505 = vst.msk [vmem:[%s451 + $0xf1] sm:$0xff] %vm442, %v430
        %506 = vst.msk [vmem:[%s451 + $0xf9] sm:$0xff] %vm442, %v431
        %507 = vst.msk [vmem:[%s451 + $0x109] sm:$0xff] %vm442, %v432
        %508 = vst.msk [vmem:[%s451 + $0x111] sm:$0xff] %vm442, %v433
        %509 = vst.msk [vmem:[%s451 + $0x121] sm:$0xff] %vm442, %v434
        %510 = vst.msk [vmem:[%s451 + $0x129] sm:$0xff] %vm442, %v435
        %511 = vst.msk [vmem:[%s451 + $0x139] sm:$0xff] %vm442, %v436
        %512 = vst.msk [vmem:[%s451 + $0x141] sm:$0xff] %vm442, %v437
        %513 = vst.msk [vmem:[%s451 + $0x151] sm:$0xff] %vm442, %v438
        %514 = vst.msk [vmem:[%s451 + $0x159] sm:$0xff] %vm442, %v439
        %515 = vst.msk [vmem:[%s451 + $0x169] sm:$0xff] %vm442, %v440
        %516 = vst.msk [vmem:[%s451 + $0x171] sm:$0xff] %vm442, %v441
      $region44: #{wide_block_forward.2} parent=39 // pred_fallthru
        _
      %s517 = smul.u32 %s22, 8
      %s518 = smul.u32 %s517, 24
      %s519 = scalar_lea.vmem [#allocation2], %s518
      %v520 = vld [vmem:[%s519] sm:$0xff]
      %v521 = vld [vmem:[%s519 + $0x8] sm:$0xff]
      %v522 = vld [vmem:[%s519 + $0x18] sm:$0xff]
      %v523 = vld [vmem:[%s519 + $0x20] sm:$0xff]
      %v524 = vld [vmem:[%s519 + $0x30] sm:$0xff]
      %v525 = vld [vmem:[%s519 + $0x38] sm:$0xff]
      %v526 = vld [vmem:[%s519 + $0x48] sm:$0xff]
      %v527 = vld [vmem:[%s519 + $0x50] sm:$0xff]
      %v528 = vld [vmem:[%s519 + $0x60] sm:$0xff]
      %v529 = vld [vmem:[%s519 + $0x68] sm:$0xff]
      %v530 = vld [vmem:[%s519 + $0x78] sm:$0xff]
      %v531 = vld [vmem:[%s519 + $0x80] sm:$0xff]
      %v532 = vld [vmem:[%s519 + $0x90] sm:$0xff]
      %v533 = vld [vmem:[%s519 + $0x98] sm:$0xff]
      %v534 = vld [vmem:[%s519 + $0xa8] sm:$0xff]
      %v535 = vld [vmem:[%s519 + $0xb0] sm:$0xff]
      %v536 = vld [vmem:[%s277] sm:$0xf]
      %v537 = vld [vmem:[%s519 + $0x1] sm:$0xff]
      %v538 = vld [vmem:[%s519 + $0x9] sm:$0xff]
      %v539 = vld [vmem:[%s519 + $0x19] sm:$0xff]
      %v540 = vld [vmem:[%s519 + $0x21] sm:$0xff]
      %v541 = vld [vmem:[%s519 + $0x31] sm:$0xff]
      %v542 = vld [vmem:[%s519 + $0x39] sm:$0xff]
      %v543 = vld [vmem:[%s519 + $0x49] sm:$0xff]
      %v544 = vld [vmem:[%s519 + $0x51] sm:$0xff]
      %v545 = vld [vmem:[%s519 + $0x61] sm:$0xff]
      %v546 = vld [vmem:[%s519 + $0x69] sm:$0xff]
      %v547 = vld [vmem:[%s519 + $0x79] sm:$0xff]
      %v548 = vld [vmem:[%s519 + $0x81] sm:$0xff]
      %v549 = vld [vmem:[%s519 + $0x91] sm:$0xff]
      %v550 = vld [vmem:[%s519 + $0x99] sm:$0xff]
      %v551 = vld [vmem:[%s519 + $0xa9] sm:$0xff]
      %v552 = vld [vmem:[%s519 + $0xb1] sm:$0xff]
      %s553 = scalar_lea.vmem %s277, 4
      %v554 = vld [vmem:[%s553] sm:$0xf]
      %vm555 = vcmask 31744
      %v557 = vsel %vm555, %v537, 0
      %v560 = vsel %vm555, %v538, 0
      %v563 = vsel %vm555, %v539, 0
      %v566 = vsel %vm555, %v540, 0
      %v569 = vsel %vm555, %v541, 0
      %v572 = vsel %vm555, %v542, 0
      %v575 = vsel %vm555, %v543, 0
      %v578 = vsel %vm555, %v544, 0
      %v581 = vsel %vm555, %v545, 0
      %v584 = vsel %vm555, %v546, 0
      %v587 = vsel %vm555, %v547, 0
      %v590 = vsel %vm555, %v548, 0
      %v593 = vsel %vm555, %v549, 0
      %v596 = vsel %vm555, %v550, 0
      %v599 = vsel %vm555, %v551, 0
      %v602 = vsel %vm555, %v552, 0
      %vm604 = vcmask 1043456
      %v606 = vsel %vm604, %v554, 0
      %608 = vmatprep.subr.mxu0 0.0
      %609 = vmatpush1.msra.mxu0 %v606
      %610 = vmatprep.subr.mxu0 0.0
      %611 = vmatpush1.msra.mxu0 0.0
      %612 = vmatprep.subr.mxu0 0.0
      %613 = vmatpush1.msra.mxu0 0.0
      %614 = vmatprep.subr.mxu0 0.0
      %615 = vmatpush1.msra.mxu0 0.0
      %616 = vmatprep.subr.mxu0 0.0
      %617 = vmatpush1.msra.mxu0 0.0
      %618 = vmatprep.subr.mxu0 0.0
      %619 = vmatpush1.msra.mxu0 0.0
      %620 = vmatprep.subr.mxu0 0.0
      %621 = vmatpush1.msra.mxu0 0.0
      %622 = vmatprep.subr.mxu0 0.0
      %623 = vmatpush1.msra.mxu0 0.0
      %624 = vmatprep.subr.mxu0 0.0
      %625 = vmatpush1.msra.mxu0 0.0
      %626 = vmatprep.subr.mxu0 0.0
      %627 = vmatpush1.msra.mxu0 0.0
      %628 = vmatprep.subr.mxu0 0.0
      %629 = vmatpush1.msra.mxu0 0.0
      %630 = vmatprep.subr.mxu0 0.0
      %631 = vmatpush1.msra.mxu0 0.0
      %632 = vmatprep.subr.mxu0 0.0
      %633 = vmatpush1.msra.mxu0 0.0
      %634 = vmatprep.subr.mxu0 0.0
      %635 = vmatpush1.msra.mxu0 0.0
      %636 = vmatprep.subr.mxu0 0.0
      %637 = vmatpush1.msra.mxu0 0.0
      %638 = vmatprep.subr.mxu0 0.0
      %639 = vmatpush1.msra.mxu0 0.0
      %640 = vmatprep.subr.mxu0 0.0
      %641 = vmatpush1.msra.mxu0 0.0
      %642 = vmatprep.subr.mxu0 0.0
      %643 = vmatpush1.msra.mxu0 0.0
      %644 = vmatprep.subr.mxu0 0.0
      %645 = vmatpush1.msra.mxu0 0.0
      %646 = vmatprep.subr.mxu0 0.0
      %647 = vmatpush1.msra.mxu0 0.0
      %648 = vmatprep.subr.mxu0 0.0
      %649 = vmatpush1.msra.mxu0 0.0
      %650 = vmatprep.subr.mxu0 0.0
      %651 = vmatpush1.msra.mxu0 0.0
      %652 = vmatprep.subr.mxu0 0.0
      %653 = vmatpush1.msra.mxu0 0.0
      %654 = vmatprep.subr.mxu0 0.0
      %655 = vmatpush1.msra.mxu0 0.0
      %656 = vmatprep.subr.mxu0 0.0
      %657 = vmatpush1.msra.mxu0 0.0
      %658 = vmatprep.subr.mxu0 0.0
      %659 = vmatpush1.msra.mxu0 0.0
      %660 = vmatprep.subr.mxu0 0.0
      %661 = vmatpush1.msra.mxu0 0.0
      %662 = vmatprep.subr.mxu0 0.0
      %663 = vmatpush1.msra.mxu0 0.0
      %664 = vmatprep.subr.mxu0 0.0
      %665 = vmatpush1.msra.mxu0 0.0
      %666 = vmatprep.subr.mxu0 0.0
      %667 = vmatpush1.msra.mxu0 0.0
      %668 = vmatprep.subr.mxu0 0.0
      %669 = vmatpush1.msra.mxu0 0.0
      %670 = vmatprep.subr.mxu0 0.0
      %671 = vmatpush1.msra.mxu0 0.0
      %672 = vmatprep.mubr.f32.mxu0 0.0
      %673 = vmatmul.mubr.f32.gmra.mrb[0].mxu0 %v557
      %v674 = vpop.f32.mrb[0].mxu0
      %v675 = vadd.f32 0.0, %v674
      %v676 = vpop.f32.mrb[0].mxu0
      %677 = vmatprep.mubr.f32.mxu0 0.0
      %678 = vmatmul.mubr.f32.gmra.mrb[0].mxu0 %v560
      %v679 = vpop.f32.mrb[0].mxu0
      %v680 = vadd.f32 0.0, %v679
      %v681 = vpop.f32.mrb[0].mxu0
      %682 = vmatprep.mubr.f32.mxu0 0.0
      %683 = vmatmul.mubr.f32.gmra.mrb[0].mxu0 %v563
      %v684 = vpop.f32.mrb[0].mxu0
      %v685 = vadd.f32 0.0, %v684
      %v686 = vpop.f32.mrb[0].mxu0
      %687 = vmatprep.mubr.f32.mxu0 0.0
      %688 = vmatmul.mubr.f32.gmra.mrb[0].mxu0 %v566
      %v689 = vpop.f32.mrb[0].mxu0
      %v690 = vadd.f32 0.0, %v689
      %v691 = vpop.f32.mrb[0].mxu0
      %692 = vmatprep.mubr.f32.mxu0 0.0
      %693 = vmatmul.mubr.f32.gmra.mrb[0].mxu0 %v569
      %v694 = vpop.f32.mrb[0].mxu0
      %v695 = vadd.f32 0.0, %v694
      %v696 = vpop.f32.mrb[0].mxu0
      %697 = vmatprep.mubr.f32.mxu0 0.0
      %698 = vmatmul.mubr.f32.gmra.mrb[0].mxu0 %v572
      %v699 = vpop.f32.mrb[0].mxu0
      %v700 = vadd.f32 0.0, %v699
      %v701 = vpop.f32.mrb[0].mxu0
      %702 = vmatprep.mubr.f32.mxu0 0.0
      %703 = vmatmul.mubr.f32.gmra.mrb[0].mxu0 %v575
      %v704 = vpop.f32.mrb[0].mxu0
      %v705 = vadd.f32 0.0, %v704
      %v706 = vpop.f32.mrb[0].mxu0
      %707 = vmatprep.mubr.f32.mxu0 0.0
      %708 = vmatmul.mubr.f32.gmra.mrb[0].mxu0 %v578
      %v709 = vpop.f32.mrb[0].mxu0
      %v710 = vadd.f32 0.0, %v709
      %v711 = vpop.f32.mrb[0].mxu0
      %712 = vmatprep.mubr.f32.mxu0 0.0
      %713 = vmatmul.mubr.f32.gmra.mrb[0].mxu0 %v581
      %v714 = vpop.f32.mrb[0].mxu0
      %v715 = vadd.f32 0.0, %v714
      %v716 = vpop.f32.mrb[0].mxu0
      %717 = vmatprep.mubr.f32.mxu0 0.0
      %718 = vmatmul.mubr.f32.gmra.mrb[0].mxu0 %v584
      %v719 = vpop.f32.mrb[0].mxu0
      %v720 = vadd.f32 0.0, %v719
      %v721 = vpop.f32.mrb[0].mxu0
      %722 = vmatprep.mubr.f32.mxu0 0.0
      %723 = vmatmul.mubr.f32.gmra.mrb[0].mxu0 %v587
      %v724 = vpop.f32.mrb[0].mxu0
      %v725 = vadd.f32 0.0, %v724
      %v726 = vpop.f32.mrb[0].mxu0
      %727 = vmatprep.mubr.f32.mxu0 0.0
      %728 = vmatmul.mubr.f32.gmra.mrb[0].mxu0 %v590
      %v729 = vpop.f32.mrb[0].mxu0
      %v730 = vadd.f32 0.0, %v729
      %v731 = vpop.f32.mrb[0].mxu0
      %732 = vmatprep.mubr.f32.mxu0 0.0
      %733 = vmatmul.mubr.f32.gmra.mrb[0].mxu0 %v593
      %v734 = vpop.f32.mrb[0].mxu0
      %v735 = vadd.f32 0.0, %v734
      %v736 = vpop.f32.mrb[0].mxu0
      %737 = vmatprep.mubr.f32.mxu0 0.0
      %738 = vmatmul.mubr.f32.gmra.mrb[0].mxu0 %v596
      %v739 = vpop.f32.mrb[0].mxu0
      %v740 = vadd.f32 0.0, %v739
      %v741 = vpop.f32.mrb[0].mxu0
      %742 = vmatprep.mubr.f32.mxu0 0.0
      %743 = vmatmul.mubr.f32.gmra.mrb[0].mxu0 %v599
      %v744 = vpop.f32.mrb[0].mxu0
      %v745 = vadd.f32 0.0, %v744
      %v746 = vpop.f32.mrb[0].mxu0
      %747 = vmatprep.mubr.f32.mxu0 0.0
      %748 = vmatmul.mubr.f32.gmra.mrb[0].mxu0 %v602
      %v749 = vpop.f32.mrb[0].mxu0
      %v750 = vadd.f32 0.0, %v749
      %v751 = vpop.f32.mrb[0].mxu0
      %752 = vdwg.mxu0
      %v754 = vsel %vm555, %v520, 0
      %v757 = vsel %vm555, %v521, 0
      %v760 = vsel %vm555, %v522, 0
      %v763 = vsel %vm555, %v523, 0
      %v766 = vsel %vm555, %v524, 0
      %v769 = vsel %vm555, %v525, 0
      %v772 = vsel %vm555, %v526, 0
      %v775 = vsel %vm555, %v527, 0
      %v778 = vsel %vm555, %v528, 0
      %v781 = vsel %vm555, %v529, 0
      %v784 = vsel %vm555, %v530, 0
      %v787 = vsel %vm555, %v531, 0
      %v790 = vsel %vm555, %v532, 0
      %v793 = vsel %vm555, %v533, 0
      %v796 = vsel %vm555, %v534, 0
      %v799 = vsel %vm555, %v535, 0
      %v802 = vsel %vm604, %v536, 0
      %804 = vmatprep.subr.mxu0 0.0
      %805 = vmatpush1.msra.mxu0 %v802
      %806 = vmatprep.subr.mxu0 0.0
      %807 = vmatpush1.msra.mxu0 0.0
      %808 = vmatprep.subr.mxu0 0.0
      %809 = vmatpush1.msra.mxu0 0.0
      %810 = vmatprep.subr.mxu0 0.0
      %811 = vmatpush1.msra.mxu0 0.0
      %812 = vmatprep.subr.mxu0 0.0
      %813 = vmatpush1.msra.mxu0 0.0
      %814 = vmatprep.subr.mxu0 0.0
      %815 = vmatpush1.msra.mxu0 0.0
      %816 = vmatprep.subr.mxu0 0.0
      %817 = vmatpush1.msra.mxu0 0.0
      %818 = vmatprep.subr.mxu0 0.0
      %819 = vmatpush1.msra.mxu0 0.0
      %820 = vmatprep.subr.mxu0 0.0
      %821 = vmatpush1.msra.mxu0 0.0
      %822 = vmatprep.subr.mxu0 0.0
      %823 = vmatpush1.msra.mxu0 0.0
      %824 = vmatprep.subr.mxu0 0.0
      %825 = vmatpush1.msra.mxu0 0.0
      %826 = vmatprep.subr.mxu0 0.0
      %827 = vmatpush1.msra.mxu0 0.0
      %828 = vmatprep.subr.mxu0 0.0
      %829 = vmatpush1.msra.mxu0 0.0
      %830 = vmatprep.subr.mxu0 0.0
      %831 = vmatpush1.msra.mxu0 0.0
      %832 = vmatprep.subr.mxu0 0.0
      %833 = vmatpush1.msra.mxu0 0.0
      %834 = vmatprep.subr.mxu0 0.0
      %835 = vmatpush1.msra.mxu0 0.0
      %836 = vmatprep.subr.mxu0 0.0
      %837 = vmatpush1.msra.mxu0 0.0
      %838 = vmatprep.subr.mxu0 0.0
      %839 = vmatpush1.msra.mxu0 0.0
      %840 = vmatprep.subr.mxu0 0.0
      %841 = vmatpush1.msra.mxu0 0.0
      %842 = vmatprep.subr.mxu0 0.0
      %843 = vmatpush1.msra.mxu0 0.0
      %844 = vmatprep.subr.mxu0 0.0
      %845 = vmatpush1.msra.mxu0 0.0
      %846 = vmatprep.subr.mxu0 0.0
      %847 = vmatpush1.msra.mxu0 0.0
      %848 = vmatprep.subr.mxu0 0.0
      %849 = vmatpush1.msra.mxu0 0.0
      %850 = vmatprep.subr.mxu0 0.0
      %851 = vmatpush1.msra.mxu0 0.0
      %852 = vmatprep.subr.mxu0 0.0
      %853 = vmatpush1.msra.mxu0 0.0
      %854 = vmatprep.subr.mxu0 0.0
      %855 = vmatpush1.msra.mxu0 0.0
      %856 = vmatprep.subr.mxu0 0.0
      %857 = vmatpush1.msra.mxu0 0.0
      %858 = vmatprep.subr.mxu0 0.0
      %859 = vmatpush1.msra.mxu0 0.0
      %860 = vmatprep.subr.mxu0 0.0
      %861 = vmatpush1.msra.mxu0 0.0
      %862 = vmatprep.subr.mxu0 0.0
      %863 = vmatpush1.msra.mxu0 0.0
      %864 = vmatprep.subr.mxu0 0.0
      %865 = vmatpush1.msra.mxu0 0.0
      %866 = vmatprep.subr.mxu0 0.0
      %867 = vmatpush1.msra.mxu0 0.0
      %868 = vmatprep.mubr.f32.mxu0 0.0
      %869 = vmatmul.mubr.f32.gmra.mrb[0].mxu0 %v754
      %v870 = vpop.f32.mrb[0].mxu0
      %v871 = vadd.f32 %v675, %v870
      %v872 = vpop.f32.mrb[0].mxu0
      %873 = vmatprep.mubr.f32.mxu0 0.0
      %874 = vmatmul.mubr.f32.gmra.mrb[0].mxu0 %v757
      %v875 = vpop.f32.mrb[0].mxu0
      %v876 = vadd.f32 %v680, %v875
      %v877 = vpop.f32.mrb[0].mxu0
      %878 = vmatprep.mubr.f32.mxu0 0.0
      %879 = vmatmul.mubr.f32.gmra.mrb[0].mxu0 %v760
      %v880 = vpop.f32.mrb[0].mxu0
      %v881 = vadd.f32 %v685, %v880
      %v882 = vpop.f32.mrb[0].mxu0
      %883 = vmatprep.mubr.f32.mxu0 0.0
      %884 = vmatmul.mubr.f32.gmra.mrb[0].mxu0 %v763
      %v885 = vpop.f32.mrb[0].mxu0
      %v886 = vadd.f32 %v690, %v885
      %v887 = vpop.f32.mrb[0].mxu0
      %888 = vmatprep.mubr.f32.mxu0 0.0
      %889 = vmatmul.mubr.f32.gmra.mrb[0].mxu0 %v766
      %v890 = vpop.f32.mrb[0].mxu0
      %v891 = vadd.f32 %v695, %v890
      %v892 = vpop.f32.mrb[0].mxu0
      %893 = vmatprep.mubr.f32.mxu0 0.0
      %894 = vmatmul.mubr.f32.gmra.mrb[0].mxu0 %v769
      %v895 = vpop.f32.mrb[0].mxu0
      %v896 = vadd.f32 %v700, %v895
      %v897 = vpop.f32.mrb[0].mxu0
      %898 = vmatprep.mubr.f32.mxu0 0.0
      %899 = vmatmul.mubr.f32.gmra.mrb[0].mxu0 %v772
      %v900 = vpop.f32.mrb[0].mxu0
      %v901 = vadd.f32 %v705, %v900
      %v902 = vpop.f32.mrb[0].mxu0
      %903 = vmatprep.mubr.f32.mxu0 0.0
      %904 = vmatmul.mubr.f32.gmra.mrb[0].mxu0 %v775
      %v905 = vpop.f32.mrb[0].mxu0
      %v906 = vadd.f32 %v710, %v905
      %v907 = vpop.f32.mrb[0].mxu0
      %908 = vmatprep.mubr.f32.mxu0 0.0
      %909 = vmatmul.mubr.f32.gmra.mrb[0].mxu0 %v778
      %v910 = vpop.f32.mrb[0].mxu0
      %v911 = vadd.f32 %v715, %v910
      %v912 = vpop.f32.mrb[0].mxu0
      %913 = vmatprep.mubr.f32.mxu0 0.0
      %914 = vmatmul.mubr.f32.gmra.mrb[0].mxu0 %v781
      %v915 = vpop.f32.mrb[0].mxu0
      %v916 = vadd.f32 %v720, %v915
      %v917 = vpop.f32.mrb[0].mxu0
      %918 = vmatprep.mubr.f32.mxu0 0.0
      %919 = vmatmul.mubr.f32.gmra.mrb[0].mxu0 %v784
      %v920 = vpop.f32.mrb[0].mxu0
      %v921 = vadd.f32 %v725, %v920
      %v922 = vpop.f32.mrb[0].mxu0
      %923 = vmatprep.mubr.f32.mxu0 0.0
      %924 = vmatmul.mubr.f32.gmra.mrb[0].mxu0 %v787
      %v925 = vpop.f32.mrb[0].mxu0
      %v926 = vadd.f32 %v730, %v925
      %v927 = vpop.f32.mrb[0].mxu0
      %928 = vmatprep.mubr.f32.mxu0 0.0
      %929 = vmatmul.mubr.f32.gmra.mrb[0].mxu0 %v790
      %v930 = vpop.f32.mrb[0].mxu0
      %v931 = vadd.f32 %v735, %v930
      %v932 = vpop.f32.mrb[0].mxu0
      %933 = vmatprep.mubr.f32.mxu0 0.0
      %934 = vmatmul.mubr.f32.gmra.mrb[0].mxu0 %v793
      %v935 = vpop.f32.mrb[0].mxu0
      %v936 = vadd.f32 %v740, %v935
      %v937 = vpop.f32.mrb[0].mxu0
      %938 = vmatprep.mubr.f32.mxu0 0.0
      %939 = vmatmul.mubr.f32.gmra.mrb[0].mxu0 %v796
      %v940 = vpop.f32.mrb[0].mxu0
      %v941 = vadd.f32 %v745, %v940
      %v942 = vpop.f32.mrb[0].mxu0
      %943 = vmatprep.mubr.f32.mxu0 0.0
      %944 = vmatmul.mubr.f32.gmra.mrb[0].mxu0 %v799
      %v945 = vpop.f32.mrb[0].mxu0
      %v946 = vadd.f32 %v750, %v945
      %v947 = vpop.f32.mrb[0].mxu0
      %948 = vdwg.mxu0
      %v949 = vld [vmem:[%s519 + $0x2] sm:$0xff]
      %v950 = vld [vmem:[%s519 + $0xa] sm:$0xff]
      %v951 = vld [vmem:[%s519 + $0x1a] sm:$0xff]
      %v952 = vld [vmem:[%s519 + $0x22] sm:$0xff]
      %v953 = vld [vmem:[%s519 + $0x32] sm:$0xff]
      %v954 = vld [vmem:[%s519 + $0x3a] sm:$0xff]
      %v955 = vld [vmem:[%s519 + $0x4a] sm:$0xff]
      %v956 = vld [vmem:[%s519 + $0x52] sm:$0xff]
      %v957 = vld [vmem:[%s519 + $0x62] sm:$0xff]
      %v958 = vld [vmem:[%s519 + $0x6a] sm:$0xff]
      %v959 = vld [vmem:[%s519 + $0x7a] sm:$0xff]
      %v960 = vld [vmem:[%s519 + $0x82] sm:$0xff]
      %v961 = vld [vmem:[%s519 + $0x92] sm:$0xff]
      %v962 = vld [vmem:[%s519 + $0x9a] sm:$0xff]
      %v963 = vld [vmem:[%s519 + $0xaa] sm:$0xff]
      %v964 = vld [vmem:[%s519 + $0xb2] sm:$0xff]
      %s965 = scalar_lea.vmem %s277, 8
      %v966 = vld [vmem:[%s965] sm:$0xf]
      %v968 = vsel %vm555, %v949, 0
      %v971 = vsel %vm555, %v950, 0
      %v974 = vsel %vm555, %v951, 0
      %v977 = vsel %vm555, %v952, 0
      %v980 = vsel %vm555, %v953, 0
      %v983 = vsel %vm555, %v954, 0
      %v986 = vsel %vm555, %v955, 0
      %v989 = vsel %vm555, %v956, 0
      %v992 = vsel %vm555, %v957, 0
      %v995 = vsel %vm555, %v958, 0
      %v998 = vsel %vm555, %v959, 0
      %v1001 = vsel %vm555, %v960, 0
      %v1004 = vsel %vm555, %v961, 0
      %v1007 = vsel %vm555, %v962, 0
      %v1010 = vsel %vm555, %v963, 0
      %v1013 = vsel %vm555, %v964, 0
      %v1016 = vsel %vm604, %v966, 0
      %1018 = vmatprep.subr.mxu0 0.0
      %1019 = vmatpush1.msra.mxu0 %v1016
      %1020 = vmatprep.subr.mxu0 0.0
      %1021 = vmatpush1.msra.mxu0 0.0
      %1022 = vmatprep.subr.mxu0 0.0
      %1023 = vmatpush1.msra.mxu0 0.0
      %1024 = vmatprep.subr.mxu0 0.0
      %1025 = vmatpush1.msra.mxu0 0.0
      %1026 = vmatprep.subr.mxu0 0.0
      %1027 = vmatpush1.msra.mxu0 0.0
      %1028 = vmatprep.subr.mxu0 0.0
      %1029 = vmatpush1.msra.mxu0 0.0
      %1030 = vmatprep.subr.mxu0 0.0
      %1031 = vmatpush1.msra.mxu0 0.0
      %1032 = vmatprep.subr.mxu0 0.0
      %1033 = vmatpush1.msra.mxu0 0.0
      %1034 = vmatprep.subr.mxu0 0.0
      %1035 = vmatpush1.msra.mxu0 0.0
      %1036 = vmatprep.subr.mxu0 0.0
      %1037 = vmatpush1.msra.mxu0 0.0
      %1038 = vmatprep.subr.mxu0 0.0
      %1039 = vmatpush1.msra.mxu0 0.0
      %1040 = vmatprep.subr.mxu0 0.0
      %1041 = vmatpush1.msra.mxu0 0.0
      %1042 = vmatprep.subr.mxu0 0.0
      %1043 = vmatpush1.msra.mxu0 0.0
      %1044 = vmatprep.subr.mxu0 0.0
      %1045 = vmatpush1.msra.mxu0 0.0
      %1046 = vmatprep.subr.mxu0 0.0
      %1047 = vmatpush1.msra.mxu0 0.0
      %1048 = vmatprep.subr.mxu0 0.0
      %1049 = vmatpush1.msra.mxu0 0.0
      %1050 = vmatprep.subr.mxu0 0.0
      %1051 = vmatpush1.msra.mxu0 0.0
      %1052 = vmatprep.subr.mxu0 0.0
      %1053 = vmatpush1.msra.mxu0 0.0
      %1054 = vmatprep.subr.mxu0 0.0
      %1055 = vmatpush1.msra.mxu0 0.0
      %1056 = vmatprep.subr.mxu0 0.0
      %1057 = vmatpush1.msra.mxu0 0.0
      %1058 = vmatprep.subr.mxu0 0.0
      %1059 = vmatpush1.msra.mxu0 0.0
      %1060 = vmatprep.subr.mxu0 0.0
      %1061 = vmatpush1.msra.mxu0 0.0
      %1062 = vmatprep.subr.mxu0 0.0
      %1063 = vmatpush1.msra.mxu0 0.0
      %1064 = vmatprep.subr.mxu0 0.0
      %1065 = vmatpush1.msra.mxu0 0.0
      %1066 = vmatprep.subr.mxu0 0.0
      %1067 = vmatpush1.msra.mxu0 0.0
      %1068 = vmatprep.subr.mxu0 0.0
      %1069 = vmatpush1.msra.mxu0 0.0
      %1070 = vmatprep.subr.mxu0 0.0
      %1071 = vmatpush1.msra.mxu0 0.0
      %1072 = vmatprep.subr.mxu0 0.0
      %1073 = vmatpush1.msra.mxu0 0.0
      %1074 = vmatprep.subr.mxu0 0.0
      %1075 = vmatpush1.msra.mxu0 0.0
      %1076 = vmatprep.subr.mxu0 0.0
      %1077 = vmatpush1.msra.mxu0 0.0
      %1078 = vmatprep.subr.mxu0 0.0
      %1079 = vmatpush1.msra.mxu0 0.0
      %1080 = vmatprep.subr.mxu0 0.0
      %1081 = vmatpush1.msra.mxu0 0.0
      %1082 = vmatprep.mubr.f32.mxu0 0.0
      %1083 = vmatmul.mubr.f32.gmra.mrb[0].mxu0 %v968
      %v1084 = vpop.f32.mrb[0].mxu0
      %v1085 = vadd.f32 0.0, %v1084
      %v1086 = vpop.f32.mrb[0].mxu0
      %1087 = vmatprep.mubr.f32.mxu0 0.0
      %1088 = vmatmul.mubr.f32.gmra.mrb[0].mxu0 %v971
      %v1089 = vpop.f32.mrb[0].mxu0
      %v1090 = vadd.f32 0.0, %v1089
      %v1091 = vpop.f32.mrb[0].mxu0
      %1092 = vmatprep.mubr.f32.mxu0 0.0
      %1093 = vmatmul.mubr.f32.gmra.mrb[0].mxu0 %v974
      %v1094 = vpop.f32.mrb[0].mxu0
      %v1095 = vadd.f32 0.0, %v1094
      %v1096 = vpop.f32.mrb[0].mxu0
      %1097 = vmatprep.mubr.f32.mxu0 0.0
      %1098 = vmatmul.mubr.f32.gmra.mrb[0].mxu0 %v977
      %v1099 = vpop.f32.mrb[0].mxu0
      %v1100 = vadd.f32 0.0, %v1099
      %v1101 = vpop.f32.mrb[0].mxu0
      %1102 = vmatprep.mubr.f32.mxu0 0.0
      %1103 = vmatmul.mubr.f32.gmra.mrb[0].mxu0 %v980
      %v1104 = vpop.f32.mrb[0].mxu0
      %v1105 = vadd.f32 0.0, %v1104
      %v1106 = vpop.f32.mrb[0].mxu0
      %1107 = vmatprep.mubr.f32.mxu0 0.0
      %1108 = vmatmul.mubr.f32.gmra.mrb[0].mxu0 %v983
      %v1109 = vpop.f32.mrb[0].mxu0
      %v1110 = vadd.f32 0.0, %v1109
      %v1111 = vpop.f32.mrb[0].mxu0
      %1112 = vmatprep.mubr.f32.mxu0 0.0
      %1113 = vmatmul.mubr.f32.gmra.mrb[0].mxu0 %v986
      %v1114 = vpop.f32.mrb[0].mxu0
      %v1115 = vadd.f32 0.0, %v1114
      %v1116 = vpop.f32.mrb[0].mxu0
      %1117 = vmatprep.mubr.f32.mxu0 0.0
      %1118 = vmatmul.mubr.f32.gmra.mrb[0].mxu0 %v989
      %v1119 = vpop.f32.mrb[0].mxu0
      %v1120 = vadd.f32 0.0, %v1119
      %v1121 = vpop.f32.mrb[0].mxu0
      %1122 = vmatprep.mubr.f32.mxu0 0.0
      %1123 = vmatmul.mubr.f32.gmra.mrb[0].mxu0 %v992
      %v1124 = vpop.f32.mrb[0].mxu0
      %v1125 = vadd.f32 0.0, %v1124
      %v1126 = vpop.f32.mrb[0].mxu0
      %1127 = vmatprep.mubr.f32.mxu0 0.0
      %1128 = vmatmul.mubr.f32.gmra.mrb[0].mxu0 %v995
      %v1129 = vpop.f32.mrb[0].mxu0
      %v1130 = vadd.f32 0.0, %v1129
      %v1131 = vpop.f32.mrb[0].mxu0
      %1132 = vmatprep.mubr.f32.mxu0 0.0
      %1133 = vmatmul.mubr.f32.gmra.mrb[0].mxu0 %v998
      %v1134 = vpop.f32.mrb[0].mxu0
      %v1135 = vadd.f32 0.0, %v1134
      %v1136 = vpop.f32.mrb[0].mxu0
      %1137 = vmatprep.mubr.f32.mxu0 0.0
      %1138 = vmatmul.mubr.f32.gmra.mrb[0].mxu0 %v1001
      %v1139 = vpop.f32.mrb[0].mxu0
      %v1140 = vadd.f32 0.0, %v1139
      %v1141 = vpop.f32.mrb[0].mxu0
      %1142 = vmatprep.mubr.f32.mxu0 0.0
      %1143 = vmatmul.mubr.f32.gmra.mrb[0].mxu0 %v1004
      %v1144 = vpop.f32.mrb[0].mxu0
      %v1145 = vadd.f32 0.0, %v1144
      %v1146 = vpop.f32.mrb[0].mxu0
      %1147 = vmatprep.mubr.f32.mxu0 0.0
      %1148 = vmatmul.mubr.f32.gmra.mrb[0].mxu0 %v1007
      %v1149 = vpop.f32.mrb[0].mxu0
      %v1150 = vadd.f32 0.0, %v1149
      %v1151 = vpop.f32.mrb[0].mxu0
      %1152 = vmatprep.mubr.f32.mxu0 0.0
      %1153 = vmatmul.mubr.f32.gmra.mrb[0].mxu0 %v1010
      %v1154 = vpop.f32.mrb[0].mxu0
      %v1155 = vadd.f32 0.0, %v1154
      %v1156 = vpop.f32.mrb[0].mxu0
      %1157 = vmatprep.mubr.f32.mxu0 0.0
      %1158 = vmatmul.mubr.f32.gmra.mrb[0].mxu0 %v1013
      %v1159 = vpop.f32.mrb[0].mxu0
      %v1160 = vadd.f32 0.0, %v1159
      %v1161 = vpop.f32.mrb[0].mxu0
      %1162 = vdwg.mxu0
      %v1163 = vadd.f32 %v871, %v1085
      %v1164 = vadd.f32 %v876, %v1090
      %v1165 = vadd.f32 %v881, %v1095
      %v1166 = vadd.f32 %v886, %v1100
      %v1167 = vadd.f32 %v891, %v1105
      %v1168 = vadd.f32 %v896, %v1110
      %v1169 = vadd.f32 %v901, %v1115
      %v1170 = vadd.f32 %v906, %v1120
      %v1171 = vadd.f32 %v911, %v1125
      %v1172 = vadd.f32 %v916, %v1130
      %v1173 = vadd.f32 %v921, %v1135
      %v1174 = vadd.f32 %v926, %v1140
      %v1175 = vadd.f32 %v931, %v1145
      %v1176 = vadd.f32 %v936, %v1150
      %v1177 = vadd.f32 %v941, %v1155
      %v1178 = vadd.f32 %v946, %v1160
      %s1179 = sadd.s32 %s517, 1
      %s1180 = smul.u32 %s1179, 24
      %s1181 = scalar_lea.vmem [#allocation2], %s1180
      %v1182 = vld [vmem:[%s1181] sm:$0xff]
      %v1183 = vld [vmem:[%s1181 + $0x8] sm:$0xff]
      %v1184 = vld [vmem:[%s1181 + $0x18] sm:$0xff]
      %v1185 = vld [vmem:[%s1181 + $0x20] sm:$0xff]
      %v1186 = vld [vmem:[%s1181 + $0x30] sm:$0xff]
      %v1187 = vld [vmem:[%s1181 + $0x38] sm:$0xff]
      %v1188 = vld [vmem:[%s1181 + $0x48] sm:$0xff]
      %v1189 = vld [vmem:[%s1181 + $0x50] sm:$0xff]
      %v1190 = vld [vmem:[%s1181 + $0x60] sm:$0xff]
      %v1191 = vld [vmem:[%s1181 + $0x68] sm:$0xff]
      %v1192 = vld [vmem:[%s1181 + $0x78] sm:$0xff]
      %v1193 = vld [vmem:[%s1181 + $0x80] sm:$0xff]
      %v1194 = vld [vmem:[%s1181 + $0x90] sm:$0xff]
      %v1195 = vld [vmem:[%s1181 + $0x98] sm:$0xff]
      %v1196 = vld [vmem:[%s1181 + $0xa8] sm:$0xff]
      %v1197 = vld [vmem:[%s1181 + $0xb0] sm:$0xff]
      %s1198 = scalar_lea.vmem %s277, 12
      %v1199 = vld [vmem:[%s1198] sm:$0xf]
      %v1201 = vsel %vm555, %v1182, 0
      %v1204 = vsel %vm555, %v1183, 0
      %v1207 = vsel %vm555, %v1184, 0
      %v1210 = vsel %vm555, %v1185, 0
      %v1213 = vsel %vm555, %v1186, 0
      %v1216 = vsel %vm555, %v1187, 0
      %v1219 = vsel %vm555, %v1188, 0
      %v1222 = vsel %vm555, %v1189, 0
      %v1225 = vsel %vm555, %v1190, 0
      %v1228 = vsel %vm555, %v1191, 0
      %v1231 = vsel %vm555, %v1192, 0
      %v1234 = vsel %vm555, %v1193, 0
      %v1237 = vsel %vm555, %v1194, 0
      %v1240 = vsel %vm555, %v1195, 0
      %v1243 = vsel %vm555, %v1196, 0
      %v1246 = vsel %vm555, %v1197, 0
      %v1249 = vsel %vm604, %v1199, 0
      %1251 = vmatprep.subr.mxu0 0.0
      %1252 = vmatpush1.msra.mxu0 %v1249
      %1253 = vmatprep.subr.mxu0 0.0
      %1254 = vmatpush1.msra.mxu0 0.0
      %1255 = vmatprep.subr.mxu0 0.0
      %1256 = vmatpush1.msra.mxu0 0.0
      %1257 = vmatprep.subr.mxu0 0.0
      %1258 = vmatpush1.msra.mxu0 0.0
      %1259 = vmatprep.subr.mxu0 0.0
      %1260 = vmatpush1.msra.mxu0 0.0
      %1261 = vmatprep.subr.mxu0 0.0
      %1262 = vmatpush1.msra.mxu0 0.0
      %1263 = vmatprep.subr.mxu0 0.0
      %1264 = vmatpush1.msra.mxu0 0.0
      %1265 = vmatprep.subr.mxu0 0.0
      %1266 = vmatpush1.msra.mxu0 0.0
      %1267 = vmatprep.subr.mxu0 0.0
      %1268 = vmatpush1.msra.mxu0 0.0
      %1269 = vmatprep.subr.mxu0 0.0
      %1270 = vmatpush1.msra.mxu0 0.0
      %1271 = vmatprep.subr.mxu0 0.0
      %1272 = vmatpush1.msra.mxu0 0.0
      %1273 = vmatprep.subr.mxu0 0.0
      %1274 = vmatpush1.msra.mxu0 0.0
      %1275 = vmatprep.subr.mxu0 0.0
      %1276 = vmatpush1.msra.mxu0 0.0
      %1277 = vmatprep.subr.mxu0 0.0
      %1278 = vmatpush1.msra.mxu0 0.0
      %1279 = vmatprep.subr.mxu0 0.0
      %1280 = vmatpush1.msra.mxu0 0.0
      %1281 = vmatprep.subr.mxu0 0.0
      %1282 = vmatpush1.msra.mxu0 0.0
      %1283 = vmatprep.subr.mxu0 0.0
      %1284 = vmatpush1.msra.mxu0 0.0
      %1285 = vmatprep.subr.mxu0 0.0
      %1286 = vmatpush1.msra.mxu0 0.0
      %1287 = vmatprep.subr.mxu0 0.0
      %1288 = vmatpush1.msra.mxu0 0.0
      %1289 = vmatprep.subr.mxu0 0.0
      %1290 = vmatpush1.msra.mxu0 0.0
      %1291 = vmatprep.subr.mxu0 0.0
      %1292 = vmatpush1.msra.mxu0 0.0
      %1293 = vmatprep.subr.mxu0 0.0
      %1294 = vmatpush1.msra.mxu0 0.0
      %1295 = vmatprep.subr.mxu0 0.0
      %1296 = vmatpush1.msra.mxu0 0.0
      %1297 = vmatprep.subr.mxu0 0.0
      %1298 = vmatpush1.msra.mxu0 0.0
      %1299 = vmatprep.subr.mxu0 0.0
      %1300 = vmatpush1.msra.mxu0 0.0
      %1301 = vmatprep.subr.mxu0 0.0
      %1302 = vmatpush1.msra.mxu0 0.0
      %1303 = vmatprep.subr.mxu0 0.0
      %1304 = vmatpush1.msra.mxu0 0.0
      %1305 = vmatprep.subr.mxu0 0.0
      %1306 = vmatpush1.msra.mxu0 0.0
      %1307 = vmatprep.subr.mxu0 0.0
      %1308 = vmatpush1.msra.mxu0 0.0
      %1309 = vmatprep.subr.mxu0 0.0
      %1310 = vmatpush1.msra.mxu0 0.0
      %1311 = vmatprep.subr.mxu0 0.0
      %1312 = vmatpush1.msra.mxu0 0.0
      %1313 = vmatprep.subr.mxu0 0.0
      %1314 = vmatpush1.msra.mxu0 0.0
      %1315 = vmatprep.mubr.f32.mxu0 0.0
      %1316 = vmatmul.mubr.f32.gmra.mrb[0].mxu0 %v1201
      %v1317 = vpop.f32.mrb[0].mxu0
      %v1318 = vadd.f32 0.0, %v1317
      %v1319 = vpop.f32.mrb[0].mxu0
      %1320 = vmatprep.mubr.f32.mxu0 0.0
      %1321 = vmatmul.mubr.f32.gmra.mrb[0].mxu0 %v1204
      %v1322 = vpop.f32.mrb[0].mxu0
      %v1323 = vadd.f32 0.0, %v1322
      %v1324 = vpop.f32.mrb[0].mxu0
      %1325 = vmatprep.mubr.f32.mxu0 0.0
      %1326 = vmatmul.mubr.f32.gmra.mrb[0].mxu0 %v1207
      %v1327 = vpop.f32.mrb[0].mxu0
      %v1328 = vadd.f32 0.0, %v1327
      %v1329 = vpop.f32.mrb[0].mxu0
      %1330 = vmatprep.mubr.f32.mxu0 0.0
      %1331 = vmatmul.mubr.f32.gmra.mrb[0].mxu0 %v1210
      %v1332 = vpop.f32.mrb[0].mxu0
      %v1333 = vadd.f32 0.0, %v1332
      %v1334 = vpop.f32.mrb[0].mxu0
      %1335 = vmatprep.mubr.f32.mxu0 0.0
      %1336 = vmatmul.mubr.f32.gmra.mrb[0].mxu0 %v1213
      %v1337 = vpop.f32.mrb[0].mxu0
      %v1338 = vadd.f32 0.0, %v1337
      %v1339 = vpop.f32.mrb[0].mxu0
      %1340 = vmatprep.mubr.f32.mxu0 0.0
      %1341 = vmatmul.mubr.f32.gmra.mrb[0].mxu0 %v1216
      %v1342 = vpop.f32.mrb[0].mxu0
      %v1343 = vadd.f32 0.0, %v1342
      %v1344 = vpop.f32.mrb[0].mxu0
      %1345 = vmatprep.mubr.f32.mxu0 0.0
      %1346 = vmatmul.mubr.f32.gmra.mrb[0].mxu0 %v1219
      %v1347 = vpop.f32.mrb[0].mxu0
      %v1348 = vadd.f32 0.0, %v1347
      %v1349 = vpop.f32.mrb[0].mxu0
      %1350 = vmatprep.mubr.f32.mxu0 0.0
      %1351 = vmatmul.mubr.f32.gmra.mrb[0].mxu0 %v1222
      %v1352 = vpop.f32.mrb[0].mxu0
      %v1353 = vadd.f32 0.0, %v1352
      %v1354 = vpop.f32.mrb[0].mxu0
      %1355 = vmatprep.mubr.f32.mxu0 0.0
      %1356 = vmatmul.mubr.f32.gmra.mrb[0].mxu0 %v1225
      %v1357 = vpop.f32.mrb[0].mxu0
      %v1358 = vadd.f32 0.0, %v1357
      %v1359 = vpop.f32.mrb[0].mxu0
      %1360 = vmatprep.mubr.f32.mxu0 0.0
      %1361 = vmatmul.mubr.f32.gmra.mrb[0].mxu0 %v1228
      %v1362 = vpop.f32.mrb[0].mxu0
      %v1363 = vadd.f32 0.0, %v1362
      %v1364 = vpop.f32.mrb[0].mxu0
      %1365 = vmatprep.mubr.f32.mxu0 0.0
      %1366 = vmatmul.mubr.f32.gmra.mrb[0].mxu0 %v1231
      %v1367 = vpop.f32.mrb[0].mxu0
      %v1368 = vadd.f32 0.0, %v1367
      %v1369 = vpop.f32.mrb[0].mxu0
      %1370 = vmatprep.mubr.f32.mxu0 0.0
      %1371 = vmatmul.mubr.f32.gmra.mrb[0].mxu0 %v1234
      %v1372 = vpop.f32.mrb[0].mxu0
      %v1373 = vadd.f32 0.0, %v1372
      %v1374 = vpop.f32.mrb[0].mxu0
      %1375 = vmatprep.mubr.f32.mxu0 0.0
      %1376 = vmatmul.mubr.f32.gmra.mrb[0].mxu0 %v1237
      %v1377 = vpop.f32.mrb[0].mxu0
      %v1378 = vadd.f32 0.0, %v1377
      %v1379 = vpop.f32.mrb[0].mxu0
      %1380 = vmatprep.mubr.f32.mxu0 0.0
      %1381 = vmatmul.mubr.f32.gmra.mrb[0].mxu0 %v1240
      %v1382 = vpop.f32.mrb[0].mxu0
      %v1383 = vadd.f32 0.0, %v1382
      %v1384 = vpop.f32.mrb[0].mxu0
      %1385 = vmatprep.mubr.f32.mxu0 0.0
      %1386 = vmatmul.mubr.f32.gmra.mrb[0].mxu0 %v1243
      %v1387 = vpop.f32.mrb[0].mxu0
      %v1388 = vadd.f32 0.0, %v1387
      %v1389 = vpop.f32.mrb[0].mxu0
      %1390 = vmatprep.mubr.f32.mxu0 0.0
      %1391 = vmatmul.mubr.f32.gmra.mrb[0].mxu0 %v1246
      %v1392 = vpop.f32.mrb[0].mxu0
      %v1393 = vadd.f32 0.0, %v1392
      %v1394 = vpop.f32.mrb[0].mxu0
      %1395 = vdwg.mxu0
      %v1396 = vadd.f32 %v1163, %v1318
      %v1397 = vadd.f32 %v1164, %v1323
      %v1398 = vadd.f32 %v1165, %v1328
      %v1399 = vadd.f32 %v1166, %v1333
      %v1400 = vadd.f32 %v1167, %v1338
      %v1401 = vadd.f32 %v1168, %v1343
      %v1402 = vadd.f32 %v1169, %v1348
      %v1403 = vadd.f32 %v1170, %v1353
      %v1404 = vadd.f32 %v1171, %v1358
      %v1405 = vadd.f32 %v1172, %v1363
      %v1406 = vadd.f32 %v1173, %v1368
      %v1407 = vadd.f32 %v1174, %v1373
      %v1408 = vadd.f32 %v1175, %v1378
      %v1409 = vadd.f32 %v1176, %v1383
      %v1410 = vadd.f32 %v1177, %v1388
      %v1411 = vadd.f32 %v1178, %v1393
      %v1412 = vld [vmem:[%s1181 + $0x1] sm:$0xff]
      %v1413 = vld [vmem:[%s1181 + $0x9] sm:$0xff]
      %v1414 = vld [vmem:[%s1181 + $0x19] sm:$0xff]
      %v1415 = vld [vmem:[%s1181 + $0x21] sm:$0xff]
      %v1416 = vld [vmem:[%s1181 + $0x31] sm:$0xff]
      %v1417 = vld [vmem:[%s1181 + $0x39] sm:$0xff]
      %v1418 = vld [vmem:[%s1181 + $0x49] sm:$0xff]
      %v1419 = vld [vmem:[%s1181 + $0x51] sm:$0xff]
      %v1420 = vld [vmem:[%s1181 + $0x61] sm:$0xff]
      %v1421 = vld [vmem:[%s1181 + $0x69] sm:$0xff]
      %v1422 = vld [vmem:[%s1181 + $0x79] sm:$0xff]
      %v1423 = vld [vmem:[%s1181 + $0x81] sm:$0xff]
      %v1424 = vld [vmem:[%s1181 + $0x91] sm:$0xff]
      %v1425 = vld [vmem:[%s1181 + $0x99] sm:$0xff]
      %v1426 = vld [vmem:[%s1181 + $0xa9] sm:$0xff]
      %v1427 = vld [vmem:[%s1181 + $0xb1] sm:$0xff]
      %s1428 = scalar_lea.vmem %s277, 16
      %v1429 = vld [vmem:[%s1428] sm:$0xf]
      %v1431 = vsel %vm555, %v1412, 0
      %v1434 = vsel %vm555, %v1413, 0
      %v1437 = vsel %vm555, %v1414, 0
      %v1440 = vsel %vm555, %v1415, 0
      %v1443 = vsel %vm555, %v1416, 0
      %v1446 = vsel %vm555, %v1417, 0
      %v1449 = vsel %vm555, %v1418, 0
      %v1452 = vsel %vm555, %v1419, 0
      %v1455 = vsel %vm555, %v1420, 0
      %v1458 = vsel %vm555, %v1421, 0
      %v1461 = vsel %vm555, %v1422, 0
      %v1464 = vsel %vm555, %v1423, 0
      %v1467 = vsel %vm555, %v1424, 0
      %v1470 = vsel %vm555, %v1425, 0
      %v1473 = vsel %vm555, %v1426, 0
      %v1476 = vsel %vm555, %v1427, 0
      %v1479 = vsel %vm604, %v1429, 0
      %1481 = vmatprep.subr.mxu0 0.0
      %1482 = vmatpush1.msra.mxu0 %v1479
      %1483 = vmatprep.subr.mxu0 0.0
      %1484 = vmatpush1.msra.mxu0 0.0
      %1485 = vmatprep.subr.mxu0 0.0
      %1486 = vmatpush1.msra.mxu0 0.0
      %1487 = vmatprep.subr.mxu0 0.0
      %1488 = vmatpush1.msra.mxu0 0.0
      %1489 = vmatprep.subr.mxu0 0.0
      %1490 = vmatpush1.msra.mxu0 0.0
      %1491 = vmatprep.subr.mxu0 0.0
      %1492 = vmatpush1.msra.mxu0 0.0
      %1493 = vmatprep.subr.mxu0 0.0
      %1494 = vmatpush1.msra.mxu0 0.0
      %1495 = vmatprep.subr.mxu0 0.0
      %1496 = vmatpush1.msra.mxu0 0.0
      %1497 = vmatprep.subr.mxu0 0.0
      %1498 = vmatpush1.msra.mxu0 0.0
      %1499 = vmatprep.subr.mxu0 0.0
      %1500 = vmatpush1.msra.mxu0 0.0
      %1501 = vmatprep.subr.mxu0 0.0
      %1502 = vmatpush1.msra.mxu0 0.0
      %1503 = vmatprep.subr.mxu0 0.0
      %1504 = vmatpush1.msra.mxu0 0.0
      %1505 = vmatprep.subr.mxu0 0.0
      %1506 = vmatpush1.msra.mxu0 0.0
      %1507 = vmatprep.subr.mxu0 0.0
      %1508 = vmatpush1.msra.mxu0 0.0
      %1509 = vmatprep.subr.mxu0 0.0
      %1510 = vmatpush1.msra.mxu0 0.0
      %1511 = vmatprep.subr.mxu0 0.0
      %1512 = vmatpush1.msra.mxu0 0.0
      %1513 = vmatprep.subr.mxu0 0.0
      %1514 = vmatpush1.msra.mxu0 0.0
      %1515 = vmatprep.subr.mxu0 0.0
      %1516 = vmatpush1.msra.mxu0 0.0
      %1517 = vmatprep.subr.mxu0 0.0
      %1518 = vmatpush1.msra.mxu0 0.0
      %1519 = vmatprep.subr.mxu0 0.0
      %1520 = vmatpush1.msra.mxu0 0.0
      %1521 = vmatprep.subr.mxu0 0.0
      %1522 = vmatpush1.msra.mxu0 0.0
      %1523 = vmatprep.subr.mxu0 0.0
      %1524 = vmatpush1.msra.mxu0 0.0
      %1525 = vmatprep.subr.mxu0 0.0
      %1526 = vmatpush1.msra.mxu0 0.0
      %1527 = vmatprep.subr.mxu0 0.0
      %1528 = vmatpush1.msra.mxu0 0.0
      %1529 = vmatprep.subr.mxu0 0.0
      %1530 = vmatpush1.msra.mxu0 0.0
      %1531 = vmatprep.subr.mxu0 0.0
      %1532 = vmatpush1.msra.mxu0 0.0
      %1533 = vmatprep.subr.mxu0 0.0
      %1534 = vmatpush1.msra.mxu0 0.0
      %1535 = vmatprep.subr.mxu0 0.0
      %1536 = vmatpush1.msra.mxu0 0.0
      %1537 = vmatprep.subr.mxu0 0.0
      %1538 = vmatpush1.msra.mxu0 0.0
      %1539 = vmatprep.subr.mxu0 0.0
      %1540 = vmatpush1.msra.mxu0 0.0
      %1541 = vmatprep.subr.mxu0 0.0
      %1542 = vmatpush1.msra.mxu0 0.0
      %1543 = vmatprep.subr.mxu0 0.0
      %1544 = vmatpush1.msra.mxu0 0.0
      %1545 = vmatprep.mubr.f32.mxu0 0.0
      %1546 = vmatmul.mubr.f32.gmra.mrb[0].mxu0 %v1431
      %v1547 = vpop.f32.mrb[0].mxu0
      %v1548 = vadd.f32 0.0, %v1547
      %v1549 = vpop.f32.mrb[0].mxu0
      %1550 = vmatprep.mubr.f32.mxu0 0.0
      %1551 = vmatmul.mubr.f32.gmra.mrb[0].mxu0 %v1434
      %v1552 = vpop.f32.mrb[0].mxu0
      %v1553 = vadd.f32 0.0, %v1552
      %v1554 = vpop.f32.mrb[0].mxu0
      %1555 = vmatprep.mubr.f32.mxu0 0.0
      %1556 = vmatmul.mubr.f32.gmra.mrb[0].mxu0 %v1437
      %v1557 = vpop.f32.mrb[0].mxu0
      %v1558 = vadd.f32 0.0, %v1557
      %v1559 = vpop.f32.mrb[0].mxu0
      %1560 = vmatprep.mubr.f32.mxu0 0.0
      %1561 = vmatmul.mubr.f32.gmra.mrb[0].mxu0 %v1440
      %v1562 = vpop.f32.mrb[0].mxu0
      %v1563 = vadd.f32 0.0, %v1562
      %v1564 = vpop.f32.mrb[0].mxu0
      %1565 = vmatprep.mubr.f32.mxu0 0.0
      %1566 = vmatmul.mubr.f32.gmra.mrb[0].mxu0 %v1443
      %v1567 = vpop.f32.mrb[0].mxu0
      %v1568 = vadd.f32 0.0, %v1567
      %v1569 = vpop.f32.mrb[0].mxu0
      %1570 = vmatprep.mubr.f32.mxu0 0.0
      %1571 = vmatmul.mubr.f32.gmra.mrb[0].mxu0 %v1446
      %v1572 = vpop.f32.mrb[0].mxu0
      %v1573 = vadd.f32 0.0, %v1572
      %v1574 = vpop.f32.mrb[0].mxu0
      %1575 = vmatprep.mubr.f32.mxu0 0.0
      %1576 = vmatmul.mubr.f32.gmra.mrb[0].mxu0 %v1449
      %v1577 = vpop.f32.mrb[0].mxu0
      %v1578 = vadd.f32 0.0, %v1577
      %v1579 = vpop.f32.mrb[0].mxu0
      %1580 = vmatprep.mubr.f32.mxu0 0.0
      %1581 = vmatmul.mubr.f32.gmra.mrb[0].mxu0 %v1452
      %v1582 = vpop.f32.mrb[0].mxu0
      %v1583 = vadd.f32 0.0, %v1582
      %v1584 = vpop.f32.mrb[0].mxu0
      %1585 = vmatprep.mubr.f32.mxu0 0.0
      %1586 = vmatmul.mubr.f32.gmra.mrb[0].mxu0 %v1455
      %v1587 = vpop.f32.mrb[0].mxu0
      %v1588 = vadd.f32 0.0, %v1587
      %v1589 = vpop.f32.mrb[0].mxu0
      %1590 = vmatprep.mubr.f32.mxu0 0.0
      %1591 = vmatmul.mubr.f32.gmra.mrb[0].mxu0 %v1458
      %v1592 = vpop.f32.mrb[0].mxu0
      %v1593 = vadd.f32 0.0, %v1592
      %v1594 = vpop.f32.mrb[0].mxu0
      %1595 = vmatprep.mubr.f32.mxu0 0.0
      %1596 = vmatmul.mubr.f32.gmra.mrb[0].mxu0 %v1461
      %v1597 = vpop.f32.mrb[0].mxu0
      %v1598 = vadd.f32 0.0, %v1597
      %v1599 = vpop.f32.mrb[0].mxu0
      %1600 = vmatprep.mubr.f32.mxu0 0.0
      %1601 = vmatmul.mubr.f32.gmra.mrb[0].mxu0 %v1464
      %v1602 = vpop.f32.mrb[0].mxu0
      %v1603 = vadd.f32 0.0, %v1602
      %v1604 = vpop.f32.mrb[0].mxu0
      %1605 = vmatprep.mubr.f32.mxu0 0.0
      %1606 = vmatmul.mubr.f32.gmra.mrb[0].mxu0 %v1467
      %v1607 = vpop.f32.mrb[0].mxu0
      %v1608 = vadd.f32 0.0, %v1607
      %v1609 = vpop.f32.mrb[0].mxu0
      %1610 = vmatprep.mubr.f32.mxu0 0.0
      %1611 = vmatmul.mubr.f32.gmra.mrb[0].mxu0 %v1470
      %v1612 = vpop.f32.mrb[0].mxu0
      %v1613 = vadd.f32 0.0, %v1612
      %v1614 = vpop.f32.mrb[0].mxu0
      %1615 = vmatprep.mubr.f32.mxu0 0.0
      %1616 = vmatmul.mubr.f32.gmra.mrb[0].mxu0 %v1473
      %v1617 = vpop.f32.mrb[0].mxu0
      %v1618 = vadd.f32 0.0, %v1617
      %v1619 = vpop.f32.mrb[0].mxu0
      %1620 = vmatprep.mubr.f32.mxu0 0.0
      %1621 = vmatmul.mubr.f32.gmra.mrb[0].mxu0 %v1476
      %v1622 = vpop.f32.mrb[0].mxu0
      %v1623 = vadd.f32 0.0, %v1622
      %v1624 = vpop.f32.mrb[0].mxu0
      %1625 = vdwg.mxu0
      %v1626 = vadd.f32 %v1396, %v1548
      %v1627 = vadd.f32 %v1397, %v1553
      %v1628 = vadd.f32 %v1398, %v1558
      %v1629 = vadd.f32 %v1399, %v1563
      %v1630 = vadd.f32 %v1400, %v1568
      %v1631 = vadd.f32 %v1401, %v1573
      %v1632 = vadd.f32 %v1402, %v1578
      %v1633 = vadd.f32 %v1403, %v1583
      %v1634 = vadd.f32 %v1404, %v1588
      %v1635 = vadd.f32 %v1405, %v1593
      %v1636 = vadd.f32 %v1406, %v1598
      %v1637 = vadd.f32 %v1407, %v1603
      %v1638 = vadd.f32 %v1408, %v1608
      %v1639 = vadd.f32 %v1409, %v1613
      %v1640 = vadd.f32 %v1410, %v1618
      %v1641 = vadd.f32 %v1411, %v1623
      %v1642 = vld [vmem:[%s1181 + $0x2] sm:$0xff]
      %v1643 = vld [vmem:[%s1181 + $0xa] sm:$0xff]
      %v1644 = vld [vmem:[%s1181 + $0x1a] sm:$0xff]
      %v1645 = vld [vmem:[%s1181 + $0x22] sm:$0xff]
      %v1646 = vld [vmem:[%s1181 + $0x32] sm:$0xff]
      %v1647 = vld [vmem:[%s1181 + $0x3a] sm:$0xff]
      %v1648 = vld [vmem:[%s1181 + $0x4a] sm:$0xff]
      %v1649 = vld [vmem:[%s1181 + $0x52] sm:$0xff]
      %v1650 = vld [vmem:[%s1181 + $0x62] sm:$0xff]
      %v1651 = vld [vmem:[%s1181 + $0x6a] sm:$0xff]
      %v1652 = vld [vmem:[%s1181 + $0x7a] sm:$0xff]
      %v1653 = vld [vmem:[%s1181 + $0x82] sm:$0xff]
      %v1654 = vld [vmem:[%s1181 + $0x92] sm:$0xff]
      %v1655 = vld [vmem:[%s1181 + $0x9a] sm:$0xff]
      %v1656 = vld [vmem:[%s1181 + $0xaa] sm:$0xff]
      %v1657 = vld [vmem:[%s1181 + $0xb2] sm:$0xff]
      %s1658 = scalar_lea.vmem %s277, 20
      %v1659 = vld [vmem:[%s1658] sm:$0xf]
      %v1661 = vsel %vm555, %v1642, 0
      %v1664 = vsel %vm555, %v1643, 0
      %v1667 = vsel %vm555, %v1644, 0
      %v1670 = vsel %vm555, %v1645, 0
      %v1673 = vsel %vm555, %v1646, 0
      %v1676 = vsel %vm555, %v1647, 0
      %v1679 = vsel %vm555, %v1648, 0
      %v1682 = vsel %vm555, %v1649, 0
      %v1685 = vsel %vm555, %v1650, 0
      %v1688 = vsel %vm555, %v1651, 0
      %v1691 = vsel %vm555, %v1652, 0
      %v1694 = vsel %vm555, %v1653, 0
      %v1697 = vsel %vm555, %v1654, 0
      %v1700 = vsel %vm555, %v1655, 0
      %v1703 = vsel %vm555, %v1656, 0
      %v1706 = vsel %vm555, %v1657, 0
      %v1709 = vsel %vm604, %v1659, 0
      %1711 = vmatprep.subr.mxu0 0.0
      %1712 = vmatpush1.msra.mxu0 %v1709
      %1713 = vmatprep.subr.mxu0 0.0
      %1714 = vmatpush1.msra.mxu0 0.0
      %1715 = vmatprep.subr.mxu0 0.0
      %1716 = vmatpush1.msra.mxu0 0.0
      %1717 = vmatprep.subr.mxu0 0.0
      %1718 = vmatpush1.msra.mxu0 0.0
      %1719 = vmatprep.subr.mxu0 0.0
      %1720 = vmatpush1.msra.mxu0 0.0
      %1721 = vmatprep.subr.mxu0 0.0
      %1722 = vmatpush1.msra.mxu0 0.0
      %1723 = vmatprep.subr.mxu0 0.0
      %1724 = vmatpush1.msra.mxu0 0.0
      %1725 = vmatprep.subr.mxu0 0.0
      %1726 = vmatpush1.msra.mxu0 0.0
      %1727 = vmatprep.subr.mxu0 0.0
      %1728 = vmatpush1.msra.mxu0 0.0
      %1729 = vmatprep.subr.mxu0 0.0
      %1730 = vmatpush1.msra.mxu0 0.0
      %1731 = vmatprep.subr.mxu0 0.0
      %1732 = vmatpush1.msra.mxu0 0.0
      %1733 = vmatprep.subr.mxu0 0.0
      %1734 = vmatpush1.msra.mxu0 0.0
      %1735 = vmatprep.subr.mxu0 0.0
      %1736 = vmatpush1.msra.mxu0 0.0
      %1737 = vmatprep.subr.mxu0 0.0
      %1738 = vmatpush1.msra.mxu0 0.0
      %1739 = vmatprep.subr.mxu0 0.0
      %1740 = vmatpush1.msra.mxu0 0.0
      %1741 = vmatprep.subr.mxu0 0.0
      %1742 = vmatpush1.msra.mxu0 0.0
      %1743 = vmatprep.subr.mxu0 0.0
      %1744 = vmatpush1.msra.mxu0 0.0
      %1745 = vmatprep.subr.mxu0 0.0
      %1746 = vmatpush1.msra.mxu0 0.0
      %1747 = vmatprep.subr.mxu0 0.0
      %1748 = vmatpush1.msra.mxu0 0.0
      %1749 = vmatprep.subr.mxu0 0.0
      %1750 = vmatpush1.msra.mxu0 0.0
      %1751 = vmatprep.subr.mxu0 0.0
      %1752 = vmatpush1.msra.mxu0 0.0
      %1753 = vmatprep.subr.mxu0 0.0
      %1754 = vmatpush1.msra.mxu0 0.0
      %1755 = vmatprep.subr.mxu0 0.0
      %1756 = vmatpush1.msra.mxu0 0.0
      %1757 = vmatprep.subr.mxu0 0.0
      %1758 = vmatpush1.msra.mxu0 0.0
      %1759 = vmatprep.subr.mxu0 0.0
      %1760 = vmatpush1.msra.mxu0 0.0
      %1761 = vmatprep.subr.mxu0 0.0
      %1762 = vmatpush1.msra.mxu0 0.0
      %1763 = vmatprep.subr.mxu0 0.0
      %1764 = vmatpush1.msra.mxu0 0.0
      %1765 = vmatprep.subr.mxu0 0.0
      %1766 = vmatpush1.msra.mxu0 0.0
      %1767 = vmatprep.subr.mxu0 0.0
      %1768 = vmatpush1.msra.mxu0 0.0
      %1769 = vmatprep.subr.mxu0 0.0
      %1770 = vmatpush1.msra.mxu0 0.0
      %1771 = vmatprep.subr.mxu0 0.0
      %1772 = vmatpush1.msra.mxu0 0.0
      %1773 = vmatprep.subr.mxu0 0.0
      %1774 = vmatpush1.msra.mxu0 0.0
      %1775 = vmatprep.mubr.f32.mxu0 0.0
      %1776 = vmatmul.mubr.f32.gmra.mrb[0].mxu0 %v1661
      %v1777 = vpop.f32.mrb[0].mxu0
      %v1778 = vadd.f32 0.0, %v1777
      %v1779 = vpop.f32.mrb[0].mxu0
      %1780 = vmatprep.mubr.f32.mxu0 0.0
      %1781 = vmatmul.mubr.f32.gmra.mrb[0].mxu0 %v1664
      %v1782 = vpop.f32.mrb[0].mxu0
      %v1783 = vadd.f32 0.0, %v1782
      %v1784 = vpop.f32.mrb[0].mxu0
      %1785 = vmatprep.mubr.f32.mxu0 0.0
      %1786 = vmatmul.mubr.f32.gmra.mrb[0].mxu0 %v1667
      %v1787 = vpop.f32.mrb[0].mxu0
      %v1788 = vadd.f32 0.0, %v1787
      %v1789 = vpop.f32.mrb[0].mxu0
      %1790 = vmatprep.mubr.f32.mxu0 0.0
      %1791 = vmatmul.mubr.f32.gmra.mrb[0].mxu0 %v1670
      %v1792 = vpop.f32.mrb[0].mxu0
      %v1793 = vadd.f32 0.0, %v1792
      %v1794 = vpop.f32.mrb[0].mxu0
      %1795 = vmatprep.mubr.f32.mxu0 0.0
      %1796 = vmatmul.mubr.f32.gmra.mrb[0].mxu0 %v1673
      %v1797 = vpop.f32.mrb[0].mxu0
      %v1798 = vadd.f32 0.0, %v1797
      %v1799 = vpop.f32.mrb[0].mxu0
      %1800 = vmatprep.mubr.f32.mxu0 0.0
      %1801 = vmatmul.mubr.f32.gmra.mrb[0].mxu0 %v1676
      %v1802 = vpop.f32.mrb[0].mxu0
      %v1803 = vadd.f32 0.0, %v1802
      %v1804 = vpop.f32.mrb[0].mxu0
      %1805 = vmatprep.mubr.f32.mxu0 0.0
      %1806 = vmatmul.mubr.f32.gmra.mrb[0].mxu0 %v1679
      %v1807 = vpop.f32.mrb[0].mxu0
      %v1808 = vadd.f32 0.0, %v1807
      %v1809 = vpop.f32.mrb[0].mxu0
      %1810 = vmatprep.mubr.f32.mxu0 0.0
      %1811 = vmatmul.mubr.f32.gmra.mrb[0].mxu0 %v1682
      %v1812 = vpop.f32.mrb[0].mxu0
      %v1813 = vadd.f32 0.0, %v1812
      %v1814 = vpop.f32.mrb[0].mxu0
      %1815 = vmatprep.mubr.f32.mxu0 0.0
      %1816 = vmatmul.mubr.f32.gmra.mrb[0].mxu0 %v1685
      %v1817 = vpop.f32.mrb[0].mxu0
      %v1818 = vadd.f32 0.0, %v1817
      %v1819 = vpop.f32.mrb[0].mxu0
      %1820 = vmatprep.mubr.f32.mxu0 0.0
      %1821 = vmatmul.mubr.f32.gmra.mrb[0].mxu0 %v1688
      %v1822 = vpop.f32.mrb[0].mxu0
      %v1823 = vadd.f32 0.0, %v1822
      %v1824 = vpop.f32.mrb[0].mxu0
      %1825 = vmatprep.mubr.f32.mxu0 0.0
      %1826 = vmatmul.mubr.f32.gmra.mrb[0].mxu0 %v1691
      %v1827 = vpop.f32.mrb[0].mxu0
      %v1828 = vadd.f32 0.0, %v1827
      %v1829 = vpop.f32.mrb[0].mxu0
      %1830 = vmatprep.mubr.f32.mxu0 0.0
      %1831 = vmatmul.mubr.f32.gmra.mrb[0].mxu0 %v1694
      %v1832 = vpop.f32.mrb[0].mxu0
      %v1833 = vadd.f32 0.0, %v1832
      %v1834 = vpop.f32.mrb[0].mxu0
      %1835 = vmatprep.mubr.f32.mxu0 0.0
      %1836 = vmatmul.mubr.f32.gmra.mrb[0].mxu0 %v1697
      %v1837 = vpop.f32.mrb[0].mxu0
      %v1838 = vadd.f32 0.0, %v1837
      %v1839 = vpop.f32.mrb[0].mxu0
      %1840 = vmatprep.mubr.f32.mxu0 0.0
      %1841 = vmatmul.mubr.f32.gmra.mrb[0].mxu0 %v1700
      %v1842 = vpop.f32.mrb[0].mxu0
      %v1843 = vadd.f32 0.0, %v1842
      %v1844 = vpop.f32.mrb[0].mxu0
      %1845 = vmatprep.mubr.f32.mxu0 0.0
      %1846 = vmatmul.mubr.f32.gmra.mrb[0].mxu0 %v1703
      %v1847 = vpop.f32.mrb[0].mxu0
      %v1848 = vadd.f32 0.0, %v1847
      %v1849 = vpop.f32.mrb[0].mxu0
      %1850 = vmatprep.mubr.f32.mxu0 0.0
      %1851 = vmatmul.mubr.f32.gmra.mrb[0].mxu0 %v1706
      %v1852 = vpop.f32.mrb[0].mxu0
      %v1853 = vadd.f32 0.0, %v1852
      %v1854 = vpop.f32.mrb[0].mxu0
      %1855 = vdwg.mxu0
      %v1856 = vadd.f32 %v1626, %v1778
      %v1857 = vadd.f32 %v1627, %v1783
      %v1858 = vadd.f32 %v1628, %v1788
      %v1859 = vadd.f32 %v1629, %v1793
      %v1860 = vadd.f32 %v1630, %v1798
      %v1861 = vadd.f32 %v1631, %v1803
      %v1862 = vadd.f32 %v1632, %v1808
      %v1863 = vadd.f32 %v1633, %v1813
      %v1864 = vadd.f32 %v1634, %v1818
      %v1865 = vadd.f32 %v1635, %v1823
      %v1866 = vadd.f32 %v1636, %v1828
      %v1867 = vadd.f32 %v1637, %v1833
      %v1868 = vadd.f32 %v1638, %v1838
      %v1869 = vadd.f32 %v1639, %v1843
      %v1870 = vadd.f32 %v1640, %v1848
      %v1871 = vadd.f32 %v1641, %v1853
      %s1872 = sadd.s32 %s517, 2
      %s1873 = smul.u32 %s1872, 24
      %s1874 = scalar_lea.vmem [#allocation2], %s1873
      %v1875 = vld [vmem:[%s1874] sm:$0xff]
      %v1876 = vld [vmem:[%s1874 + $0x8] sm:$0xff]
      %v1877 = vld [vmem:[%s1874 + $0x18] sm:$0xff]
      %v1878 = vld [vmem:[%s1874 + $0x20] sm:$0xff]
      %v1879 = vld [vmem:[%s1874 + $0x30] sm:$0xff]
      %v1880 = vld [vmem:[%s1874 + $0x38] sm:$0xff]
      %v1881 = vld [vmem:[%s1874 + $0x48] sm:$0xff]
      %v1882 = vld [vmem:[%s1874 + $0x50] sm:$0xff]
      %v1883 = vld [vmem:[%s1874 + $0x60] sm:$0xff]
      %v1884 = vld [vmem:[%s1874 + $0x68] sm:$0xff]
      %v1885 = vld [vmem:[%s1874 + $0x78] sm:$0xff]
      %v1886 = vld [vmem:[%s1874 + $0x80] sm:$0xff]
      %v1887 = vld [vmem:[%s1874 + $0x90] sm:$0xff]
      %v1888 = vld [vmem:[%s1874 + $0x98] sm:$0xff]
      %v1889 = vld [vmem:[%s1874 + $0xa8] sm:$0xff]
      %v1890 = vld [vmem:[%s1874 + $0xb0] sm:$0xff]
      %s1891 = scalar_lea.vmem %s277, 24
      %v1892 = vld [vmem:[%s1891] sm:$0xf]
      %v1894 = vsel %vm555, %v1875, 0
      %v1897 = vsel %vm555, %v1876, 0
      %v1900 = vsel %vm555, %v1877, 0
      %v1903 = vsel %vm555, %v1878, 0
      %v1906 = vsel %vm555, %v1879, 0
      %v1909 = vsel %vm555, %v1880, 0
      %v1912 = vsel %vm555, %v1881, 0
      %v1915 = vsel %vm555, %v1882, 0
      %v1918 = vsel %vm555, %v1883, 0
      %v1921 = vsel %vm555, %v1884, 0
      %v1924 = vsel %vm555, %v1885, 0
      %v1927 = vsel %vm555, %v1886, 0
      %v1930 = vsel %vm555, %v1887, 0
      %v1933 = vsel %vm555, %v1888, 0
      %v1936 = vsel %vm555, %v1889, 0
      %v1939 = vsel %vm555, %v1890, 0
      %v1942 = vsel %vm604, %v1892, 0
      %1944 = vmatprep.subr.mxu0 0.0
      %1945 = vmatpush1.msra.mxu0 %v1942
      %1946 = vmatprep.subr.mxu0 0.0
      %1947 = vmatpush1.msra.mxu0 0.0
      %1948 = vmatprep.subr.mxu0 0.0
      %1949 = vmatpush1.msra.mxu0 0.0
      %1950 = vmatprep.subr.mxu0 0.0
      %1951 = vmatpush1.msra.mxu0 0.0
      %1952 = vmatprep.subr.mxu0 0.0
      %1953 = vmatpush1.msra.mxu0 0.0
      %1954 = vmatprep.subr.mxu0 0.0
      %1955 = vmatpush1.msra.mxu0 0.0
      %1956 = vmatprep.subr.mxu0 0.0
      %1957 = vmatpush1.msra.mxu0 0.0
      %1958 = vmatprep.subr.mxu0 0.0
      %1959 = vmatpush1.msra.mxu0 0.0
      %1960 = vmatprep.subr.mxu0 0.0
      %1961 = vmatpush1.msra.mxu0 0.0
      %1962 = vmatprep.subr.mxu0 0.0
      %1963 = vmatpush1.msra.mxu0 0.0
      %1964 = vmatprep.subr.mxu0 0.0
      %1965 = vmatpush1.msra.mxu0 0.0
      %1966 = vmatprep.subr.mxu0 0.0
      %1967 = vmatpush1.msra.mxu0 0.0
      %1968 = vmatprep.subr.mxu0 0.0
      %1969 = vmatpush1.msra.mxu0 0.0
      %1970 = vmatprep.subr.mxu0 0.0
      %1971 = vmatpush1.msra.mxu0 0.0
      %1972 = vmatprep.subr.mxu0 0.0
      %1973 = vmatpush1.msra.mxu0 0.0
      %1974 = vmatprep.subr.mxu0 0.0
      %1975 = vmatpush1.msra.mxu0 0.0
      %1976 = vmatprep.subr.mxu0 0.0
      %1977 = vmatpush1.msra.mxu0 0.0
      %1978 = vmatprep.subr.mxu0 0.0
      %1979 = vmatpush1.msra.mxu0 0.0
      %1980 = vmatprep.subr.mxu0 0.0
      %1981 = vmatpush1.msra.mxu0 0.0
      %1982 = vmatprep.subr.mxu0 0.0
      %1983 = vmatpush1.msra.mxu0 0.0
      %1984 = vmatprep.subr.mxu0 0.0
      %1985 = vmatpush1.msra.mxu0 0.0
      %1986 = vmatprep.subr.mxu0 0.0
      %1987 = vmatpush1.msra.mxu0 0.0
      %1988 = vmatprep.subr.mxu0 0.0
      %1989 = vmatpush1.msra.mxu0 0.0
      %1990 = vmatprep.subr.mxu0 0.0
      %1991 = vmatpush1.msra.mxu0 0.0
      %1992 = vmatprep.subr.mxu0 0.0
      %1993 = vmatpush1.msra.mxu0 0.0
      %1994 = vmatprep.subr.mxu0 0.0
      %1995 = vmatpush1.msra.mxu0 0.0
      %1996 = vmatprep.subr.mxu0 0.0
      %1997 = vmatpush1.msra.mxu0 0.0
      %1998 = vmatprep.subr.mxu0 0.0
      %1999 = vmatpush1.msra.mxu0 0.0
      %2000 = vmatprep.subr.mxu0 0.0
      %2001 = vmatpush1.msra.mxu0 0.0
      %2002 = vmatprep.subr.mxu0 0.0
      %2003 = vmatpush1.msra.mxu0 0.0
      %2004 = vmatprep.subr.mxu0 0.0
      %2005 = vmatpush1.msra.mxu0 0.0
      %2006 = vmatprep.subr.mxu0 0.0
      %2007 = vmatpush1.msra.mxu0 0.0
      %2008 = vmatprep.mubr.f32.mxu0 0.0
      %2009 = vmatmul.mubr.f32.gmra.mrb[0].mxu0 %v1894
      %v2010 = vpop.f32.mrb[0].mxu0
      %v2011 = vadd.f32 0.0, %v2010
      %v2012 = vpop.f32.mrb[0].mxu0
      %2013 = vmatprep.mubr.f32.mxu0 0.0
      %2014 = vmatmul.mubr.f32.gmra.mrb[0].mxu0 %v1897
      %v2015 = vpop.f32.mrb[0].mxu0
      %v2016 = vadd.f32 0.0, %v2015
      %v2017 = vpop.f32.mrb[0].mxu0
      %2018 = vmatprep.mubr.f32.mxu0 0.0
      %2019 = vmatmul.mubr.f32.gmra.mrb[0].mxu0 %v1900
      %v2020 = vpop.f32.mrb[0].mxu0
      %v2021 = vadd.f32 0.0, %v2020
      %v2022 = vpop.f32.mrb[0].mxu0
      %2023 = vmatprep.mubr.f32.mxu0 0.0
      %2024 = vmatmul.mubr.f32.gmra.mrb[0].mxu0 %v1903
      %v2025 = vpop.f32.mrb[0].mxu0
      %v2026 = vadd.f32 0.0, %v2025
      %v2027 = vpop.f32.mrb[0].mxu0
      %2028 = vmatprep.mubr.f32.mxu0 0.0
      %2029 = vmatmul.mubr.f32.gmra.mrb[0].mxu0 %v1906
      %v2030 = vpop.f32.mrb[0].mxu0
      %v2031 = vadd.f32 0.0, %v2030
      %v2032 = vpop.f32.mrb[0].mxu0
      %2033 = vmatprep.mubr.f32.mxu0 0.0
      %2034 = vmatmul.mubr.f32.gmra.mrb[0].mxu0 %v1909
      %v2035 = vpop.f32.mrb[0].mxu0
      %v2036 = vadd.f32 0.0, %v2035
      %v2037 = vpop.f32.mrb[0].mxu0
      %2038 = vmatprep.mubr.f32.mxu0 0.0
      %2039 = vmatmul.mubr.f32.gmra.mrb[0].mxu0 %v1912
      %v2040 = vpop.f32.mrb[0].mxu0
      %v2041 = vadd.f32 0.0, %v2040
      %v2042 = vpop.f32.mrb[0].mxu0
      %2043 = vmatprep.mubr.f32.mxu0 0.0
      %2044 = vmatmul.mubr.f32.gmra.mrb[0].mxu0 %v1915
      %v2045 = vpop.f32.mrb[0].mxu0
      %v2046 = vadd.f32 0.0, %v2045
      %v2047 = vpop.f32.mrb[0].mxu0
      %2048 = vmatprep.mubr.f32.mxu0 0.0
      %2049 = vmatmul.mubr.f32.gmra.mrb[0].mxu0 %v1918
      %v2050 = vpop.f32.mrb[0].mxu0
      %v2051 = vadd.f32 0.0, %v2050
      %v2052 = vpop.f32.mrb[0].mxu0
      %2053 = vmatprep.mubr.f32.mxu0 0.0
      %2054 = vmatmul.mubr.f32.gmra.mrb[0].mxu0 %v1921
      %v2055 = vpop.f32.mrb[0].mxu0
      %v2056 = vadd.f32 0.0, %v2055
      %v2057 = vpop.f32.mrb[0].mxu0
      %2058 = vmatprep.mubr.f32.mxu0 0.0
      %2059 = vmatmul.mubr.f32.gmra.mrb[0].mxu0 %v1924
      %v2060 = vpop.f32.mrb[0].mxu0
      %v2061 = vadd.f32 0.0, %v2060
      %v2062 = vpop.f32.mrb[0].mxu0
      %2063 = vmatprep.mubr.f32.mxu0 0.0
      %2064 = vmatmul.mubr.f32.gmra.mrb[0].mxu0 %v1927
      %v2065 = vpop.f32.mrb[0].mxu0
      %v2066 = vadd.f32 0.0, %v2065
      %v2067 = vpop.f32.mrb[0].mxu0
      %2068 = vmatprep.mubr.f32.mxu0 0.0
      %2069 = vmatmul.mubr.f32.gmra.mrb[0].mxu0 %v1930
      %v2070 = vpop.f32.mrb[0].mxu0
      %v2071 = vadd.f32 0.0, %v2070
      %v2072 = vpop.f32.mrb[0].mxu0
      %2073 = vmatprep.mubr.f32.mxu0 0.0
      %2074 = vmatmul.mubr.f32.gmra.mrb[0].mxu0 %v1933
      %v2075 = vpop.f32.mrb[0].mxu0
      %v2076 = vadd.f32 0.0, %v2075
      %v2077 = vpop.f32.mrb[0].mxu0
      %2078 = vmatprep.mubr.f32.mxu0 0.0
      %2079 = vmatmul.mubr.f32.gmra.mrb[0].mxu0 %v1936
      %v2080 = vpop.f32.mrb[0].mxu0
      %v2081 = vadd.f32 0.0, %v2080
      %v2082 = vpop.f32.mrb[0].mxu0
      %2083 = vmatprep.mubr.f32.mxu0 0.0
      %2084 = vmatmul.mubr.f32.gmra.mrb[0].mxu0 %v1939
      %v2085 = vpop.f32.mrb[0].mxu0
      %v2086 = vadd.f32 0.0, %v2085
      %v2087 = vpop.f32.mrb[0].mxu0
      %2088 = vdwg.mxu0
      %v2089 = vadd.f32 %v1856, %v2011
      %v2090 = vadd.f32 %v1857, %v2016
      %v2091 = vadd.f32 %v1858, %v2021
      %v2092 = vadd.f32 %v1859, %v2026
      %v2093 = vadd.f32 %v1860, %v2031
      %v2094 = vadd.f32 %v1861, %v2036
      %v2095 = vadd.f32 %v1862, %v2041
      %v2096 = vadd.f32 %v1863, %v2046
      %v2097 = vadd.f32 %v1864, %v2051
      %v2098 = vadd.f32 %v1865, %v2056
      %v2099 = vadd.f32 %v1866, %v2061
      %v2100 = vadd.f32 %v1867, %v2066
      %v2101 = vadd.f32 %v1868, %v2071
      %v2102 = vadd.f32 %v1869, %v2076
      %v2103 = vadd.f32 %v1870, %v2081
      %v2104 = vadd.f32 %v1871, %v2086
      %v2105 = vld [vmem:[%s1874 + $0x1] sm:$0xff]
      %v2106 = vld [vmem:[%s1874 + $0x9] sm:$0xff]
      %v2107 = vld [vmem:[%s1874 + $0x19] sm:$0xff]
      %v2108 = vld [vmem:[%s1874 + $0x21] sm:$0xff]
      %v2109 = vld [vmem:[%s1874 + $0x31] sm:$0xff]
      %v2110 = vld [vmem:[%s1874 + $0x39] sm:$0xff]
      %v2111 = vld [vmem:[%s1874 + $0x49] sm:$0xff]
      %v2112 = vld [vmem:[%s1874 + $0x51] sm:$0xff]
      %v2113 = vld [vmem:[%s1874 + $0x61] sm:$0xff]
      %v2114 = vld [vmem:[%s1874 + $0x69] sm:$0xff]
      %v2115 = vld [vmem:[%s1874 + $0x79] sm:$0xff]
      %v2116 = vld [vmem:[%s1874 + $0x81] sm:$0xff]
      %v2117 = vld [vmem:[%s1874 + $0x91] sm:$0xff]
      %v2118 = vld [vmem:[%s1874 + $0x99] sm:$0xff]
      %v2119 = vld [vmem:[%s1874 + $0xa9] sm:$0xff]
      %v2120 = vld [vmem:[%s1874 + $0xb1] sm:$0xff]
      %s2121 = scalar_lea.vmem %s277, 28
      %v2122 = vld [vmem:[%s2121] sm:$0xf]
      %v2124 = vsel %vm555, %v2105, 0
      %v2127 = vsel %vm555, %v2106, 0
      %v2130 = vsel %vm555, %v2107, 0
      %v2133 = vsel %vm555, %v2108, 0
      %v2136 = vsel %vm555, %v2109, 0
      %v2139 = vsel %vm555, %v2110, 0
      %v2142 = vsel %vm555, %v2111, 0
      %v2145 = vsel %vm555, %v2112, 0
      %v2148 = vsel %vm555, %v2113, 0
      %v2151 = vsel %vm555, %v2114, 0
      %v2154 = vsel %vm555, %v2115, 0
      %v2157 = vsel %vm555, %v2116, 0
      %v2160 = vsel %vm555, %v2117, 0
      %v2163 = vsel %vm555, %v2118, 0
      %v2166 = vsel %vm555, %v2119, 0
      %v2169 = vsel %vm555, %v2120, 0
      %v2172 = vsel %vm604, %v2122, 0
      %2174 = vmatprep.subr.mxu0 0.0
      %2175 = vmatpush1.msra.mxu0 %v2172
      %2176 = vmatprep.subr.mxu0 0.0
      %2177 = vmatpush1.msra.mxu0 0.0
      %2178 = vmatprep.subr.mxu0 0.0
      %2179 = vmatpush1.msra.mxu0 0.0
      %2180 = vmatprep.subr.mxu0 0.0
      %2181 = vmatpush1.msra.mxu0 0.0
      %2182 = vmatprep.subr.mxu0 0.0
      %2183 = vmatpush1.msra.mxu0 0.0
      %2184 = vmatprep.subr.mxu0 0.0
      %2185 = vmatpush1.msra.mxu0 0.0
      %2186 = vmatprep.subr.mxu0 0.0
      %2187 = vmatpush1.msra.mxu0 0.0
      %2188 = vmatprep.subr.mxu0 0.0
      %2189 = vmatpush1.msra.mxu0 0.0
      %2190 = vmatprep.subr.mxu0 0.0
      %2191 = vmatpush1.msra.mxu0 0.0
      %2192 = vmatprep.subr.mxu0 0.0
      %2193 = vmatpush1.msra.mxu0 0.0
      %2194 = vmatprep.subr.mxu0 0.0
      %2195 = vmatpush1.msra.mxu0 0.0
      %2196 = vmatprep.subr.mxu0 0.0
      %2197 = vmatpush1.msra.mxu0 0.0
      %2198 = vmatprep.subr.mxu0 0.0
      %2199 = vmatpush1.msra.mxu0 0.0
      %2200 = vmatprep.subr.mxu0 0.0
      %2201 = vmatpush1.msra.mxu0 0.0
      %2202 = vmatprep.subr.mxu0 0.0
      %2203 = vmatpush1.msra.mxu0 0.0
      %2204 = vmatprep.subr.mxu0 0.0
      %2205 = vmatpush1.msra.mxu0 0.0
      %2206 = vmatprep.subr.mxu0 0.0
      %2207 = vmatpush1.msra.mxu0 0.0
      %2208 = vmatprep.subr.mxu0 0.0
      %2209 = vmatpush1.msra.mxu0 0.0
      %2210 = vmatprep.subr.mxu0 0.0
      %2211 = vmatpush1.msra.mxu0 0.0
      %2212 = vmatprep.subr.mxu0 0.0
      %2213 = vmatpush1.msra.mxu0 0.0
      %2214 = vmatprep.subr.mxu0 0.0
      %2215 = vmatpush1.msra.mxu0 0.0
      %2216 = vmatprep.subr.mxu0 0.0
      %2217 = vmatpush1.msra.mxu0 0.0
      %2218 = vmatprep.subr.mxu0 0.0
      %2219 = vmatpush1.msra.mxu0 0.0
      %2220 = vmatprep.subr.mxu0 0.0
      %2221 = vmatpush1.msra.mxu0 0.0
      %2222 = vmatprep.subr.mxu0 0.0
      %2223 = vmatpush1.msra.mxu0 0.0
      %2224 = vmatprep.subr.mxu0 0.0
      %2225 = vmatpush1.msra.mxu0 0.0
      %2226 = vmatprep.subr.mxu0 0.0
      %2227 = vmatpush1.msra.mxu0 0.0
      %2228 = vmatprep.subr.mxu0 0.0
      %2229 = vmatpush1.msra.mxu0 0.0
      %2230 = vmatprep.subr.mxu0 0.0
      %2231 = vmatpush1.msra.mxu0 0.0
      %2232 = vmatprep.subr.mxu0 0.0
      %2233 = vmatpush1.msra.mxu0 0.0
      %2234 = vmatprep.subr.mxu0 0.0
      %2235 = vmatpush1.msra.mxu0 0.0
      %2236 = vmatprep.subr.mxu0 0.0
      %2237 = vmatpush1.msra.mxu0 0.0
      %2238 = vmatprep.mubr.f32.mxu0 0.0
      %2239 = vmatmul.mubr.f32.gmra.mrb[0].mxu0 %v2124
      %v2240 = vpop.f32.mrb[0].mxu0
      %v2241 = vadd.f32 0.0, %v2240
      %v2242 = vpop.f32.mrb[0].mxu0
      %2243 = vmatprep.mubr.f32.mxu0 0.0
      %2244 = vmatmul.mubr.f32.gmra.mrb[0].mxu0 %v2127
      %v2245 = vpop.f32.mrb[0].mxu0
      %v2246 = vadd.f32 0.0, %v2245
      %v2247 = vpop.f32.mrb[0].mxu0
      %2248 = vmatprep.mubr.f32.mxu0 0.0
      %2249 = vmatmul.mubr.f32.gmra.mrb[0].mxu0 %v2130
      %v2250 = vpop.f32.mrb[0].mxu0
      %v2251 = vadd.f32 0.0, %v2250
      %v2252 = vpop.f32.mrb[0].mxu0
      %2253 = vmatprep.mubr.f32.mxu0 0.0
      %2254 = vmatmul.mubr.f32.gmra.mrb[0].mxu0 %v2133
      %v2255 = vpop.f32.mrb[0].mxu0
      %v2256 = vadd.f32 0.0, %v2255
      %v2257 = vpop.f32.mrb[0].mxu0
      %2258 = vmatprep.mubr.f32.mxu0 0.0
      %2259 = vmatmul.mubr.f32.gmra.mrb[0].mxu0 %v2136
      %v2260 = vpop.f32.mrb[0].mxu0
      %v2261 = vadd.f32 0.0, %v2260
      %v2262 = vpop.f32.mrb[0].mxu0
      %2263 = vmatprep.mubr.f32.mxu0 0.0
      %2264 = vmatmul.mubr.f32.gmra.mrb[0].mxu0 %v2139
      %v2265 = vpop.f32.mrb[0].mxu0
      %v2266 = vadd.f32 0.0, %v2265
      %v2267 = vpop.f32.mrb[0].mxu0
      %2268 = vmatprep.mubr.f32.mxu0 0.0
      %2269 = vmatmul.mubr.f32.gmra.mrb[0].mxu0 %v2142
      %v2270 = vpop.f32.mrb[0].mxu0
      %v2271 = vadd.f32 0.0, %v2270
      %v2272 = vpop.f32.mrb[0].mxu0
      %2273 = vmatprep.mubr.f32.mxu0 0.0
      %2274 = vmatmul.mubr.f32.gmra.mrb[0].mxu0 %v2145
      %v2275 = vpop.f32.mrb[0].mxu0
      %v2276 = vadd.f32 0.0, %v2275
      %v2277 = vpop.f32.mrb[0].mxu0
      %2278 = vmatprep.mubr.f32.mxu0 0.0
      %2279 = vmatmul.mubr.f32.gmra.mrb[0].mxu0 %v2148
      %v2280 = vpop.f32.mrb[0].mxu0
      %v2281 = vadd.f32 0.0, %v2280
      %v2282 = vpop.f32.mrb[0].mxu0
      %2283 = vmatprep.mubr.f32.mxu0 0.0
      %2284 = vmatmul.mubr.f32.gmra.mrb[0].mxu0 %v2151
      %v2285 = vpop.f32.mrb[0].mxu0
      %v2286 = vadd.f32 0.0, %v2285
      %v2287 = vpop.f32.mrb[0].mxu0
      %2288 = vmatprep.mubr.f32.mxu0 0.0
      %2289 = vmatmul.mubr.f32.gmra.mrb[0].mxu0 %v2154
      %v2290 = vpop.f32.mrb[0].mxu0
      %v2291 = vadd.f32 0.0, %v2290
      %v2292 = vpop.f32.mrb[0].mxu0
      %2293 = vmatprep.mubr.f32.mxu0 0.0
      %2294 = vmatmul.mubr.f32.gmra.mrb[0].mxu0 %v2157
      %v2295 = vpop.f32.mrb[0].mxu0
      %v2296 = vadd.f32 0.0, %v2295
      %v2297 = vpop.f32.mrb[0].mxu0
      %2298 = vmatprep.mubr.f32.mxu0 0.0
      %2299 = vmatmul.mubr.f32.gmra.mrb[0].mxu0 %v2160
      %v2300 = vpop.f32.mrb[0].mxu0
      %v2301 = vadd.f32 0.0, %v2300
      %v2302 = vpop.f32.mrb[0].mxu0
      %2303 = vmatprep.mubr.f32.mxu0 0.0
      %2304 = vmatmul.mubr.f32.gmra.mrb[0].mxu0 %v2163
      %v2305 = vpop.f32.mrb[0].mxu0
      %v2306 = vadd.f32 0.0, %v2305
      %v2307 = vpop.f32.mrb[0].mxu0
      %2308 = vmatprep.mubr.f32.mxu0 0.0
      %2309 = vmatmul.mubr.f32.gmra.mrb[0].mxu0 %v2166
      %v2310 = vpop.f32.mrb[0].mxu0
      %v2311 = vadd.f32 0.0, %v2310
      %v2312 = vpop.f32.mrb[0].mxu0
      %2313 = vmatprep.mubr.f32.mxu0 0.0
      %2314 = vmatmul.mubr.f32.gmra.mrb[0].mxu0 %v2169
      %v2315 = vpop.f32.mrb[0].mxu0
      %v2316 = vadd.f32 0.0, %v2315
      %v2317 = vpop.f32.mrb[0].mxu0
      %2318 = vdwg.mxu0
      %v2319 = vadd.f32 %v2089, %v2241
      %v2320 = vadd.f32 %v2090, %v2246
      %v2321 = vadd.f32 %v2091, %v2251
      %v2322 = vadd.f32 %v2092, %v2256
      %v2323 = vadd.f32 %v2093, %v2261
      %v2324 = vadd.f32 %v2094, %v2266
      %v2325 = vadd.f32 %v2095, %v2271
      %v2326 = vadd.f32 %v2096, %v2276
      %v2327 = vadd.f32 %v2097, %v2281
      %v2328 = vadd.f32 %v2098, %v2286
      %v2329 = vadd.f32 %v2099, %v2291
      %v2330 = vadd.f32 %v2100, %v2296
      %v2331 = vadd.f32 %v2101, %v2301
      %v2332 = vadd.f32 %v2102, %v2306
      %v2333 = vadd.f32 %v2103, %v2311
      %v2334 = vadd.f32 %v2104, %v2316
      %v2335 = vld [vmem:[%s1874 + $0x2] sm:$0xff]
      %v2336 = vld [vmem:[%s1874 + $0xa] sm:$0xff]
      %v2337 = vld [vmem:[%s1874 + $0x1a] sm:$0xff]
      %v2338 = vld [vmem:[%s1874 + $0x22] sm:$0xff]
      %v2339 = vld [vmem:[%s1874 + $0x32] sm:$0xff]
      %v2340 = vld [vmem:[%s1874 + $0x3a] sm:$0xff]
      %v2341 = vld [vmem:[%s1874 + $0x4a] sm:$0xff]
      %v2342 = vld [vmem:[%s1874 + $0x52] sm:$0xff]
      %v2343 = vld [vmem:[%s1874 + $0x62] sm:$0xff]
      %v2344 = vld [vmem:[%s1874 + $0x6a] sm:$0xff]
      %v2345 = vld [vmem:[%s1874 + $0x7a] sm:$0xff]
      %v2346 = vld [vmem:[%s1874 + $0x82] sm:$0xff]
      %v2347 = vld [vmem:[%s1874 + $0x92] sm:$0xff]
      %v2348 = vld [vmem:[%s1874 + $0x9a] sm:$0xff]
      %v2349 = vld [vmem:[%s1874 + $0xaa] sm:$0xff]
      %v2350 = vld [vmem:[%s1874 + $0xb2] sm:$0xff]
      %s2351 = scalar_lea.vmem %s277, 32
      %v2352 = vld [vmem:[%s2351] sm:$0xf]
      %v2354 = vsel %vm555, %v2335, 0
      %v2357 = vsel %vm555, %v2336, 0
      %v2360 = vsel %vm555, %v2337, 0
      %v2363 = vsel %vm555, %v2338, 0
      %v2366 = vsel %vm555, %v2339, 0
      %v2369 = vsel %vm555, %v2340, 0
      %v2372 = vsel %vm555, %v2341, 0
      %v2375 = vsel %vm555, %v2342, 0
      %v2378 = vsel %vm555, %v2343, 0
      %v2381 = vsel %vm555, %v2344, 0
      %v2384 = vsel %vm555, %v2345, 0
      %v2387 = vsel %vm555, %v2346, 0
      %v2390 = vsel %vm555, %v2347, 0
      %v2393 = vsel %vm555, %v2348, 0
      %v2396 = vsel %vm555, %v2349, 0
      %v2399 = vsel %vm555, %v2350, 0
      %v2402 = vsel %vm604, %v2352, 0
      %2404 = vmatprep.subr.mxu0 0.0
      %2405 = vmatpush1.msra.mxu0 %v2402
      %2406 = vmatprep.subr.mxu0 0.0
      %2407 = vmatpush1.msra.mxu0 0.0
      %2408 = vmatprep.subr.mxu0 0.0
      %2409 = vmatpush1.msra.mxu0 0.0
      %2410 = vmatprep.subr.mxu0 0.0
      %2411 = vmatpush1.msra.mxu0 0.0
      %2412 = vmatprep.subr.mxu0 0.0
      %2413 = vmatpush1.msra.mxu0 0.0
      %2414 = vmatprep.subr.mxu0 0.0
      %2415 = vmatpush1.msra.mxu0 0.0
      %2416 = vmatprep.subr.mxu0 0.0
      %2417 = vmatpush1.msra.mxu0 0.0
      %2418 = vmatprep.subr.mxu0 0.0
      %2419 = vmatpush1.msra.mxu0 0.0
      %2420 = vmatprep.subr.mxu0 0.0
      %2421 = vmatpush1.msra.mxu0 0.0
      %2422 = vmatprep.subr.mxu0 0.0
      %2423 = vmatpush1.msra.mxu0 0.0
      %2424 = vmatprep.subr.mxu0 0.0
      %2425 = vmatpush1.msra.mxu0 0.0
      %2426 = vmatprep.subr.mxu0 0.0
      %2427 = vmatpush1.msra.mxu0 0.0
      %2428 = vmatprep.subr.mxu0 0.0
      %2429 = vmatpush1.msra.mxu0 0.0
      %2430 = vmatprep.subr.mxu0 0.0
      %2431 = vmatpush1.msra.mxu0 0.0
      %2432 = vmatprep.subr.mxu0 0.0
      %2433 = vmatpush1.msra.mxu0 0.0
      %2434 = vmatprep.subr.mxu0 0.0
      %2435 = vmatpush1.msra.mxu0 0.0
      %2436 = vmatprep.subr.mxu0 0.0
      %2437 = vmatpush1.msra.mxu0 0.0
      %2438 = vmatprep.subr.mxu0 0.0
      %2439 = vmatpush1.msra.mxu0 0.0
      %2440 = vmatprep.subr.mxu0 0.0
      %2441 = vmatpush1.msra.mxu0 0.0
      %2442 = vmatprep.subr.mxu0 0.0
      %2443 = vmatpush1.msra.mxu0 0.0
      %2444 = vmatprep.subr.mxu0 0.0
      %2445 = vmatpush1.msra.mxu0 0.0
      %2446 = vmatprep.subr.mxu0 0.0
      %2447 = vmatpush1.msra.mxu0 0.0
      %2448 = vmatprep.subr.mxu0 0.0
      %2449 = vmatpush1.msra.mxu0 0.0
      %2450 = vmatprep.subr.mxu0 0.0
      %2451 = vmatpush1.msra.mxu0 0.0
      %2452 = vmatprep.subr.mxu0 0.0
      %2453 = vmatpush1.msra.mxu0 0.0
      %2454 = vmatprep.subr.mxu0 0.0
      %2455 = vmatpush1.msra.mxu0 0.0
      %2456 = vmatprep.subr.mxu0 0.0
      %2457 = vmatpush1.msra.mxu0 0.0
      %2458 = vmatprep.subr.mxu0 0.0
      %2459 = vmatpush1.msra.mxu0 0.0
      %2460 = vmatprep.subr.mxu0 0.0
      %2461 = vmatpush1.msra.mxu0 0.0
      %2462 = vmatprep.subr.mxu0 0.0
      %2463 = vmatpush1.msra.mxu0 0.0
      %2464 = vmatprep.subr.mxu0 0.0
      %2465 = vmatpush1.msra.mxu0 0.0
      %2466 = vmatprep.subr.mxu0 0.0
      %2467 = vmatpush1.msra.mxu0 0.0
      %2468 = vmatprep.mubr.f32.mxu0 0.0
      %2469 = vmatmul.mubr.f32.gmra.mrb[0].mxu0 %v2354
      %v2470 = vpop.f32.mrb[0].mxu0
      %v2471 = vadd.f32 0.0, %v2470
      %v2472 = vpop.f32.mrb[0].mxu0
      %2473 = vmatprep.mubr.f32.mxu0 0.0
      %2474 = vmatmul.mubr.f32.gmra.mrb[0].mxu0 %v2357
      %v2475 = vpop.f32.mrb[0].mxu0
      %v2476 = vadd.f32 0.0, %v2475
      %v2477 = vpop.f32.mrb[0].mxu0
      %2478 = vmatprep.mubr.f32.mxu0 0.0
      %2479 = vmatmul.mubr.f32.gmra.mrb[0].mxu0 %v2360
      %v2480 = vpop.f32.mrb[0].mxu0
      %v2481 = vadd.f32 0.0, %v2480
      %v2482 = vpop.f32.mrb[0].mxu0
      %2483 = vmatprep.mubr.f32.mxu0 0.0
      %2484 = vmatmul.mubr.f32.gmra.mrb[0].mxu0 %v2363
      %v2485 = vpop.f32.mrb[0].mxu0
      %v2486 = vadd.f32 0.0, %v2485
      %v2487 = vpop.f32.mrb[0].mxu0
      %2488 = vmatprep.mubr.f32.mxu0 0.0
      %2489 = vmatmul.mubr.f32.gmra.mrb[0].mxu0 %v2366
      %v2490 = vpop.f32.mrb[0].mxu0
      %v2491 = vadd.f32 0.0, %v2490
      %v2492 = vpop.f32.mrb[0].mxu0
      %2493 = vmatprep.mubr.f32.mxu0 0.0
      %2494 = vmatmul.mubr.f32.gmra.mrb[0].mxu0 %v2369
      %v2495 = vpop.f32.mrb[0].mxu0
      %v2496 = vadd.f32 0.0, %v2495
      %v2497 = vpop.f32.mrb[0].mxu0
      %2498 = vmatprep.mubr.f32.mxu0 0.0
      %2499 = vmatmul.mubr.f32.gmra.mrb[0].mxu0 %v2372
      %v2500 = vpop.f32.mrb[0].mxu0
      %v2501 = vadd.f32 0.0, %v2500
      %v2502 = vpop.f32.mrb[0].mxu0
      %2503 = vmatprep.mubr.f32.mxu0 0.0
      %2504 = vmatmul.mubr.f32.gmra.mrb[0].mxu0 %v2375
      %v2505 = vpop.f32.mrb[0].mxu0
      %v2506 = vadd.f32 0.0, %v2505
      %v2507 = vpop.f32.mrb[0].mxu0
      %2508 = vmatprep.mubr.f32.mxu0 0.0
      %2509 = vmatmul.mubr.f32.gmra.mrb[0].mxu0 %v2378
      %v2510 = vpop.f32.mrb[0].mxu0
      %v2511 = vadd.f32 0.0, %v2510
      %v2512 = vpop.f32.mrb[0].mxu0
      %2513 = vmatprep.mubr.f32.mxu0 0.0
      %2514 = vmatmul.mubr.f32.gmra.mrb[0].mxu0 %v2381
      %v2515 = vpop.f32.mrb[0].mxu0
      %v2516 = vadd.f32 0.0, %v2515
      %v2517 = vpop.f32.mrb[0].mxu0
      %2518 = vmatprep.mubr.f32.mxu0 0.0
      %2519 = vmatmul.mubr.f32.gmra.mrb[0].mxu0 %v2384
      %v2520 = vpop.f32.mrb[0].mxu0
      %v2521 = vadd.f32 0.0, %v2520
      %v2522 = vpop.f32.mrb[0].mxu0
      %2523 = vmatprep.mubr.f32.mxu0 0.0
      %2524 = vmatmul.mubr.f32.gmra.mrb[0].mxu0 %v2387
      %v2525 = vpop.f32.mrb[0].mxu0
      %v2526 = vadd.f32 0.0, %v2525
      %v2527 = vpop.f32.mrb[0].mxu0
      %2528 = vmatprep.mubr.f32.mxu0 0.0
      %2529 = vmatmul.mubr.f32.gmra.mrb[0].mxu0 %v2390
      %v2530 = vpop.f32.mrb[0].mxu0
      %v2531 = vadd.f32 0.0, %v2530
      %v2532 = vpop.f32.mrb[0].mxu0
      %2533 = vmatprep.mubr.f32.mxu0 0.0
      %2534 = vmatmul.mubr.f32.gmra.mrb[0].mxu0 %v2393
      %v2535 = vpop.f32.mrb[0].mxu0
      %v2536 = vadd.f32 0.0, %v2535
      %v2537 = vpop.f32.mrb[0].mxu0
      %2538 = vmatprep.mubr.f32.mxu0 0.0
      %2539 = vmatmul.mubr.f32.gmra.mrb[0].mxu0 %v2396
      %v2540 = vpop.f32.mrb[0].mxu0
      %v2541 = vadd.f32 0.0, %v2540
      %v2542 = vpop.f32.mrb[0].mxu0
      %2543 = vmatprep.mubr.f32.mxu0 0.0
      %2544 = vmatmul.mubr.f32.gmra.mrb[0].mxu0 %v2399
      %v2545 = vpop.f32.mrb[0].mxu0
      %v2546 = vadd.f32 0.0, %v2545
      %v2547 = vpop.f32.mrb[0].mxu0
      %2548 = vdwg.mxu0
      %v2549 = vadd.f32 %v2319, %v2471
      %v2550 = vadd.f32 %v2320, %v2476
      %v2551 = vadd.f32 %v2321, %v2481
      %v2552 = vadd.f32 %v2322, %v2486
      %v2553 = vadd.f32 %v2323, %v2491
      %v2554 = vadd.f32 %v2324, %v2496
      %v2555 = vadd.f32 %v2325, %v2501
      %v2556 = vadd.f32 %v2326, %v2506
      %v2557 = vadd.f32 %v2327, %v2511
      %v2558 = vadd.f32 %v2328, %v2516
      %v2559 = vadd.f32 %v2329, %v2521
      %v2560 = vadd.f32 %v2330, %v2526
      %v2561 = vadd.f32 %v2331, %v2531
      %v2562 = vadd.f32 %v2332, %v2536
      %v2563 = vadd.f32 %v2333, %v2541
      %v2564 = vadd.f32 %v2334, %v2546
      %v2565 = vld [vmem:[%s280] sm:$0x1]
      %v2567 = vlaneseq
      %v2568 = vshrl.u32 %v2567, 7
      %v2569 = vsub.s32 0, %v2568
      %v2570 = vrot.slane %v2565, %v2569
      %v2572 = vadd.f32 %v2549, %v2570
      %v2573 = vadd.f32 %v2550, %v2570
      %v2574 = vadd.f32 %v2551, %v2570
      %v2575 = vadd.f32 %v2552, %v2570
      %v2576 = vadd.f32 %v2553, %v2570
      %v2577 = vadd.f32 %v2554, %v2570
      %v2578 = vadd.f32 %v2555, %v2570
      %v2579 = vadd.f32 %v2556, %v2570
      %v2580 = vadd.f32 %v2557, %v2570
      %v2581 = vadd.f32 %v2558, %v2570
      %v2582 = vadd.f32 %v2559, %v2570
      %v2583 = vadd.f32 %v2560, %v2570
      %v2584 = vadd.f32 %v2561, %v2570
      %v2585 = vadd.f32 %v2562, %v2570
      %v2586 = vadd.f32 %v2563, %v2570
      %v2587 = vadd.f32 %v2564, %v2570
      %vm2588 = vcmask 64512
      %2589 = vst.msk [vmem:[%s292] sm:$0xff] %vm2588, %v2572
      %2590 = vst.msk [vmem:[%s292 + $0x8] sm:$0xff] %vm2588, %v2573
      %2591 = vst.msk [vmem:[%s292 + $0x10] sm:$0xff] %vm2588, %v2574
      %2592 = vst.msk [vmem:[%s292 + $0x18] sm:$0xff] %vm2588, %v2575
      %2593 = vst.msk [vmem:[%s292 + $0x20] sm:$0xff] %vm2588, %v2576
      %2594 = vst.msk [vmem:[%s292 + $0x28] sm:$0xff] %vm2588, %v2577
      %2595 = vst.msk [vmem:[%s292 + $0x30] sm:$0xff] %vm2588, %v2578
      %2596 = vst.msk [vmem:[%s292 + $0x38] sm:$0xff] %vm2588, %v2579
      %2597 = vst.msk [vmem:[%s292 + $0x40] sm:$0xff] %vm2588, %v2580
      %2598 = vst.msk [vmem:[%s292 + $0x48] sm:$0xff] %vm2588, %v2581
      %2599 = vst.msk [vmem:[%s292 + $0x50] sm:$0xff] %vm2588, %v2582
      %2600 = vst.msk [vmem:[%s292 + $0x58] sm:$0xff] %vm2588, %v2583
      %2601 = vst.msk [vmem:[%s292 + $0x60] sm:$0xff] %vm2588, %v2584
      %2602 = vst.msk [vmem:[%s292 + $0x68] sm:$0xff] %vm2588, %v2585
      %2603 = vst.msk [vmem:[%s292 + $0x70] sm:$0xff] %vm2588, %v2586
      %2604 = vst.msk [vmem:[%s292 + $0x78] sm:$0xff] %vm2588, %v2587
      %s2605 = smul.u32 16, %s22
      %p2606 = scmp.lt.s32.totalorder %s21, 1
      %s2607 = scalar_select %p2606, %s21, 1
      %p2608 = scmp.lt.s32.totalorder %s2605, 31
      %s2609 = scalar_select %p2608, %s2605, 31
      %p2610 = scmp.lt.s32.totalorder %s23, 0
      %s2611 = scalar_select %p2610, %s23, 0
      %s2612 = sadd.s32 %s2611, %s2609
      %s2613 = smul.addr %s2607, 32
      %s2614 = sadd.s32 %s2612, %s2613
      %s2615 = smul.addr %s2614, 8
      %s2616 = scalar_lea.vmem %s5, %s2615
      // Predicated region
      $region45: #{wide_block_forward.2} parent=39 // pred_check
        %p2617 = pneg %p177
      $region46: #{wide_block_forward.2} parent=39 // pred_check_branch
        %2619 = sbr.rel (%p2617) target = $region48
      $region47: #{wide_block_forward.2} parent=39 // pred_region
        %s2620 = smul.u32 16, %s22
      $region48: #{wide_block_forward.2} parent=39 // pred_fallthru
        _
    $region40: #{wide_block_forward.2} parent=5 // pred_fallthru
      _
    %p2621 = scmp.le.s32.totalorder 2, %s11
    // Predicated region
    $region49: #{wide_block_forward.2} parent=5 // pred_check
      %p2622 = pneg %p2621
    $region50: #{wide_block_forward.2} parent=5 // pred_check_branch
      %2624 = sbr.rel (%p2622) target = $region52
    $region51: #{wide_block_forward.2} parent=5 // pred_region
      %s2625 = ssub.s32 %s11, 2
      // Predicated region
      $region53: #{wide_block_forward.2} parent=51 // pred_check
        %p2626 = pneg %p183
      $region54: #{wide_block_forward.2} parent=51 // pred_check_branch
        %2628 = sbr.rel (%p2626) target = $region56
      $region55: #{wide_block_forward.2} parent=51 // pred_region
        %s2629 = smul.u32 16, %s25
        %p2630 = scmp.lt.s32.totalorder %s24, 1
        %s2631 = scalar_select %p2630, %s24, 1
        %p2632 = scmp.lt.s32.totalorder %s2629, 31
        %s2633 = scalar_select %p2632, %s2629, 31
        %p2634 = scmp.lt.s32.totalorder %s26, 0
        %s2635 = scalar_select %p2634, %s26, 0
        %s2636 = sadd.s32 %s2635, %s2633
        %s2637 = smul.addr %s2631, 32
        %s2638 = sadd.s32 %s2636, %s2637
        %s2639 = smul.addr %s2638, 8
        %s2640 = scalar_lea.vmem %s5, %s2639
      $region56: #{wide_block_forward.2} parent=51 // pred_fallthru
        _
    $region52: #{wide_block_forward.2} parent=5 // pred_fallthru
      _
  $region6: #{wide_block_forward.2} parent=0 // loop_footer
    %s15 = sadd.s32 1, %s11
  $region7: #{wide_block_forward.2} parent=0 // loop_footer_branch
    %10 = sbr.rel target = $region3
  $region8: #{wide_block_forward.2} parent=0 // loop_exit
    _

// kernel: wide_block_forward.3
$region0: #{wide_block_forward.3}
  #allocation0 [shape = 'u32[]', space=smem, size = 0x4, offset = 0x4, fixed_abs, tag = 'smem constant byte address 0x4 - core index']
  #allocation1 [shape = 'u32[144,128]{1,0:T(1,128)}', space=vmem, size = 0x12000, scoped, tag = 'internal scratch']
  #allocation2 [shape = 'f32[18,18,8]{2,1,0:T(8,128)}', space=vmem, size = 0x36000, scoped, tag = 'scratch operand']
  %s0 = inlined_call_operand.vmem [shape: f32[2,16,16,8], index: 0, kind: input, shape index: {}]
  %s1 = inlined_call_operand.vmem [shape: f32[1,8], index: 1, kind: input, shape index: {}]
  %s2 = inlined_call_operand.vmem [shape: f32[1,8], index: 2, kind: input, shape index: {}]
  %s3 = inlined_call_operand.vmem [shape: f32[9,8,8], index: 3, kind: input, shape index: {}]
  %s4 = inlined_call_operand.vmem [shape: f32[1,8], index: 4, kind: input, shape index: {}]
  %s5 = inlined_call_operand.vmem [shape: f32[2,16,16,4], index: 5, kind: input, shape index: {}]
  %s6 = inlined_call_operand.vmem [shape: f32[4,8], index: 6, kind: input, shape index: {}]
  %s7 = inlined_call_operand.vmem [shape: f32[1,8], index: 7, kind: input, shape index: {}]
  %s8 = inlined_call_operand.vmem [shape: f32[2,256,8], index: 8, kind: output, shape index: {}]
  %s9 = sld [smem:[#allocation0]]
  $region69: #{wide_block_forward.3} parent=0
    _
  %s11 = ssub.s32 1, %s9
  %s12 = scalar_select 0, %s11, %s9
  loop: start=0, step=1, limit=6
  $region2: #{wide_block_forward.3} parent=0 // loop_pre_header
    _
  $region3: #{wide_block_forward.3} parent=0 // loop_header
    %s14 = sphi 0, %s18
    %p15 = scmp.ge.s32.totalorder %s14, 6
    %s21 = sphi 0, %s40
    %s22 = sphi 0, %s36
    %s23 = sphi 0, %s32
    %s24 = sphi 0, %s21
    %s25 = sphi 0, %s22
    %s26 = sphi 0, %s23
    %s27 = sphi 0, %s24
    %s28 = sphi 0, %s25
    %s29 = sphi 0, %s26
    %s43 = sphi 0, %s45
    %s46 = sphi 0, %s43
    %s47 = sphi 0, %s46
    %s63 = sphi 0, %s47
    %s67 = sphi 0, %s67
    %s69 = sphi 0, %s67
    %s70 = sphi 0, %s69
    %s84 = sphi 0, %s70
    %s88 = sphi 0, %s88
    %s90 = sphi 0, %s88
    %s91 = sphi 0, %s90
    %s105 = sphi 0, %s91
    %s111 = sphi 0, %s113
    %s114 = sphi 0, %s111
    %s115 = sphi 0, %s114
    %s131 = sphi 0, %s115
    %s137 = sphi 0, %s139
    %s140 = sphi 0, %s137
    %s141 = sphi 0, %s140
    %s157 = sphi 0, %s141
    %s163 = sphi 0, %s165
    %s166 = sphi 0, %s163
    %s167 = sphi 0, %s166
    %s183 = sphi 0, %s167
    %s189 = sphi 0, %s191
    %s192 = sphi 0, %s189
    %s193 = sphi 0, %s192
    %s209 = sphi 0, %s193
    %s215 = sphi 0, %s217
    %s218 = sphi 0, %s215
    %s219 = sphi 0, %s218
    %s235 = sphi 0, %s219
    %s245 = sphi 0, %s247
    %s248 = sphi 0, %s245
    %s249 = sphi 0, %s248
    %s265 = sphi 0, %s249
  $region4: #{wide_block_forward.3} parent=0 // loop_header_branch
    %17 = sbr.rel (%p15) target = $region8
  $region5: #{wide_block_forward.3} parent=0 // loop_body
    %s19 = ssub.s32 %s14, 1
    %s20 = ssub.s32 %s14, 2
    %s30 = sadd.s32 1, %s23
    %p31 = scmp.ge.s32.totalorder %s30, 1
    %s32 = scalar_select %p31, 0, %s30
    %s33 = sadd.s32 1, %s22
    %s34 = scalar_select %p31, %s33, %s22
    %p35 = scmp.ge.s32.totalorder %s34, 2
    %s36 = scalar_select %p35, 0, %s34
    %s37 = sadd.s32 1, %s21
    %s38 = scalar_select %p35, %s37, %s21
    %p39 = scmp.ge.s32.totalorder %s38, 2
    %s40 = scalar_select %p39, 0, %s38
    %s41 = ssub.s32 %s21, %s40
    %p42 = scmp.eq.s32.totalorder %s41, 0
    %s44 = sadd.s32 %s43, 1
    %s45 = scalar_select %p42, %s43, %s44
    %p48 = pneg %p42
    %p49 = scmp.eq.s32.totalorder %s14, 3
    %p50 = por %p48, %p49
    %p51 = scmp.ne.s32.totalorder %s43, %s46
    %p52 = scmp.eq.s32.totalorder %s14, 0
    %p53 = por %p51, %p52
    %p54 = scmp.ne.s32.totalorder %s43, %s46
    %p55 = scmp.eq.s32.totalorder %s19, 3
    %p56 = por %p54, %p55
    %p57 = scmp.ne.s32.totalorder %s46, %s47
    %p58 = scmp.eq.s32.totalorder %s19, 0
    %p59 = por %p57, %p58
    %p60 = scmp.ne.s32.totalorder %s46, %s47
    %p61 = scmp.eq.s32.totalorder %s20, 3
    %p62 = por %p60, %p61
    %p64 = scmp.ne.s32.totalorder %s47, %s63
    %p65 = scmp.eq.s32.totalorder %s20, 0
    %p66 = por %p64, %p65
    %s68 = sadd.s32 %s67, 1
    %p71 = scmp.eq.s32.totalorder %s14, 3
    %p72 = scmp.ne.s32.totalorder %s67, %s69
    %p73 = scmp.eq.s32.totalorder %s14, 0
    %p74 = por %p72, %p73
    %p75 = scmp.ne.s32.totalorder %s67, %s69
    %p76 = scmp.eq.s32.totalorder %s19, 3
    %p77 = por %p75, %p76
    %p78 = scmp.ne.s32.totalorder %s69, %s70
    %p79 = scmp.eq.s32.totalorder %s19, 0
    %p80 = por %p78, %p79
    %p81 = scmp.ne.s32.totalorder %s69, %s70
    %p82 = scmp.eq.s32.totalorder %s20, 3
    %p83 = por %p81, %p82
    %p85 = scmp.ne.s32.totalorder %s70, %s84
    %p86 = scmp.eq.s32.totalorder %s20, 0
    %p87 = por %p85, %p86
    %s89 = sadd.s32 %s88, 1
    %p92 = scmp.eq.s32.totalorder %s14, 3
    %p93 = scmp.ne.s32.totalorder %s88, %s90
    %p94 = scmp.eq.s32.totalorder %s14, 0
    %p95 = por %p93, %p94
    %p96 = scmp.ne.s32.totalorder %s88, %s90
    %p97 = scmp.eq.s32.totalorder %s19, 3
    %p98 = por %p96, %p97
    %p99 = scmp.ne.s32.totalorder %s90, %s91
    %p100 = scmp.eq.s32.totalorder %s19, 0
    %p101 = por %p99, %p100
    %p102 = scmp.ne.s32.totalorder %s90, %s91
    %p103 = scmp.eq.s32.totalorder %s20, 3
    %p104 = por %p102, %p103
    %p106 = scmp.ne.s32.totalorder %s91, %s105
    %p107 = scmp.eq.s32.totalorder %s20, 0
    %p108 = por %p106, %p107
    %s109 = ssub.s32 %s23, %s32
    %p110 = scmp.eq.s32.totalorder %s109, 0
    %s112 = sadd.s32 %s111, 1
    %s113 = scalar_select %p110, %s111, %s112
    %p116 = pneg %p110
    %p117 = scmp.eq.s32.totalorder %s14, 3
    %p118 = por %p116, %p117
    %p119 = scmp.ne.s32.totalorder %s111, %s114
    %p120 = scmp.eq.s32.totalorder %s14, 0
    %p121 = por %p119, %p120
    %p122 = scmp.ne.s32.totalorder %s111, %s114
    %p123 = scmp.eq.s32.totalorder %s19, 3
    %p124 = por %p122, %p123
    %p125 = scmp.ne.s32.totalorder %s114, %s115
    %p126 = scmp.eq.s32.totalorder %s19, 0
    %p127 = por %p125, %p126
    %p128 = scmp.ne.s32.totalorder %s114, %s115
    %p129 = scmp.eq.s32.totalorder %s20, 3
    %p130 = por %p128, %p129
    %p132 = scmp.ne.s32.totalorder %s115, %s131
    %p133 = scmp.eq.s32.totalorder %s20, 0
    %p134 = por %p132, %p133
    %s135 = ssub.s32 %s23, %s32
    %p136 = scmp.eq.s32.totalorder %s135, 0
    %s138 = sadd.s32 %s137, 1
    %s139 = scalar_select %p136, %s137, %s138
    %p142 = pneg %p136
    %p143 = scmp.eq.s32.totalorder %s14, 3
    %p144 = por %p142, %p143
    %p145 = scmp.ne.s32.totalorder %s137, %s140
    %p146 = scmp.eq.s32.totalorder %s14, 0
    %p147 = por %p145, %p146
    %p148 = scmp.ne.s32.totalorder %s137, %s140
    %p149 = scmp.eq.s32.totalorder %s19, 3
    %p150 = por %p148, %p149
    %p151 = scmp.ne.s32.totalorder %s140, %s141
    %p152 = scmp.eq.s32.totalorder %s19, 0
    %p153 = por %p151, %p152
    %p154 = scmp.ne.s32.totalorder %s140, %s141
    %p155 = scmp.eq.s32.totalorder %s20, 3
    %p156 = por %p154, %p155
    %p158 = scmp.ne.s32.totalorder %s141, %s157
    %p159 = scmp.eq.s32.totalorder %s20, 0
    %p160 = por %p158, %p159
    %s161 = ssub.s32 %s21, %s40
    %p162 = scmp.eq.s32.totalorder %s161, 0
    %s164 = sadd.s32 %s163, 1
    %s165 = scalar_select %p162, %s163, %s164
    %p168 = pneg %p162
    %p169 = scmp.eq.s32.totalorder %s14, 3
    %p170 = por %p168, %p169
    %p171 = scmp.ne.s32.totalorder %s163, %s166
    %p172 = scmp.eq.s32.totalorder %s14, 0
    %p173 = por %p171, %p172
    %p174 = scmp.ne.s32.totalorder %s163, %s166
    %p175 = scmp.eq.s32.totalorder %s19, 3
    %p176 = por %p174, %p175
    %p177 = scmp.ne.s32.totalorder %s166, %s167
    %p178 = scmp.eq.s32.totalorder %s19, 0
    %p179 = por %p177, %p178
    %p180 = scmp.ne.s32.totalorder %s166, %s167
    %p181 = scmp.eq.s32.totalorder %s20, 3
    %p182 = por %p180, %p181
    %p184 = scmp.ne.s32.totalorder %s167, %s183
    %p185 = scmp.eq.s32.totalorder %s20, 0
    %p186 = por %p184, %p185
    %s187 = ssub.s32 %s23, %s32
    %p188 = scmp.eq.s32.totalorder %s187, 0
    %s190 = sadd.s32 %s189, 1
    %s191 = scalar_select %p188, %s189, %s190
    %p194 = pneg %p188
    %p195 = scmp.eq.s32.totalorder %s14, 3
    %p196 = por %p194, %p195
    %p197 = scmp.ne.s32.totalorder %s189, %s192
    %p198 = scmp.eq.s32.totalorder %s14, 0
    %p199 = por %p197, %p198
    %p200 = scmp.ne.s32.totalorder %s189, %s192
    %p201 = scmp.eq.s32.totalorder %s19, 3
    %p202 = por %p200, %p201
    %p203 = scmp.ne.s32.totalorder %s192, %s193
    %p204 = scmp.eq.s32.totalorder %s19, 0
    %p205 = por %p203, %p204
    %p206 = scmp.ne.s32.totalorder %s192, %s193
    %p207 = scmp.eq.s32.totalorder %s20, 3
    %p208 = por %p206, %p207
    %p210 = scmp.ne.s32.totalorder %s193, %s209
    %p211 = scmp.eq.s32.totalorder %s20, 0
    %p212 = por %p210, %p211
    %s213 = ssub.s32 %s23, %s32
    %p214 = scmp.eq.s32.totalorder %s213, 0
    %s216 = sadd.s32 %s215, 1
    %s217 = scalar_select %p214, %s215, %s216
    %p220 = pneg %p214
    %p221 = scmp.eq.s32.totalorder %s14, 3
    %p222 = por %p220, %p221
    %p223 = scmp.ne.s32.totalorder %s215, %s218
    %p224 = scmp.eq.s32.totalorder %s14, 0
    %p225 = por %p223, %p224
    %p226 = scmp.ne.s32.totalorder %s215, %s218
    %p227 = scmp.eq.s32.totalorder %s19, 3
    %p228 = por %p226, %p227
    %p229 = scmp.ne.s32.totalorder %s218, %s219
    %p230 = scmp.eq.s32.totalorder %s19, 0
    %p231 = por %p229, %p230
    %p232 = scmp.ne.s32.totalorder %s218, %s219
    %p233 = scmp.eq.s32.totalorder %s20, 3
    %p234 = por %p232, %p233
    %p236 = scmp.ne.s32.totalorder %s219, %s235
    %p237 = scmp.eq.s32.totalorder %s20, 0
    %p238 = por %p236, %p237
    %s239 = ssub.s32 %s21, %s40
    %s240 = ssub.s32 %s22, %s36
    %s241 = sor.u32 %s239, %s240
    %s242 = ssub.s32 %s23, %s32
    %s243 = sor.u32 %s241, %s242
    %p244 = scmp.eq.s32.totalorder %s243, 0
    %s246 = sadd.s32 %s245, 1
    %s247 = scalar_select %p244, %s245, %s246
    %p250 = pneg %p244
    %p251 = scmp.eq.s32.totalorder %s14, 3
    %p252 = por %p250, %p251
    %p253 = scmp.ne.s32.totalorder %s245, %s248
    %p254 = scmp.eq.s32.totalorder %s14, 0
    %p255 = por %p253, %p254
    %p256 = scmp.ne.s32.totalorder %s245, %s248
    %p257 = scmp.eq.s32.totalorder %s19, 3
    %p258 = por %p256, %p257
    %p259 = scmp.ne.s32.totalorder %s248, %s249
    %p260 = scmp.eq.s32.totalorder %s19, 0
    %p261 = por %p259, %p260
    %p262 = scmp.ne.s32.totalorder %s248, %s249
    %p263 = scmp.eq.s32.totalorder %s20, 3
    %p264 = por %p262, %p263
    %p266 = scmp.ne.s32.totalorder %s249, %s265
    %p267 = scmp.eq.s32.totalorder %s20, 0
    %p268 = por %p266, %p267
    %p269 = scmp.le.s32.totalorder 1, %s14
    %p270 = scmp.lt.s32.totalorder %s14, 5
    %p271 = pnand %p269, %p270
    %p272 = pneg %p271
    // Predicated region
    $region9: #{wide_block_forward.3} parent=5 // pred_check
      _
    $region10: #{wide_block_forward.3} parent=5 // pred_check_branch
      %274 = sbr.rel (%p271) target = $region12
    $region11: #{wide_block_forward.3} parent=5 // pred_region
      %s275 = ssub.s32 %s14, 1
      // Predicated region
      $region13: #{wide_block_forward.3} parent=11 // pred_check
        %p276 = pneg %p80
      $region14: #{wide_block_forward.3} parent=11 // pred_check_branch
        %278 = sbr.rel (%p276) target = $region16
      $region15: #{wide_block_forward.3} parent=11 // pred_region
        _
      $region16: #{wide_block_forward.3} parent=11 // pred_fallthru
        _
      // Predicated region
      $region17: #{wide_block_forward.3} parent=11 // pred_check
        %p279 = pneg %p101
      $region18: #{wide_block_forward.3} parent=11 // pred_check_branch
        %281 = sbr.rel (%p279) target = $region20
      $region19: #{wide_block_forward.3} parent=11 // pred_region
        _
      $region20: #{wide_block_forward.3} parent=11 // pred_fallthru
        _
      // Predicated region
      $region21: #{wide_block_forward.3} parent=11 // pred_check
        %p282 = pneg %p127
      $region22: #{wide_block_forward.3} parent=11 // pred_check_branch
        %284 = sbr.rel (%p282) target = $region24
      $region23: #{wide_block_forward.3} parent=11 // pred_region
        %p285 = scmp.lt.s32.totalorder %s26, 0
        %s286 = scalar_select %p285, %s26, 0
        %s287 = smul.addr %s286, 8
        %s288 = scalar_lea.vmem %s3, %s287
      $region24: #{wide_block_forward.3} parent=11 // pred_fallthru
        _
      // Predicated region
      $region25: #{wide_block_forward.3} parent=11 // pred_check
        %p289 = pneg %p153
      $region26: #{wide_block_forward.3} parent=11 // pred_check_branch
        %291 = sbr.rel (%p289) target = $region28
      $region27: #{wide_block_forward.3} parent=11 // pred_region
        %p292 = scmp.lt.s32.totalorder %s26, 0
        %s293 = scalar_select %p292, %s26, 0
        %s294 = scalar_lea.vmem %s4, %s293
      $region28: #{wide_block_forward.3} parent=11 // pred_fallthru
        _
      // Predicated region
      $region29: #{wide_block_forward.3} parent=11 // pred_check
        %p295 = pneg %p205
      $region30: #{wide_block_forward.3} parent=11 // pred_check_branch
        %297 = sbr.rel (%p295) target = $region32
      $region31: #{wide_block_forward.3} parent=11 // pred_region
        %p298 = scmp.lt.s32.totalorder %s26, 0
        %s299 = scalar_select %p298, %s26, 0
        %s300 = smul.addr %s299, 4
        %s301 = scalar_lea.vmem %s6, %s300
      $region32: #{wide_block_forward.3} parent=11 // pred_fallthru
        _
      // Predicated region
      $region33: #{wide_block_forward.3} parent=11 // pred_check
        %p302 = pneg %p231
      $region34: #{wide_block_forward.3} parent=11 // pred_check_branch
        %304 = sbr.rel (%p302) target = $region36
      $region35: #{wide_block_forward.3} parent=11 // pred_region
        %p305 = scmp.lt.s32.totalorder %s26, 0
        %s306 = scalar_select %p305, %s26, 0
        %s307 = scalar_lea.vmem %s7, %s306
      $region36: #{wide_block_forward.3} parent=11 // pred_fallthru
        _
    $region12: #{wide_block_forward.3} parent=5 // pred_fallthru
      _
    %p308 = scmp.lt.s32.totalorder %s14, 4
    // Predicated region
    $region37: #{wide_block_forward.3} parent=5 // pred_check
      %p309 = pneg %p308
    $region38: #{wide_block_forward.3} parent=5 // pred_check_branch
      %311 = sbr.rel (%p309) target = $region40
    $region39: #{wide_block_forward.3} parent=5 // pred_region
      // Predicated region
      $region41: #{wide_block_forward.3} parent=39 // pred_check
        %p312 = pneg %p53
      $region42: #{wide_block_forward.3} parent=39 // pred_check_branch
        %314 = sbr.rel (%p312) target = $region44
      $region43: #{wide_block_forward.3} parent=39 // pred_region
        %p315 = scmp.lt.s32.totalorder %s21, 1
        %s316 = scalar_select %p315, %s21, 1
        %s317 = smul.addr %s316, 32
        %s318 = smul.addr %s317, 8
        %s319 = scalar_lea.vmem %s0, %s318
      $region44: #{wide_block_forward.3} parent=39 // pred_fallthru
        _
      // Predicated region
      $region45: #{wide_block_forward.3} parent=39 // pred_check
        %p320 = pneg %p173
      $region46: #{wide_block_forward.3} parent=39 // pred_check_branch
        %322 = sbr.rel (%p320) target = $region48
      $region47: #{wide_block_forward.3} parent=39 // pred_region
        %p323 = scmp.lt.s32.totalorder %s21, 1
        %s324 = scalar_select %p323, %s21, 1
        %s325 = smul.addr %s324, 32
        %s326 = smul.addr %s325, 8
        %s327 = scalar_lea.vmem %s5, %s326
      $region48: #{wide_block_forward.3} parent=39 // pred_fallthru
        _
    $region40: #{wide_block_forward.3} parent=5 // pred_fallthru
      _
    %p328 = scmp.le.s32.totalorder 1, %s14
    %p329 = scmp.lt.s32.totalorder %s14, 5
    %p330 = pnand %p328, %p329
    %p331 = pneg %p330
    // Predicated region
    $region49: #{wide_block_forward.3} parent=5 // pred_check
      _
    $region50: #{wide_block_forward.3} parent=5 // pred_check_branch
      %333 = sbr.rel (%p330) target = $region52
    $region51: #{wide_block_forward.3} parent=5 // pred_region
      %s334 = ssub.s32 %s14, 1
      %p335 = scmp.lt.s32.totalorder %s24, 1
      %s336 = scalar_select %p335, %s24, 1
      %s337 = smul.addr %s336, 32
      %s338 = smul.addr %s337, 8
      %s339 = scalar_lea.vmem %s0, %s338
      %p340 = pneg %p59
      %p341 = pneg %p56
      %p342 = pneg %p80
      %p343 = pneg %p77
      %p344 = pneg %p101
      %p345 = pneg %p98
      %p346 = scmp.lt.s32.totalorder %s26, 0
      %s347 = scalar_select %p346, %s26, 0
      %s348 = smul.addr %s347, 8
      %s349 = scalar_lea.vmem %s3, %s348
      %p350 = pneg %p127
      %p351 = pneg %p124
      %p352 = scmp.lt.s32.totalorder %s26, 0
      %s353 = scalar_select %p352, %s26, 0
      %s354 = scalar_lea.vmem %s4, %s353
      %p355 = pneg %p153
      %p356 = pneg %p150
      %p357 = scmp.lt.s32.totalorder %s24, 1
      %s358 = scalar_select %p357, %s24, 1
      %s359 = smul.addr %s358, 32
      %s360 = smul.addr %s359, 8
      %s361 = scalar_lea.vmem %s5, %s360
      %p362 = pneg %p179
      %p363 = pneg %p176
      %p364 = scmp.lt.s32.totalorder %s26, 0
      %s365 = scalar_select %p364, %s26, 0
      %s366 = smul.addr %s365, 4
      %s367 = scalar_lea.vmem %s6, %s366
      %p368 = pneg %p205
      %p369 = pneg %p202
      %p370 = scmp.lt.s32.totalorder %s26, 0
      %s371 = scalar_select %p370, %s26, 0
      %s372 = scalar_lea.vmem %s7, %s371
      %p373 = pneg %p231
      %p374 = pneg %p228
      %p375 = pneg %p261
      %p376 = pneg %p258
      %s377 = smul.u32 16, %s25
      %p378 = scmp.lt.s32.totalorder %s24, 1
      %s379 = scalar_select %p378, %s24, 1
      %p380 = scmp.lt.s32.totalorder %s377, 31
      %s381 = scalar_select %p380, %s377, 31
      %p382 = scmp.lt.s32.totalorder %s26, 0
      %s383 = scalar_select %p382, %s26, 0
      %s384 = sadd.s32 %s383, %s381
      %s385 = smul.addr %s379, 32
      %s386 = sadd.s32 %s384, %s385
      %s387 = smul.addr %s386, 8
      %s388 = scalar_lea.vmem %s8, %s387
      %p389 = scmp.lt.s32.totalorder %s24, 1
      %s390 = scalar_select %p389, %s24, 1
      %s391 = smul.addr %s390, 32
      %s392 = smul.addr %s391, 8
      %s393 = scalar_lea.vmem %s0, %s392
      %p394 = scmp.lt.s32.totalorder %s26, 0
      %s395 = scalar_select %p394, %s26, 0
      %s396 = smul.addr %s395, 8
      %s397 = scalar_lea.vmem %s3, %s396
      %p398 = scmp.lt.s32.totalorder %s26, 0
      %s399 = scalar_select %p398, %s26, 0
      %s400 = scalar_lea.vmem %s4, %s399
      %p401 = scmp.lt.s32.totalorder %s24, 1
      %s402 = scalar_select %p401, %s24, 1
      %s403 = smul.addr %s402, 32
      %s404 = smul.addr %s403, 8
      %s405 = scalar_lea.vmem %s5, %s404
      %p406 = scmp.lt.s32.totalorder %s26, 0
      %s407 = scalar_select %p406, %s26, 0
      %s408 = smul.addr %s407, 4
      %s409 = scalar_lea.vmem %s6, %s408
      %p410 = scmp.lt.s32.totalorder %s26, 0
      %s411 = scalar_select %p410, %s26, 0
      %s412 = scalar_lea.vmem %s7, %s411
      %s413 = smul.u32 16, %s25
      %p414 = scmp.lt.s32.totalorder %s24, 1
      %s415 = scalar_select %p414, %s24, 1
      %p416 = scmp.lt.s32.totalorder %s413, 31
      %s417 = scalar_select %p416, %s413, 31
      %p418 = scmp.lt.s32.totalorder %s26, 0
      %s419 = scalar_select %p418, %s26, 0
      %s420 = sadd.s32 %s419, %s417
      %s421 = smul.addr %s415, 32
      %s422 = sadd.s32 %s420, %s421
      %s423 = smul.addr %s422, 8
      %s424 = scalar_lea.vmem %s8, %s423
      %s425 = smul.u32 16, %s25
      %p426 = scmp.eq.s32.totalorder %s25, 0
      %p427 = scmp.eq.s32.totalorder %s26, 0
      %p428 = pnand %p426, %p427
      %p429 = pneg %p428
      // Predicated region
      $region53: #{wide_block_forward.3} parent=51 // pred_check
        _
      $region54: #{wide_block_forward.3} parent=51 // pred_check_branch
        %431 = sbr.rel (%p428) target = $region56
      $region55: #{wide_block_forward.3} parent=51 // pred_region
        %v432 = vld [vmem:[%s393] sm:$0xff]
        %v433 = vld [vmem:[%s393 + $0x8] sm:$0xff]
        %v434 = vld [vmem:[%s393 + $0x10] sm:$0xff]
        %v435 = vld [vmem:[%s393 + $0x18] sm:$0xff]
        %v436 = vld [vmem:[%s393 + $0x20] sm:$0xff]
        %v437 = vld [vmem:[%s393 + $0x28] sm:$0xff]
        %v438 = vld [vmem:[%s393 + $0x30] sm:$0xff]
        %v439 = vld [vmem:[%s393 + $0x38] sm:$0xff]
        %v440 = vld [vmem:[%s393 + $0x40] sm:$0xff]
        %v441 = vld [vmem:[%s393 + $0x48] sm:$0xff]
        %v442 = vld [vmem:[%s393 + $0x50] sm:$0xff]
        %v443 = vld [vmem:[%s393 + $0x58] sm:$0xff]
        %v444 = vld [vmem:[%s393 + $0x60] sm:$0xff]
        %v445 = vld [vmem:[%s393 + $0x68] sm:$0xff]
        %v446 = vld [vmem:[%s393 + $0x70] sm:$0xff]
        %v447 = vld [vmem:[%s393 + $0x78] sm:$0xff]
        %v448 = vld [vmem:[%s393 + $0x80] sm:$0xff]
        %v449 = vld [vmem:[%s393 + $0x88] sm:$0xff]
        %v450 = vld [vmem:[%s393 + $0x90] sm:$0xff]
        %v451 = vld [vmem:[%s393 + $0x98] sm:$0xff]
        %v452 = vld [vmem:[%s393 + $0xa0] sm:$0xff]
        %v453 = vld [vmem:[%s393 + $0xa8] sm:$0xff]
        %v454 = vld [vmem:[%s393 + $0xb0] sm:$0xff]
        %v455 = vld [vmem:[%s393 + $0xb8] sm:$0xff]
        %v456 = vld [vmem:[%s393 + $0xc0] sm:$0xff]
        %v457 = vld [vmem:[%s393 + $0xc8] sm:$0xff]
        %v458 = vld [vmem:[%s393 + $0xd0] sm:$0xff]
        %v459 = vld [vmem:[%s393 + $0xd8] sm:$0xff]
        %v460 = vld [vmem:[%s393 + $0xe0] sm:$0xff]
        %v461 = vld [vmem:[%s393 + $0xe8] sm:$0xff]
        %v462 = vld [vmem:[%s393 + $0xf0] sm:$0xff]
        %v463 = vld [vmem:[%s393 + $0xf8] sm:$0xff]
        %v464 = vld [vmem:[%s1] sm:$0x1]
        %v465 = vld [vmem:[%s2] sm:$0x1]
        %v467 = vlaneseq
        %v468 = vshrl.u32 %v467, 7
        %v469 = vsub.s32 0, %v468
        %v470 = vrot.slane %v464, %v469
        %v472 = vmul.f32 %v432, %v470
        %v473 = vmul.f32 %v433, %v470
        %v474 = vmul.f32 %v434, %v470
        %v475 = vmul.f32 %v435, %v470
        %v476 = vmul.f32 %v436, %v470
        %v477 = vmul.f32 %v437, %v470
        %v478 = vmul.f32 %v438, %v470
        %v479 = vmul.f32 %v439, %v470
        %v480 = vmul.f32 %v440, %v470
        %v481 = vmul.f32 %v441, %v470
        %v482 = vmul.f32 %v442, %v470
        %v483 = vmul.f32 %v443, %v470
        %v484 = vmul.f32 %v444, %v470
        %v485 = vmul.f32 %v445, %v470
        %v486 = vmul.f32 %v446, %v470
        %v487 = vmul.f32 %v447, %v470
        %v488 = vmul.f32 %v448, %v470
        %v489 = vmul.f32 %v449, %v470
        %v490 = vmul.f32 %v450, %v470
        %v491 = vmul.f32 %v451, %v470
        %v492 = vmul.f32 %v452, %v470
        %v493 = vmul.f32 %v453, %v470
        %v494 = vmul.f32 %v454, %v470
        %v495 = vmul.f32 %v455, %v470
        %v496 = vmul.f32 %v456, %v470
        %v497 = vmul.f32 %v457, %v470
        %v498 = vmul.f32 %v458, %v470
        %v499 = vmul.f32 %v459, %v470
        %v500 = vmul.f32 %v460, %v470
        %v501 = vmul.f32 %v461, %v470
        %v502 = vmul.f32 %v462, %v470
        %v503 = vmul.f32 %v463, %v470
        %v505 = vlaneseq
        %v506 = vshrl.u32 %v505, 7
        %v507 = vsub.s32 0, %v506
        %v508 = vrot.slane %v465, %v507
        %v510 = vadd.f32 %v472, %v508
        %v511 = vadd.f32 %v473, %v508
        %v512 = vadd.f32 %v474, %v508
        %v513 = vadd.f32 %v475, %v508
        %v514 = vadd.f32 %v476, %v508
        %v515 = vadd.f32 %v477, %v508
        %v516 = vadd.f32 %v478, %v508
        %v517 = vadd.f32 %v479, %v508
        %v518 = vadd.f32 %v480, %v508
        %v519 = vadd.f32 %v481, %v508
        %v520 = vadd.f32 %v482, %v508
        %v521 = vadd.f32 %v483, %v508
        %v522 = vadd.f32 %v484, %v508
        %v523 = vadd.f32 %v485, %v508
        %v524 = vadd.f32 %v486, %v508
        %v525 = vadd.f32 %v487, %v508
        %v526 = vadd.f32 %v488, %v508
        %v527 = vadd.f32 %v489, %v508
        %v528 = vadd.f32 %v490, %v508
        %v529 = vadd.f32 %v491, %v508
        %v530 = vadd.f32 %v492, %v508
        %v531 = vadd.f32 %v493, %v508
        %v532 = vadd.f32 %v494, %v508
        %v533 = vadd.f32 %v495, %v508
        %v534 = vadd.f32 %v496, %v508
        %v535 = vadd.f32 %v497, %v508
        %v536 = vadd.f32 %v498, %v508
        %v537 = vadd.f32 %v499, %v508
        %v538 = vadd.f32 %v500, %v508
        %v539 = vadd.f32 %v501, %v508
        %v540 = vadd.f32 %v502, %v508
        %v541 = vadd.f32 %v503, %v508
        %v542 = vmax.f32 %v510, 0.0
        %v543 = vmax.f32 %v511, 0.0
        %v544 = vmax.f32 %v512, 0.0
        %v545 = vmax.f32 %v513, 0.0
        %v546 = vmax.f32 %v514, 0.0
        %v547 = vmax.f32 %v515, 0.0
        %v548 = vmax.f32 %v516, 0.0
        %v549 = vmax.f32 %v517, 0.0
        %v550 = vmax.f32 %v518, 0.0
        %v551 = vmax.f32 %v519, 0.0
        %v552 = vmax.f32 %v520, 0.0
        %v553 = vmax.f32 %v521, 0.0
        %v554 = vmax.f32 %v522, 0.0
        %v555 = vmax.f32 %v523, 0.0
        %v556 = vmax.f32 %v524, 0.0
        %v557 = vmax.f32 %v525, 0.0
        %v558 = vmax.f32 %v526, 0.0
        %v559 = vmax.f32 %v527, 0.0
        %v560 = vmax.f32 %v528, 0.0
        %v561 = vmax.f32 %v529, 0.0
        %v562 = vmax.f32 %v530, 0.0
        %v563 = vmax.f32 %v531, 0.0
        %v564 = vmax.f32 %v532, 0.0
        %v565 = vmax.f32 %v533, 0.0
        %v566 = vmax.f32 %v534, 0.0
        %v567 = vmax.f32 %v535, 0.0
        %v568 = vmax.f32 %v536, 0.0
        %v569 = vmax.f32 %v537, 0.0
        %v570 = vmax.f32 %v538, 0.0
        %v571 = vmax.f32 %v539, 0.0
        %v572 = vmax.f32 %v540, 0.0
        %v573 = vmax.f32 %v541, 0.0
        %vm574 = vcmask 64512
        %575 = vst.msk [vmem:[#allocation2] sm:$0xff] %vm574, 0.0
        %576 = vst.msk [vmem:[#allocation2 + $0x8] sm:$0xff] %vm574, 0.0
        %vm577 = vcmask 58368
        %578 = vst.msk [vmem:[#allocation2 + $0x10] sm:$0x3] %vm577, 0.0
        %s579 = scalar_lea.vmem [#allocation2], 408
        %580 = vst.msk [vmem:[%s579] sm:$0xff] %vm574, 0.0
        %581 = vst.msk [vmem:[%s579 + $0x8] sm:$0xff] %vm574, 0.0
        %582 = vst.msk [vmem:[%s579 + $0x10] sm:$0x3] %vm577, 0.0
        %s583 = scalar_lea.vmem [#allocation2], 24
        %vm584 = vcmask 57344
        %585 = vst.msk [vmem:[%s583] sm:$0x1] %vm584, 0.0
        %586 = vst.msk [vmem:[%s583 + $0x18] sm:$0x1] %vm584, 0.0
        %587 = vst.msk [vmem:[%s583 + $0x30] sm:$0x1] %vm584, 0.0
        %588 = vst.msk [vmem:[%s583 + $0x48] sm:$0x1] %vm584, 0.0
        %589 = vst.msk [vmem:[%s583 + $0x60] sm:$0x1] %vm584, 0.0
        %590 = vst.msk [vmem:[%s583 + $0x78] sm:$0x1] %vm584, 0.0
        %591 = vst.msk [vmem:[%s583 + $0x90] sm:$0x1] %vm584, 0.0
        %592 = vst.msk [vmem:[%s583 + $0xa8] sm:$0x1] %vm584, 0.0
        %593 = vst.msk [vmem:[%s583 + $0xc0] sm:$0x1] %vm584, 0.0
        %594 = vst.msk [vmem:[%s583 + $0xd8] sm:$0x1] %vm584, 0.0
        %595 = vst.msk [vmem:[%s583 + $0xf0] sm:$0x1] %vm584, 0.0
        %596 = vst.msk [vmem:[%s583 + $0x108] sm:$0x1] %vm584, 0.0
        %597 = vst.msk [vmem:[%s583 + $0x120] sm:$0x1] %vm584, 0.0
        %598 = vst.msk [vmem:[%s583 + $0x138] sm:$0x1] %vm584, 0.0
        %599 = vst.msk [vmem:[%s583 + $0x150] sm:$0x1] %vm584, 0.0
        %600 = vst.msk [vmem:[%s583 + $0x168] sm:$0x1] %vm584, 0.0
        %601 = vst.msk [vmem:[%s583 + $0x11] sm:$0x1] %vm584, 0.0
        %602 = vst.msk [vmem:[%s583 + $0x29] sm:$0x1] %vm584, 0.0
        %603 = vst.msk [vmem:[%s583 + $0x41] sm:$0x1] %vm584, 0.0
        %604 = vst.msk [vmem:[%s583 + $0x59] sm:$0x1] %vm584, 0.0
        %605 = vst.msk [vmem:[%s583 + $0x71] sm:$0x1] %vm584, 0.0
        %606 = vst.msk [vmem:[%s583 + $0x89] sm:$0x1] %vm584, 0.0
        %607 = vst.msk [vmem:[%s583 + $0xa1] sm:$0x1] %vm584, 0.0
        %608 = vst.msk [vmem:[%s583 + $0xb9] sm:$0x1] %vm584, 0.0
        %609 = vst.msk [vmem:[%s583 + $0xd1] sm:$0x1] %vm584, 0.0
        %610 = vst.msk [vmem:[%s583 + $0xe9] sm:$0x1] %vm584, 0.0
        %611 = vst.msk [vmem:[%s583 + $0x101] sm:$0x1] %vm584, 0.0
        %612 = vst.msk [vmem:[%s583 + $0x119] sm:$0x1] %vm584, 0.0
        %613 = vst.msk [vmem:[%s583 + $0x131] sm:$0x1] %vm584, 0.0
        %614 = vst.msk [vmem:[%s583 + $0x149] sm:$0x1] %vm584, 0.0
        %615 = vst.msk [vmem:[%s583 + $0x161] sm:$0x1] %vm584, 0.0
        %616 = vst.msk [vmem:[%s583 + $0x179] sm:$0x1] %vm584, 0.0
        %617 = vst.msk [vmem:[%s583 + $0x1] sm:$0xff] %vm574, %v542
        %618 = vst.msk [vmem:[%s583 + $0x9] sm:$0xff] %vm574, %v543
        %619 = vst.msk [vmem:[%s583 + $0x19] sm:$0xff] %vm574, %v544
        %620 = vst.msk [vmem:[%s583 + $0x21] sm:$0xff] %vm574, %v545
        %621 = vst.msk [vmem:[%s583 + $0x31] sm:$0xff] %vm574, %v546
        %622 = vst.msk [vmem:[%s583 + $0x39] sm:$0xff] %vm574, %v547
        %623 = vst.msk [vmem:[%s583 + $0x49] sm:$0xff] %vm574, %v548
        %624 = vst.msk [vmem:[%s583 + $0x51] sm:$0xff] %vm574, %v549
        %625 = vst.msk [vmem:[%s583 + $0x61] sm:$0xff] %vm574, %v550
        %626 = vst.msk [vmem:[%s583 + $0x69] sm:$0xff] %vm574, %v551
        %627 = vst.msk [vmem:[%s583 + $0x79] sm:$0xff] %vm574, %v552
        %628 = vst.msk [vmem:[%s583 + $0x81] sm:$0xff] %vm574, %v553
        %629 = vst.msk [vmem:[%s583 + $0x91] sm:$0xff] %vm574, %v554
        %630 = vst.msk [vmem:[%s583 + $0x99] sm:$0xff] %vm574, %v555
        %631 = vst.msk [vmem:[%s583 + $0xa9] sm:$0xff] %vm574, %v556
        %632 = vst.msk [vmem:[%s583 + $0xb1] sm:$0xff] %vm574, %v557
        %633 = vst.msk [vmem:[%s583 + $0xc1] sm:$0xff] %vm574, %v558
        %634 = vst.msk [vmem:[%s583 + $0xc9] sm:$0xff] %vm574, %v559
        %635 = vst.msk [vmem:[%s583 + $0xd9] sm:$0xff] %vm574, %v560
        %636 = vst.msk [vmem:[%s583 + $0xe1] sm:$0xff] %vm574, %v561
        %637 = vst.msk [vmem:[%s583 + $0xf1] sm:$0xff] %vm574, %v562
        %638 = vst.msk [vmem:[%s583 + $0xf9] sm:$0xff] %vm574, %v563
        %639 = vst.msk [vmem:[%s583 + $0x109] sm:$0xff] %vm574, %v564
        %640 = vst.msk [vmem:[%s583 + $0x111] sm:$0xff] %vm574, %v565
        %641 = vst.msk [vmem:[%s583 + $0x121] sm:$0xff] %vm574, %v566
        %642 = vst.msk [vmem:[%s583 + $0x129] sm:$0xff] %vm574, %v567
        %643 = vst.msk [vmem:[%s583 + $0x139] sm:$0xff] %vm574, %v568
        %644 = vst.msk [vmem:[%s583 + $0x141] sm:$0xff] %vm574, %v569
        %645 = vst.msk [vmem:[%s583 + $0x151] sm:$0xff] %vm574, %v570
        %646 = vst.msk [vmem:[%s583 + $0x159] sm:$0xff] %vm574, %v571
        %647 = vst.msk [vmem:[%s583 + $0x169] sm:$0xff] %vm574, %v572
        %648 = vst.msk [vmem:[%s583 + $0x171] sm:$0xff] %vm574, %v573
      $region56: #{wide_block_forward.3} parent=51 // pred_fallthru
        _
      %s649 = smul.u32 %s25, 8
      %s650 = smul.u32 %s649, 24
      %s651 = scalar_lea.vmem [#allocation2], %s650
      %v652 = vld [vmem:[%s651] sm:$0xff]
      %v653 = vld [vmem:[%s651 + $0x8] sm:$0xff]
      %v654 = vld [vmem:[%s651 + $0x18] sm:$0xff]
      %v655 = vld [vmem:[%s651 + $0x20] sm:$0xff]
      %v656 = vld [vmem:[%s651 + $0x30] sm:$0xff]
      %v657 = vld [vmem:[%s651 + $0x38] sm:$0xff]
      %v658 = vld [vmem:[%s651 + $0x48] sm:$0xff]
      %v659 = vld [vmem:[%s651 + $0x50] sm:$0xff]
      %v660 = vld [vmem:[%s651 + $0x60] sm:$0xff]
      %v661 = vld [vmem:[%s651 + $0x68] sm:$0xff]
      %v662 = vld [vmem:[%s651 + $0x78] sm:$0xff]
      %v663 = vld [vmem:[%s651 + $0x80] sm:$0xff]
      %v664 = vld [vmem:[%s651 + $0x90] sm:$0xff]
      %v665 = vld [vmem:[%s651 + $0x98] sm:$0xff]
      %v666 = vld [vmem:[%s651 + $0xa8] sm:$0xff]
      %v667 = vld [vmem:[%s651 + $0xb0] sm:$0xff]
      %v668 = vld [vmem:[%s397] sm:$0xff]
      %v669 = vld [vmem:[%s651 + $0x1] sm:$0xff]
      %v670 = vld [vmem:[%s651 + $0x9] sm:$0xff]
      %v671 = vld [vmem:[%s651 + $0x19] sm:$0xff]
      %v672 = vld [vmem:[%s651 + $0x21] sm:$0xff]
      %v673 = vld [vmem:[%s651 + $0x31] sm:$0xff]
      %v674 = vld [vmem:[%s651 + $0x39] sm:$0xff]
      %v675 = vld [vmem:[%s651 + $0x49] sm:$0xff]
      %v676 = vld [vmem:[%s651 + $0x51] sm:$0xff]
      %v677 = vld [vmem:[%s651 + $0x61] sm:$0xff]
      %v678 = vld [vmem:[%s651 + $0x69] sm:$0xff]
      %v679 = vld [vmem:[%s651 + $0x79] sm:$0xff]
      %v680 = vld [vmem:[%s651 + $0x81] sm:$0xff]
      %v681 = vld [vmem:[%s651 + $0x91] sm:$0xff]
      %v682 = vld [vmem:[%s651 + $0x99] sm:$0xff]
      %v683 = vld [vmem:[%s651 + $0xa9] sm:$0xff]
      %v684 = vld [vmem:[%s651 + $0xb1] sm:$0xff]
      %s685 = scalar_lea.vmem %s397, 8
      %v686 = vld [vmem:[%s685] sm:$0xff]
      %vm687 = vcmask 64512
      %v689 = vsel %vm687, %v669, 0
      %v692 = vsel %vm687, %v670, 0
      %v695 = vsel %vm687, %v671, 0
      %v698 = vsel %vm687, %v672, 0
      %v701 = vsel %vm687, %v673, 0
      %v704 = vsel %vm687, %v674, 0
      %v707 = vsel %vm687, %v675, 0
      %v710 = vsel %vm687, %v676, 0
      %v713 = vsel %vm687, %v677, 0
      %v716 = vsel %vm687, %v678, 0
      %v719 = vsel %vm687, %v679, 0
      %v722 = vsel %vm687, %v680, 0
      %v725 = vsel %vm687, %v681, 0
      %v728 = vsel %vm687, %v682, 0
      %v731 = vsel %vm687, %v683, 0
      %v734 = vsel %vm687, %v684, 0
      %736 = vmatprep.subr.mxu0 0.0
      %737 = vmatpush1.msra.mxu0 %v686
      %738 = vmatprep.subr.mxu0 0.0
      %739 = vmatpush1.msra.mxu0 0.0
      %740 = vmatprep.subr.mxu0 0.0
      %741 = vmatpush1.msra.mxu0 0.0
      %742 = vmatprep.subr.mxu0 0.0
      %743 = vmatpush1.msra.mxu0 0.0
      %744 = vmatprep.subr.mxu0 0.0
      %745 = vmatpush1.msra.mxu0 0.0
      %746 = vmatprep.subr.mxu0 0.0
      %747 = vmatpush1.msra.mxu0 0.0
      %748 = vmatprep.subr.mxu0 0.0
      %749 = vmatpush1.msra.mxu0 0.0
      %750 = vmatprep.subr.mxu0 0.0
      %751 = vmatpush1.msra.mxu0 0.0
      %752 = vmatprep.subr.mxu0 0.0
      %753 = vmatpush1.msra.mxu0 0.0
      %754 = vmatprep.subr.mxu0 0.0
      %755 = vmatpush1.msra.mxu0 0.0
      %756 = vmatprep.subr.mxu0 0.0
      %757 = vmatpush1.msra.mxu0 0.0
      %758 = vmatprep.subr.mxu0 0.0
      %759 = vmatpush1.msra.mxu0 0.0
      %760 = vmatprep.subr.mxu0 0.0
      %761 = vmatpush1.msra.mxu0 0.0
      %762 = vmatprep.subr.mxu0 0.0
      %763 = vmatpush1.msra.mxu0 0.0
      %764 = vmatprep.subr.mxu0 0.0
      %765 = vmatpush1.msra.mxu0 0.0
      %766 = vmatprep.subr.mxu0 0.0
      %767 = vmatpush1.msra.mxu0 0.0
      %768 = vmatprep.subr.mxu0 0.0
      %769 = vmatpush1.msra.mxu0 0.0
      %770 = vmatprep.subr.mxu0 0.0
      %771 = vmatpush1.msra.mxu0 0.0
      %772 = vmatprep.subr.mxu0 0.0
      %773 = vmatpush1.msra.mxu0 0.0
      %774 = vmatprep.subr.mxu0 0.0
      %775 = vmatpush1.msra.mxu0 0.0
      %776 = vmatprep.subr.mxu0 0.0
      %777 = vmatpush1.msra.mxu0 0.0
      %778 = vmatprep.subr.mxu0 0.0
      %779 = vmatpush1.msra.mxu0 0.0
      %780 = vmatprep.subr.mxu0 0.0
      %781 = vmatpush1.msra.mxu0 0.0
      %782 = vmatprep.subr.mxu0 0.0
      %783 = vmatpush1.msra.mxu0 0.0
      %784 = vmatprep.subr.mxu0 0.0
      %785 = vmatpush1.msra.mxu0 0.0
      %786 = vmatprep.subr.mxu0 0.0
      %787 = vmatpush1.msra.mxu0 0.0
      %788 = vmatprep.subr.mxu0 0.0
      %789 = vmatpush1.msra.mxu0 0.0
      %790 = vmatprep.subr.mxu0 0.0
      %791 = vmatpush1.msra.mxu0 0.0
      %792 = vmatprep.subr.mxu0 0.0
      %793 = vmatpush1.msra.mxu0 0.0
      %794 = vmatprep.subr.mxu0 0.0
      %795 = vmatpush1.msra.mxu0 0.0
      %796 = vmatprep.subr.mxu0 0.0
      %797 = vmatpush1.msra.mxu0 0.0
      %798 = vmatprep.subr.mxu0 0.0
      %799 = vmatpush1.msra.mxu0 0.0
      %800 = vmatprep.mubr.f32.mxu0 0.0
      %801 = vmatmul.mubr.f32.gmra.mrb[0].mxu0 %v689
      %v802 = vpop.f32.mrb[0].mxu0
      %v803 = vadd.f32 0.0, %v802
      %v804 = vpop.f32.mrb[0].mxu0
      %805 = vmatprep.mubr.f32.mxu0 0.0
      %806 = vmatmul.mubr.f32.gmra.mrb[0].mxu0 %v692
      %v807 = vpop.f32.mrb[0].mxu0
      %v808 = vadd.f32 0.0, %v807
      %v809 = vpop.f32.mrb[0].mxu0
      %810 = vmatprep.mubr.f32.mxu0 0.0
      %811 = vmatmul.mubr.f32.gmra.mrb[0].mxu0 %v695
      %v812 = vpop.f32.mrb[0].mxu0
      %v813 = vadd.f32 0.0, %v812
      %v814 = vpop.f32.mrb[0].mxu0
      %815 = vmatprep.mubr.f32.mxu0 0.0
      %816 = vmatmul.mubr.f32.gmra.mrb[0].mxu0 %v698
      %v817 = vpop.f32.mrb[0].mxu0
      %v818 = vadd.f32 0.0, %v817
      %v819 = vpop.f32.mrb[0].mxu0
      %820 = vmatprep.mubr.f32.mxu0 0.0
      %821 = vmatmul.mubr.f32.gmra.mrb[0].mxu0 %v701
      %v822 = vpop.f32.mrb[0].mxu0
      %v823 = vadd.f32 0.0, %v822
      %v824 = vpop.f32.mrb[0].mxu0
      %825 = vmatprep.mubr.f32.mxu0 0.0
      %826 = vmatmul.mubr.f32.gmra.mrb[0].mxu0 %v704
      %v827 = vpop.f32.mrb[0].mxu0
      %v828 = vadd.f32 0.0, %v827
      %v829 = vpop.f32.mrb[0].mxu0
      %830 = vmatprep.mubr.f32.mxu0 0.0
      %831 = vmatmul.mubr.f32.gmra.mrb[0].mxu0 %v707
      %v832 = vpop.f32.mrb[0].mxu0
      %v833 = vadd.f32 0.0, %v832
      %v834 = vpop.f32.mrb[0].mxu0
      %835 = vmatprep.mubr.f32.mxu0 0.0
      %836 = vmatmul.mubr.f32.gmra.mrb[0].mxu0 %v710
      %v837 = vpop.f32.mrb[0].mxu0
      %v838 = vadd.f32 0.0, %v837
      %v839 = vpop.f32.mrb[0].mxu0
      %840 = vmatprep.mubr.f32.mxu0 0.0
      %841 = vmatmul.mubr.f32.gmra.mrb[0].mxu0 %v713
      %v842 = vpop.f32.mrb[0].mxu0
      %v843 = vadd.f32 0.0, %v842
      %v844 = vpop.f32.mrb[0].mxu0
      %845 = vmatprep.mubr.f32.mxu0 0.0
      %846 = vmatmul.mubr.f32.gmra.mrb[0].mxu0 %v716
      %v847 = vpop.f32.mrb[0].mxu0
      %v848 = vadd.f32 0.0, %v847
      %v849 = vpop.f32.mrb[0].mxu0
      %850 = vmatprep.mubr.f32.mxu0 0.0
      %851 = vmatmul.mubr.f32.gmra.mrb[0].mxu0 %v719
      %v852 = vpop.f32.mrb[0].mxu0
      %v853 = vadd.f32 0.0, %v852
      %v854 = vpop.f32.mrb[0].mxu0
      %855 = vmatprep.mubr.f32.mxu0 0.0
      %856 = vmatmul.mubr.f32.gmra.mrb[0].mxu0 %v722
      %v857 = vpop.f32.mrb[0].mxu0
      %v858 = vadd.f32 0.0, %v857
      %v859 = vpop.f32.mrb[0].mxu0
      %860 = vmatprep.mubr.f32.mxu0 0.0
      %861 = vmatmul.mubr.f32.gmra.mrb[0].mxu0 %v725
      %v862 = vpop.f32.mrb[0].mxu0
      %v863 = vadd.f32 0.0, %v862
      %v864 = vpop.f32.mrb[0].mxu0
      %865 = vmatprep.mubr.f32.mxu0 0.0
      %866 = vmatmul.mubr.f32.gmra.mrb[0].mxu0 %v728
      %v867 = vpop.f32.mrb[0].mxu0
      %v868 = vadd.f32 0.0, %v867
      %v869 = vpop.f32.mrb[0].mxu0
      %870 = vmatprep.mubr.f32.mxu0 0.0
      %871 = vmatmul.mubr.f32.gmra.mrb[0].mxu0 %v731
      %v872 = vpop.f32.mrb[0].mxu0
      %v873 = vadd.f32 0.0, %v872
      %v874 = vpop.f32.mrb[0].mxu0
      %875 = vmatprep.mubr.f32.mxu0 0.0
      %876 = vmatmul.mubr.f32.gmra.mrb[0].mxu0 %v734
      %v877 = vpop.f32.mrb[0].mxu0
      %v878 = vadd.f32 0.0, %v877
      %v879 = vpop.f32.mrb[0].mxu0
      %880 = vdwg.mxu0
      %v882 = vsel %vm687, %v652, 0
      %v885 = vsel %vm687, %v653, 0
      %v888 = vsel %vm687, %v654, 0
      %v891 = vsel %vm687, %v655, 0
      %v894 = vsel %vm687, %v656, 0
      %v897 = vsel %vm687, %v657, 0
      %v900 = vsel %vm687, %v658, 0
      %v903 = vsel %vm687, %v659, 0
      %v906 = vsel %vm687, %v660, 0
      %v909 = vsel %vm687, %v661, 0
      %v912 = vsel %vm687, %v662, 0
      %v915 = vsel %vm687, %v663, 0
      %v918 = vsel %vm687, %v664, 0
      %v921 = vsel %vm687, %v665, 0
      %v924 = vsel %vm687, %v666, 0
      %v927 = vsel %vm687, %v667, 0
      %929 = vmatprep.subr.mxu0 0.0
      %930 = vmatpush1.msra.mxu0 %v668
      %931 = vmatprep.subr.mxu0 0.0
      %932 = vmatpush1.msra.mxu0 0.0
      %933 = vmatprep.subr.mxu0 0.0
      %934 = vmatpush1.msra.mxu0 0.0
      %935 = vmatprep.subr.mxu0 0.0
      %936 = vmatpush1.msra.mxu0 0.0
      %937 = vmatprep.subr.mxu0 0.0
      %938 = vmatpush1.msra.mxu0 0.0
      %939 = vmatprep.subr.mxu0 0.0
      %940 = vmatpush1.msra.mxu0 0.0
      %941 = vmatprep.subr.mxu0 0.0
      %942 = vmatpush1.msra.mxu0 0.0
      %943 = vmatprep.subr.mxu0 0.0
      %944 = vmatpush1.msra.mxu0 0.0
      %945 = vmatprep.subr.mxu0 0.0
      %946 = vmatpush1.msra.mxu0 0.0
      %947 = vmatprep.subr.mxu0 0.0
      %948 = vmatpush1.msra.mxu0 0.0
      %949 = vmatprep.subr.mxu0 0.0
      %950 = vmatpush1.msra.mxu0 0.0
      %951 = vmatprep.subr.mxu0 0.0
      %952 = vmatpush1.msra.mxu0 0.0
      %953 = vmatprep.subr.mxu0 0.0
      %954 = vmatpush1.msra.mxu0 0.0
      %955 = vmatprep.subr.mxu0 0.0
      %956 = vmatpush1.msra.mxu0 0.0
      %957 = vmatprep.subr.mxu0 0.0
      %958 = vmatpush1.msra.mxu0 0.0
      %959 = vmatprep.subr.mxu0 0.0
      %960 = vmatpush1.msra.mxu0 0.0
      %961 = vmatprep.subr.mxu0 0.0
      %962 = vmatpush1.msra.mxu0 0.0
      %963 = vmatprep.subr.mxu0 0.0
      %964 = vmatpush1.msra.mxu0 0.0
      %965 = vmatprep.subr.mxu0 0.0
      %966 = vmatpush1.msra.mxu0 0.0
      %967 = vmatprep.subr.mxu0 0.0
      %968 = vmatpush1.msra.mxu0 0.0
      %969 = vmatprep.subr.mxu0 0.0
      %970 = vmatpush1.msra.mxu0 0.0
      %971 = vmatprep.subr.mxu0 0.0
      %972 = vmatpush1.msra.mxu0 0.0
      %973 = vmatprep.subr.mxu0 0.0
      %974 = vmatpush1.msra.mxu0 0.0
      %975 = vmatprep.subr.mxu0 0.0
      %976 = vmatpush1.msra.mxu0 0.0
      %977 = vmatprep.subr.mxu0 0.0
      %978 = vmatpush1.msra.mxu0 0.0
      %979 = vmatprep.subr.mxu0 0.0
      %980 = vmatpush1.msra.mxu0 0.0
      %981 = vmatprep.subr.mxu0 0.0
      %982 = vmatpush1.msra.mxu0 0.0
      %983 = vmatprep.subr.mxu0 0.0
      %984 = vmatpush1.msra.mxu0 0.0
      %985 = vmatprep.subr.mxu0 0.0
      %986 = vmatpush1.msra.mxu0 0.0
      %987 = vmatprep.subr.mxu0 0.0
      %988 = vmatpush1.msra.mxu0 0.0
      %989 = vmatprep.subr.mxu0 0.0
      %990 = vmatpush1.msra.mxu0 0.0
      %991 = vmatprep.subr.mxu0 0.0
      %992 = vmatpush1.msra.mxu0 0.0
      %993 = vmatprep.mubr.f32.mxu0 0.0
      %994 = vmatmul.mubr.f32.gmra.mrb[0].mxu0 %v882
      %v995 = vpop.f32.mrb[0].mxu0
      %v996 = vadd.f32 %v803, %v995
      %v997 = vpop.f32.mrb[0].mxu0
      %998 = vmatprep.mubr.f32.mxu0 0.0
      %999 = vmatmul.mubr.f32.gmra.mrb[0].mxu0 %v885
      %v1000 = vpop.f32.mrb[0].mxu0
      %v1001 = vadd.f32 %v808, %v1000
      %v1002 = vpop.f32.mrb[0].mxu0
      %1003 = vmatprep.mubr.f32.mxu0 0.0
      %1004 = vmatmul.mubr.f32.gmra.mrb[0].mxu0 %v888
      %v1005 = vpop.f32.mrb[0].mxu0
      %v1006 = vadd.f32 %v813, %v1005
      %v1007 = vpop.f32.mrb[0].mxu0
      %1008 = vmatprep.mubr.f32.mxu0 0.0
      %1009 = vmatmul.mubr.f32.gmra.mrb[0].mxu0 %v891
      %v1010 = vpop.f32.mrb[0].mxu0
      %v1011 = vadd.f32 %v818, %v1010
      %v1012 = vpop.f32.mrb[0].mxu0
      %1013 = vmatprep.mubr.f32.mxu0 0.0
      %1014 = vmatmul.mubr.f32.gmra.mrb[0].mxu0 %v894
      %v1015 = vpop.f32.mrb[0].mxu0
      %v1016 = vadd.f32 %v823, %v1015
      %v1017 = vpop.f32.mrb[0].mxu0
      %1018 = vmatprep.mubr.f32.mxu0 0.0
      %1019 = vmatmul.mubr.f32.gmra.mrb[0].mxu0 %v897
      %v1020 = vpop.f32.mrb[0].mxu0
      %v1021 = vadd.f32 %v828, %v1020
      %v1022 = vpop.f32.mrb[0].mxu0
      %1023 = vmatprep.mubr.f32.mxu0 0.0
      %1024 = vmatmul.mubr.f32.gmra.mrb[0].mxu0 %v900
      %v1025 = vpop.f32.mrb[0].mxu0
      %v1026 = vadd.f32 %v833, %v1025
      %v1027 = vpop.f32.mrb[0].mxu0
      %1028 = vmatprep.mubr.f32.mxu0 0.0
      %1029 = vmatmul.mubr.f32.gmra.mrb[0].mxu0 %v903
      %v1030 = vpop.f32.mrb[0].mxu0
      %v1031 = vadd.f32 %v838, %v1030
      %v1032 = vpop.f32.mrb[0].mxu0
      %1033 = vmatprep.mubr.f32.mxu0 0.0
      %1034 = vmatmul.mubr.f32.gmra.mrb[0].mxu0 %v906
      %v1035 = vpop.f32.mrb[0].mxu0
      %v1036 = vadd.f32 %v843, %v1035
      %v1037 = vpop.f32.mrb[0].mxu0
      %1038 = vmatprep.mubr.f32.mxu0 0.0
      %1039 = vmatmul.mubr.f32.gmra.mrb[0].mxu0 %v909
      %v1040 = vpop.f32.mrb[0].mxu0
      %v1041 = vadd.f32 %v848, %v1040
      %v1042 = vpop.f32.mrb[0].mxu0
      %1043 = vmatprep.mubr.f32.mxu0 0.0
      %1044 = vmatmul.mubr.f32.gmra.mrb[0].mxu0 %v912
      %v1045 = vpop.f32.mrb[0].mxu0
      %v1046 = vadd.f32 %v853, %v1045
      %v1047 = vpop.f32.mrb[0].mxu0
      %1048 = vmatprep.mubr.f32.mxu0 0.0
      %1049 = vmatmul.mubr.f32.gmra.mrb[0].mxu0 %v915
      %v1050 = vpop.f32.mrb[0].mxu0
      %v1051 = vadd.f32 %v858, %v1050
      %v1052 = vpop.f32.mrb[0].mxu0
      %1053 = vmatprep.mubr.f32.mxu0 0.0
      %1054 = vmatmul.mubr.f32.gmra.mrb[0].mxu0 %v918
      %v1055 = vpop.f32.mrb[0].mxu0
      %v1056 = vadd.f32 %v863, %v1055
      %v1057 = vpop.f32.mrb[0].mxu0
      %1058 = vmatprep.mubr.f32.mxu0 0.0
      %1059 = vmatmul.mubr.f32.gmra.mrb[0].mxu0 %v921
      %v1060 = vpop.f32.mrb[0].mxu0
      %v1061 = vadd.f32 %v868, %v1060
      %v1062 = vpop.f32.mrb[0].mxu0
      %1063 = vmatprep.mubr.f32.mxu0 0.0
      %1064 = vmatmul.mubr.f32.gmra.mrb[0].mxu0 %v924
      %v1065 = vpop.f32.mrb[0].mxu0
      %v1066 = vadd.f32 %v873, %v1065
      %v1067 = vpop.f32.mrb[0].mxu0
      %1068 = vmatprep.mubr.f32.mxu0 0.0
      %1069 = vmatmul.mubr.f32.gmra.mrb[0].mxu0 %v927
      %v1070 = vpop.f32.mrb[0].mxu0
      %v1071 = vadd.f32 %v878, %v1070
      %v1072 = vpop.f32.mrb[0].mxu0
      %1073 = vdwg.mxu0
      %v1074 = vld [vmem:[%s651 + $0x2] sm:$0xff]
      %v1075 = vld [vmem:[%s651 + $0xa] sm:$0xff]
      %v1076 = vld [vmem:[%s651 + $0x1a] sm:$0xff]
      %v1077 = vld [vmem:[%s651 + $0x22] sm:$0xff]
      %v1078 = vld [vmem:[%s651 + $0x32] sm:$0xff]
      %v1079 = vld [vmem:[%s651 + $0x3a] sm:$0xff]
      %v1080 = vld [vmem:[%s651 + $0x4a] sm:$0xff]
      %v1081 = vld [vmem:[%s651 + $0x52] sm:$0xff]
      %v1082 = vld [vmem:[%s651 + $0x62] sm:$0xff]
      %v1083 = vld [vmem:[%s651 + $0x6a] sm:$0xff]
      %v1084 = vld [vmem:[%s651 + $0x7a] sm:$0xff]
      %v1085 = vld [vmem:[%s651 + $0x82] sm:$0xff]
      %v1086 = vld [vmem:[%s651 + $0x92] sm:$0xff]
      %v1087 = vld [vmem:[%s651 + $0x9a] sm:$0xff]
      %v1088 = vld [vmem:[%s651 + $0xaa] sm:$0xff]
      %v1089 = vld [vmem:[%s651 + $0xb2] sm:$0xff]
      %s1090 = scalar_lea.vmem %s397, 16
      %v1091 = vld [vmem:[%s1090] sm:$0xff]
      %v1093 = vsel %vm687, %v1074, 0
      %v1096 = vsel %vm687, %v1075, 0
      %v1099 = vsel %vm687, %v1076, 0
      %v1102 = vsel %vm687, %v1077, 0
      %v1105 = vsel %vm687, %v1078, 0
      %v1108 = vsel %vm687, %v1079, 0
      %v1111 = vsel %vm687, %v1080, 0
      %v1114 = vsel %vm687, %v1081, 0
      %v1117 = vsel %vm687, %v1082, 0
      %v1120 = vsel %vm687, %v1083, 0
      %v1123 = vsel %vm687, %v1084, 0
      %v1126 = vsel %vm687, %v1085, 0
      %v1129 = vsel %vm687, %v1086, 0
      %v1132 = vsel %vm687, %v1087, 0
      %v1135 = vsel %vm687, %v1088, 0
      %v1138 = vsel %vm687, %v1089, 0
      %1140 = vmatprep.subr.mxu0 0.0
      %1141 = vmatpush1.msra.mxu0 %v1091
      %1142 = vmatprep.subr.mxu0 0.0
      %1143 = vmatpush1.msra.mxu0 0.0
      %1144 = vmatprep.subr.mxu0 0.0
      %1145 = vmatpush1.msra.mxu0 0.0
      %1146 = vmatprep.subr.mxu0 0.0
      %1147 = vmatpush1.msra.mxu0 0.0
      %1148 = vmatprep.subr.mxu0 0.0
      %1149 = vmatpush1.msra.mxu0 0.0
      %1150 = vmatprep.subr.mxu0 0.0
      %1151 = vmatpush1.msra.mxu0 0.0
      %1152 = vmatprep.subr.mxu0 0.0
      %1153 = vmatpush1.msra.mxu0 0.0
      %1154 = vmatprep.subr.mxu0 0.0
      %1155 = vmatpush1.msra.mxu0 0.0
      %1156 = vmatprep.subr.mxu0 0.0
      %1157 = vmatpush1.msra.mxu0 0.0
      %1158 = vmatprep.subr.mxu0 0.0
      %1159 = vmatpush1.msra.mxu0 0.0
      %1160 = vmatprep.subr.mxu0 0.0
      %1161 = vmatpush1.msra.mxu0 0.0
      %1162 = vmatprep.subr.mxu0 0.0
      %1163 = vmatpush1.msra.mxu0 0.0
      %1164 = vmatprep.subr.mxu0 0.0
      %1165 = vmatpush1.msra.mxu0 0.0
      %1166 = vmatprep.subr.mxu0 0.0
      %1167 = vmatpush1.msra.mxu0 0.0
      %1168 = vmatprep.subr.mxu0 0.0
      %1169 = vmatpush1.msra.mxu0 0.0
      %1170 = vmatprep.subr.mxu0 0.0
      %1171 = vmatpush1.msra.mxu0 0.0
      %1172 = vmatprep.subr.mxu0 0.0
      %1173 = vmatpush1.msra.mxu0 0.0
      %1174 = vmatprep.subr.mxu0 0.0
      %1175 = vmatpush1.msra.mxu0 0.0
      %1176 = vmatprep.subr.mxu0 0.0
      %1177 = vmatpush1.msra.mxu0 0.0
      %1178 = vmatprep.subr.mxu0 0.0
      %1179 = vmatpush1.msra.mxu0 0.0
      %1180 = vmatprep.subr.mxu0 0.0
      %1181 = vmatpush1.msra.mxu0 0.0
      %1182 = vmatprep.subr.mxu0 0.0
      %1183 = vmatpush1.msra.mxu0 0.0
      %1184 = vmatprep.subr.mxu0 0.0
      %1185 = vmatpush1.msra.mxu0 0.0
      %1186 = vmatprep.subr.mxu0 0.0
      %1187 = vmatpush1.msra.mxu0 0.0
      %1188 = vmatprep.subr.mxu0 0.0
      %1189 = vmatpush1.msra.mxu0 0.0
      %1190 = vmatprep.subr.mxu0 0.0
      %1191 = vmatpush1.msra.mxu0 0.0
      %1192 = vmatprep.subr.mxu0 0.0
      %1193 = vmatpush1.msra.mxu0 0.0
      %1194 = vmatprep.subr.mxu0 0.0
      %1195 = vmatpush1.msra.mxu0 0.0
      %1196 = vmatprep.subr.mxu0 0.0
      %1197 = vmatpush1.msra.mxu0 0.0
      %1198 = vmatprep.subr.mxu0 0.0
      %1199 = vmatpush1.msra.mxu0 0.0
      %1200 = vmatprep.subr.mxu0 0.0
      %1201 = vmatpush1.msra.mxu0 0.0
      %1202 = vmatprep.subr.mxu0 0.0
      %1203 = vmatpush1.msra.mxu0 0.0
      %1204 = vmatprep.mubr.f32.mxu0 0.0
      %1205 = vmatmul.mubr.f32.gmra.mrb[0].mxu0 %v1093
      %v1206 = vpop.f32.mrb[0].mxu0
      %v1207 = vadd.f32 0.0, %v1206
      %v1208 = vpop.f32.mrb[0].mxu0
      %1209 = vmatprep.mubr.f32.mxu0 0.0
      %1210 = vmatmul.mubr.f32.gmra.mrb[0].mxu0 %v1096
      %v1211 = vpop.f32.mrb[0].mxu0
      %v1212 = vadd.f32 0.0, %v1211
      %v1213 = vpop.f32.mrb[0].mxu0
      %1214 = vmatprep.mubr.f32.mxu0 0.0
      %1215 = vmatmul.mubr.f32.gmra.mrb[0].mxu0 %v1099
      %v1216 = vpop.f32.mrb[0].mxu0
      %v1217 = vadd.f32 0.0, %v1216
      %v1218 = vpop.f32.mrb[0].mxu0
      %1219 = vmatprep.mubr.f32.mxu0 0.0
      %1220 = vmatmul.mubr.f32.gmra.mrb[0].mxu0 %v1102
      %v1221 = vpop.f32.mrb[0].mxu0
      %v1222 = vadd.f32 0.0, %v1221
      %v1223 = vpop.f32.mrb[0].mxu0
      %1224 = vmatprep.mubr.f32.mxu0 0.0
      %1225 = vmatmul.mubr.f32.gmra.mrb[0].mxu0 %v1105
      %v1226 = vpop.f32.mrb[0].mxu0
      %v1227 = vadd.f32 0.0, %v1226
      %v1228 = vpop.f32.mrb[0].mxu0
      %1229 = vmatprep.mubr.f32.mxu0 0.0
      %1230 = vmatmul.mubr.f32.gmra.mrb[0].mxu0 %v1108
      %v1231 = vpop.f32.mrb[0].mxu0
      %v1232 = vadd.f32 0.0, %v1231
      %v1233 = vpop.f32.mrb[0].mxu0
      %1234 = vmatprep.mubr.f32.mxu0 0.0
      %1235 = vmatmul.mubr.f32.gmra.mrb[0].mxu0 %v1111
      %v1236 = vpop.f32.mrb[0].mxu0
      %v1237 = vadd.f32 0.0, %v1236
      %v1238 = vpop.f32.mrb[0].mxu0
      %1239 = vmatprep.mubr.f32.mxu0 0.0
      %1240 = vmatmul.mubr.f32.gmra.mrb[0].mxu0 %v1114
      %v1241 = vpop.f32.mrb[0].mxu0
      %v1242 = vadd.f32 0.0, %v1241
      %v1243 = vpop.f32.mrb[0].mxu0
      %1244 = vmatprep.mubr.f32.mxu0 0.0
      %1245 = vmatmul.mubr.f32.gmra.mrb[0].mxu0 %v1117
      %v1246 = vpop.f32.mrb[0].mxu0
      %v1247 = vadd.f32 0.0, %v1246
      %v1248 = vpop.f32.mrb[0].mxu0
      %1249 = vmatprep.mubr.f32.mxu0 0.0
      %1250 = vmatmul.mubr.f32.gmra.mrb[0].mxu0 %v1120
      %v1251 = vpop.f32.mrb[0].mxu0
      %v1252 = vadd.f32 0.0, %v1251
      %v1253 = vpop.f32.mrb[0].mxu0
      %1254 = vmatprep.mubr.f32.mxu0 0.0
      %1255 = vmatmul.mubr.f32.gmra.mrb[0].mxu0 %v1123
      %v1256 = vpop.f32.mrb[0].mxu0
      %v1257 = vadd.f32 0.0, %v1256
      %v1258 = vpop.f32.mrb[0].mxu0
      %1259 = vmatprep.mubr.f32.mxu0 0.0
      %1260 = vmatmul.mubr.f32.gmra.mrb[0].mxu0 %v1126
      %v1261 = vpop.f32.mrb[0].mxu0
      %v1262 = vadd.f32 0.0, %v1261
      %v1263 = vpop.f32.mrb[0].mxu0
      %1264 = vmatprep.mubr.f32.mxu0 0.0
      %1265 = vmatmul.mubr.f32.gmra.mrb[0].mxu0 %v1129
      %v1266 = vpop.f32.mrb[0].mxu0
      %v1267 = vadd.f32 0.0, %v1266
      %v1268 = vpop.f32.mrb[0].mxu0
      %1269 = vmatprep.mubr.f32.mxu0 0.0
      %1270 = vmatmul.mubr.f32.gmra.mrb[0].mxu0 %v1132
      %v1271 = vpop.f32.mrb[0].mxu0
      %v1272 = vadd.f32 0.0, %v1271
      %v1273 = vpop.f32.mrb[0].mxu0
      %1274 = vmatprep.mubr.f32.mxu0 0.0
      %1275 = vmatmul.mubr.f32.gmra.mrb[0].mxu0 %v1135
      %v1276 = vpop.f32.mrb[0].mxu0
      %v1277 = vadd.f32 0.0, %v1276
      %v1278 = vpop.f32.mrb[0].mxu0
      %1279 = vmatprep.mubr.f32.mxu0 0.0
      %1280 = vmatmul.mubr.f32.gmra.mrb[0].mxu0 %v1138
      %v1281 = vpop.f32.mrb[0].mxu0
      %v1282 = vadd.f32 0.0, %v1281
      %v1283 = vpop.f32.mrb[0].mxu0
      %1284 = vdwg.mxu0
      %v1285 = vadd.f32 %v996, %v1207
      %v1286 = vadd.f32 %v1001, %v1212
      %v1287 = vadd.f32 %v1006, %v1217
      %v1288 = vadd.f32 %v1011, %v1222
      %v1289 = vadd.f32 %v1016, %v1227
      %v1290 = vadd.f32 %v1021, %v1232
      %v1291 = vadd.f32 %v1026, %v1237
      %v1292 = vadd.f32 %v1031, %v1242
      %v1293 = vadd.f32 %v1036, %v1247
      %v1294 = vadd.f32 %v1041, %v1252
      %v1295 = vadd.f32 %v1046, %v1257
      %v1296 = vadd.f32 %v1051, %v1262
      %v1297 = vadd.f32 %v1056, %v1267
      %v1298 = vadd.f32 %v1061, %v1272
      %v1299 = vadd.f32 %v1066, %v1277
      %v1300 = vadd.f32 %v1071, %v1282
      %s1301 = sadd.s32 %s649, 1
      %s1302 = smul.u32 %s1301, 24
      %s1303 = scalar_lea.vmem [#allocation2], %s1302
      %v1304 = vld [vmem:[%s1303] sm:$0xff]
      %v1305 = vld [vmem:[%s1303 + $0x8] sm:$0xff]
      %v1306 = vld [vmem:[%s1303 + $0x18] sm:$0xff]
      %v1307 = vld [vmem:[%s1303 + $0x20] sm:$0xff]
      %v1308 = vld [vmem:[%s1303 + $0x30] sm:$0xff]
      %v1309 = vld [vmem:[%s1303 + $0x38] sm:$0xff]
      %v1310 = vld [vmem:[%s1303 + $0x48] sm:$0xff]
      %v1311 = vld [vmem:[%s1303 + $0x50] sm:$0xff]
      %v1312 = vld [vmem:[%s1303 + $0x60] sm:$0xff]
      %v1313 = vld [vmem:[%s1303 + $0x68] sm:$0xff]
      %v1314 = vld [vmem:[%s1303 + $0x78] sm:$0xff]
      %v1315 = vld [vmem:[%s1303 + $0x80] sm:$0xff]
      %v1316 = vld [vmem:[%s1303 + $0x90] sm:$0xff]
      %v1317 = vld [vmem:[%s1303 + $0x98] sm:$0xff]
      %v1318 = vld [vmem:[%s1303 + $0xa8] sm:$0xff]
      %v1319 = vld [vmem:[%s1303 + $0xb0] sm:$0xff]
      %s1320 = scalar_lea.vmem %s397, 24
      %v1321 = vld [vmem:[%s1320] sm:$0xff]
      %v1323 = vsel %vm687, %v1304, 0
      %v1326 = vsel %vm687, %v1305, 0
      %v1329 = vsel %vm687, %v1306, 0
      %v1332 = vsel %vm687, %v1307, 0
      %v1335 = vsel %vm687, %v1308, 0
      %v1338 = vsel %vm687, %v1309, 0
      %v1341 = vsel %vm687, %v1310, 0
      %v1344 = vsel %vm687, %v1311, 0
      %v1347 = vsel %vm687, %v1312, 0
      %v1350 = vsel %vm687, %v1313, 0
      %v1353 = vsel %vm687, %v1314, 0
      %v1356 = vsel %vm687, %v1315, 0
      %v1359 = vsel %vm687, %v1316, 0
      %v1362 = vsel %vm687, %v1317, 0
      %v1365 = vsel %vm687, %v1318, 0
      %v1368 = vsel %vm687, %v1319, 0
      %1370 = vmatprep.subr.mxu0 0.0
      %1371 = vmatpush1.msra.mxu0 %v1321
      %1372 = vmatprep.subr.mxu0 0.0
      %1373 = vmatpush1.msra.mxu0 0.0
      %1374 = vmatprep.subr.mxu0 0.0
      %1375 = vmatpush1.msra.mxu0 0.0
      %1376 = vmatprep.subr.mxu0 0.0
      %1377 = vmatpush1.msra.mxu0 0.0
      %1378 = vmatprep.subr.mxu0 0.0
      %1379 = vmatpush1.msra.mxu0 0.0
      %1380 = vmatprep.subr.mxu0 0.0
      %1381 = vmatpush1.msra.mxu0 0.0
      %1382 = vmatprep.subr.mxu0 0.0
      %1383 = vmatpush1.msra.mxu0 0.0
      %1384 = vmatprep.subr.mxu0 0.0
      %1385 = vmatpush1.msra.mxu0 0.0
      %1386 = vmatprep.subr.mxu0 0.0
      %1387 = vmatpush1.msra.mxu0 0.0
      %1388 = vmatprep.subr.mxu0 0.0
      %1389 = vmatpush1.msra.mxu0 0.0
      %1390 = vmatprep.subr.mxu0 0.0
      %1391 = vmatpush1.msra.mxu0 0.0
      %1392 = vmatprep.subr.mxu0 0.0
      %1393 = vmatpush1.msra.mxu0 0.0
      %1394 = vmatprep.subr.mxu0 0.0
      %1395 = vmatpush1.msra.mxu0 0.0
      %1396 = vmatprep.subr.mxu0 0.0
      %1397 = vmatpush1.msra.mxu0 0.0
      %1398 = vmatprep.subr.mxu0 0.0
      %1399 = vmatpush1.msra.mxu0 0.0
      %1400 = vmatprep.subr.mxu0 0.0
      %1401 = vmatpush1.msra.mxu0 0.0
      %1402 = vmatprep.subr.mxu0 0.0
      %1403 = vmatpush1.msra.mxu0 0.0
      %1404 = vmatprep.subr.mxu0 0.0
      %1405 = vmatpush1.msra.mxu0 0.0
      %1406 = vmatprep.subr.mxu0 0.0
      %1407 = vmatpush1.msra.mxu0 0.0
      %1408 = vmatprep.subr.mxu0 0.0
      %1409 = vmatpush1.msra.mxu0 0.0
      %1410 = vmatprep.subr.mxu0 0.0
      %1411 = vmatpush1.msra.mxu0 0.0
      %1412 = vmatprep.subr.mxu0 0.0
      %1413 = vmatpush1.msra.mxu0 0.0
      %1414 = vmatprep.subr.mxu0 0.0
      %1415 = vmatpush1.msra.mxu0 0.0
      %1416 = vmatprep.subr.mxu0 0.0
      %1417 = vmatpush1.msra.mxu0 0.0
      %1418 = vmatprep.subr.mxu0 0.0
      %1419 = vmatpush1.msra.mxu0 0.0
      %1420 = vmatprep.subr.mxu0 0.0
      %1421 = vmatpush1.msra.mxu0 0.0
      %1422 = vmatprep.subr.mxu0 0.0
      %1423 = vmatpush1.msra.mxu0 0.0
      %1424 = vmatprep.subr.mxu0 0.0
      %1425 = vmatpush1.msra.mxu0 0.0
      %1426 = vmatprep.subr.mxu0 0.0
      %1427 = vmatpush1.msra.mxu0 0.0
      %1428 = vmatprep.subr.mxu0 0.0
      %1429 = vmatpush1.msra.mxu0 0.0
      %1430 = vmatprep.subr.mxu0 0.0
      %1431 = vmatpush1.msra.mxu0 0.0
      %1432 = vmatprep.subr.mxu0 0.0
      %1433 = vmatpush1.msra.mxu0 0.0
      %1434 = vmatprep.mubr.f32.mxu0 0.0
      %1435 = vmatmul.mubr.f32.gmra.mrb[0].mxu0 %v1323
      %v1436 = vpop.f32.mrb[0].mxu0
      %v1437 = vadd.f32 0.0, %v1436
      %v1438 = vpop.f32.mrb[0].mxu0
      %1439 = vmatprep.mubr.f32.mxu0 0.0
      %1440 = vmatmul.mubr.f32.gmra.mrb[0].mxu0 %v1326
      %v1441 = vpop.f32.mrb[0].mxu0
      %v1442 = vadd.f32 0.0, %v1441
      %v1443 = vpop.f32.mrb[0].mxu0
      %1444 = vmatprep.mubr.f32.mxu0 0.0
      %1445 = vmatmul.mubr.f32.gmra.mrb[0].mxu0 %v1329
      %v1446 = vpop.f32.mrb[0].mxu0
      %v1447 = vadd.f32 0.0, %v1446
      %v1448 = vpop.f32.mrb[0].mxu0
      %1449 = vmatprep.mubr.f32.mxu0 0.0
      %1450 = vmatmul.mubr.f32.gmra.mrb[0].mxu0 %v1332
      %v1451 = vpop.f32.mrb[0].mxu0
      %v1452 = vadd.f32 0.0, %v1451
      %v1453 = vpop.f32.mrb[0].mxu0
      %1454 = vmatprep.mubr.f32.mxu0 0.0
      %1455 = vmatmul.mubr.f32.gmra.mrb[0].mxu0 %v1335
      %v1456 = vpop.f32.mrb[0].mxu0
      %v1457 = vadd.f32 0.0, %v1456
      %v1458 = vpop.f32.mrb[0].mxu0
      %1459 = vmatprep.mubr.f32.mxu0 0.0
      %1460 = vmatmul.mubr.f32.gmra.mrb[0].mxu0 %v1338
      %v1461 = vpop.f32.mrb[0].mxu0
      %v1462 = vadd.f32 0.0, %v1461
      %v1463 = vpop.f32.mrb[0].mxu0
      %1464 = vmatprep.mubr.f32.mxu0 0.0
      %1465 = vmatmul.mubr.f32.gmra.mrb[0].mxu0 %v1341
      %v1466 = vpop.f32.mrb[0].mxu0
      %v1467 = vadd.f32 0.0, %v1466
      %v1468 = vpop.f32.mrb[0].mxu0
      %1469 = vmatprep.mubr.f32.mxu0 0.0
      %1470 = vmatmul.mubr.f32.gmra.mrb[0].mxu0 %v1344
      %v1471 = vpop.f32.mrb[0].mxu0
      %v1472 = vadd.f32 0.0, %v1471
      %v1473 = vpop.f32.mrb[0].mxu0
      %1474 = vmatprep.mubr.f32.mxu0 0.0
      %1475 = vmatmul.mubr.f32.gmra.mrb[0].mxu0 %v1347
      %v1476 = vpop.f32.mrb[0].mxu0
      %v1477 = vadd.f32 0.0, %v1476
      %v1478 = vpop.f32.mrb[0].mxu0
      %1479 = vmatprep.mubr.f32.mxu0 0.0
      %1480 = vmatmul.mubr.f32.gmra.mrb[0].mxu0 %v1350
      %v1481 = vpop.f32.mrb[0].mxu0
      %v1482 = vadd.f32 0.0, %v1481
      %v1483 = vpop.f32.mrb[0].mxu0
      %1484 = vmatprep.mubr.f32.mxu0 0.0
      %1485 = vmatmul.mubr.f32.gmra.mrb[0].mxu0 %v1353
      %v1486 = vpop.f32.mrb[0].mxu0
      %v1487 = vadd.f32 0.0, %v1486
      %v1488 = vpop.f32.mrb[0].mxu0
      %1489 = vmatprep.mubr.f32.mxu0 0.0
      %1490 = vmatmul.mubr.f32.gmra.mrb[0].mxu0 %v1356
      %v1491 = vpop.f32.mrb[0].mxu0
      %v1492 = vadd.f32 0.0, %v1491
      %v1493 = vpop.f32.mrb[0].mxu0
      %1494 = vmatprep.mubr.f32.mxu0 0.0
      %1495 = vmatmul.mubr.f32.gmra.mrb[0].mxu0 %v1359
      %v1496 = vpop.f32.mrb[0].mxu0
      %v1497 = vadd.f32 0.0, %v1496
      %v1498 = vpop.f32.mrb[0].mxu0
      %1499 = vmatprep.mubr.f32.mxu0 0.0
      %1500 = vmatmul.mubr.f32.gmra.mrb[0].mxu0 %v1362
      %v1501 = vpop.f32.mrb[0].mxu0
      %v1502 = vadd.f32 0.0, %v1501
      %v1503 = vpop.f32.mrb[0].mxu0
      %1504 = vmatprep.mubr.f32.mxu0 0.0
      %1505 = vmatmul.mubr.f32.gmra.mrb[0].mxu0 %v1365
      %v1506 = vpop.f32.mrb[0].mxu0
      %v1507 = vadd.f32 0.0, %v1506
      %v1508 = vpop.f32.mrb[0].mxu0
      %1509 = vmatprep.mubr.f32.mxu0 0.0
      %1510 = vmatmul.mubr.f32.gmra.mrb[0].mxu0 %v1368
      %v1511 = vpop.f32.mrb[0].mxu0
      %v1512 = vadd.f32 0.0, %v1511
      %v1513 = vpop.f32.mrb[0].mxu0
      %1514 = vdwg.mxu0
      %v1515 = vadd.f32 %v1285, %v1437
      %v1516 = vadd.f32 %v1286, %v1442
      %v1517 = vadd.f32 %v1287, %v1447
      %v1518 = vadd.f32 %v1288, %v1452
      %v1519 = vadd.f32 %v1289, %v1457
      %v1520 = vadd.f32 %v1290, %v1462
      %v1521 = vadd.f32 %v1291, %v1467
      %v1522 = vadd.f32 %v1292, %v1472
      %v1523 = vadd.f32 %v1293, %v1477
      %v1524 = vadd.f32 %v1294, %v1482
      %v1525 = vadd.f32 %v1295, %v1487
      %v1526 = vadd.f32 %v1296, %v1492
      %v1527 = vadd.f32 %v1297, %v1497
      %v1528 = vadd.f32 %v1298, %v1502
      %v1529 = vadd.f32 %v1299, %v1507
      %v1530 = vadd.f32 %v1300, %v1512
      %v1531 = vld [vmem:[%s1303 + $0x1] sm:$0xff]
      %v1532 = vld [vmem:[%s1303 + $0x9] sm:$0xff]
      %v1533 = vld [vmem:[%s1303 + $0x19] sm:$0xff]
      %v1534 = vld [vmem:[%s1303 + $0x21] sm:$0xff]
      %v1535 = vld [vmem:[%s1303 + $0x31] sm:$0xff]
      %v1536 = vld [vmem:[%s1303 + $0x39] sm:$0xff]
      %v1537 = vld [vmem:[%s1303 + $0x49] sm:$0xff]
      %v1538 = vld [vmem:[%s1303 + $0x51] sm:$0xff]
      %v1539 = vld [vmem:[%s1303 + $0x61] sm:$0xff]
      %v1540 = vld [vmem:[%s1303 + $0x69] sm:$0xff]
      %v1541 = vld [vmem:[%s1303 + $0x79] sm:$0xff]
      %v1542 = vld [vmem:[%s1303 + $0x81] sm:$0xff]
      %v1543 = vld [vmem:[%s1303 + $0x91] sm:$0xff]
      %v1544 = vld [vmem:[%s1303 + $0x99] sm:$0xff]
      %v1545 = vld [vmem:[%s1303 + $0xa9] sm:$0xff]
      %v1546 = vld [vmem:[%s1303 + $0xb1] sm:$0xff]
      %s1547 = scalar_lea.vmem %s397, 32
      %v1548 = vld [vmem:[%s1547] sm:$0xff]
      %v1550 = vsel %vm687, %v1531, 0
      %v1553 = vsel %vm687, %v1532, 0
      %v1556 = vsel %vm687, %v1533, 0
      %v1559 = vsel %vm687, %v1534, 0
      %v1562 = vsel %vm687, %v1535, 0
      %v1565 = vsel %vm687, %v1536, 0
      %v1568 = vsel %vm687, %v1537, 0
      %v1571 = vsel %vm687, %v1538, 0
      %v1574 = vsel %vm687, %v1539, 0
      %v1577 = vsel %vm687, %v1540, 0
      %v1580 = vsel %vm687, %v1541, 0
      %v1583 = vsel %vm687, %v1542, 0
      %v1586 = vsel %vm687, %v1543, 0
      %v1589 = vsel %vm687, %v1544, 0
      %v1592 = vsel %vm687, %v1545, 0
      %v1595 = vsel %vm687, %v1546, 0
      %1597 = vmatprep.subr.mxu0 0.0
      %1598 = vmatpush1.msra.mxu0 %v1548
      %1599 = vmatprep.subr.mxu0 0.0
      %1600 = vmatpush1.msra.mxu0 0.0
      %1601 = vmatprep.subr.mxu0 0.0
      %1602 = vmatpush1.msra.mxu0 0.0
      %1603 = vmatprep.subr.mxu0 0.0
      %1604 = vmatpush1.msra.mxu0 0.0
      %1605 = vmatprep.subr.mxu0 0.0
      %1606 = vmatpush1.msra.mxu0 0.0
      %1607 = vmatprep.subr.mxu0 0.0
      %1608 = vmatpush1.msra.mxu0 0.0
      %1609 = vmatprep.subr.mxu0 0.0
      %1610 = vmatpush1.msra.mxu0 0.0
      %1611 = vmatprep.subr.mxu0 0.0
      %1612 = vmatpush1.msra.mxu0 0.0
      %1613 = vmatprep.subr.mxu0 0.0
      %1614 = vmatpush1.msra.mxu0 0.0
      %1615 = vmatprep.subr.mxu0 0.0
      %1616 = vmatpush1.msra.mxu0 0.0
      %1617 = vmatprep.subr.mxu0 0.0
      %1618 = vmatpush1.msra.mxu0 0.0
      %1619 = vmatprep.subr.mxu0 0.0
      %1620 = vmatpush1.msra.mxu0 0.0
      %1621 = vmatprep.subr.mxu0 0.0
      %1622 = vmatpush1.msra.mxu0 0.0
      %1623 = vmatprep.subr.mxu0 0.0
      %1624 = vmatpush1.msra.mxu0 0.0
      %1625 = vmatprep.subr.mxu0 0.0
      %1626 = vmatpush1.msra.mxu0 0.0
      %1627 = vmatprep.subr.mxu0 0.0
      %1628 = vmatpush1.msra.mxu0 0.0
      %1629 = vmatprep.subr.mxu0 0.0
      %1630 = vmatpush1.msra.mxu0 0.0
      %1631 = vmatprep.subr.mxu0 0.0
      %1632 = vmatpush1.msra.mxu0 0.0
      %1633 = vmatprep.subr.mxu0 0.0
      %1634 = vmatpush1.msra.mxu0 0.0
      %1635 = vmatprep.subr.mxu0 0.0
      %1636 = vmatpush1.msra.mxu0 0.0
      %1637 = vmatprep.subr.mxu0 0.0
      %1638 = vmatpush1.msra.mxu0 0.0
      %1639 = vmatprep.subr.mxu0 0.0
      %1640 = vmatpush1.msra.mxu0 0.0
      %1641 = vmatprep.subr.mxu0 0.0
      %1642 = vmatpush1.msra.mxu0 0.0
      %1643 = vmatprep.subr.mxu0 0.0
      %1644 = vmatpush1.msra.mxu0 0.0
      %1645 = vmatprep.subr.mxu0 0.0
      %1646 = vmatpush1.msra.mxu0 0.0
      %1647 = vmatprep.subr.mxu0 0.0
      %1648 = vmatpush1.msra.mxu0 0.0
      %1649 = vmatprep.subr.mxu0 0.0
      %1650 = vmatpush1.msra.mxu0 0.0
      %1651 = vmatprep.subr.mxu0 0.0
      %1652 = vmatpush1.msra.mxu0 0.0
      %1653 = vmatprep.subr.mxu0 0.0
      %1654 = vmatpush1.msra.mxu0 0.0
      %1655 = vmatprep.subr.mxu0 0.0
      %1656 = vmatpush1.msra.mxu0 0.0
      %1657 = vmatprep.subr.mxu0 0.0
      %1658 = vmatpush1.msra.mxu0 0.0
      %1659 = vmatprep.subr.mxu0 0.0
      %1660 = vmatpush1.msra.mxu0 0.0
      %1661 = vmatprep.mubr.f32.mxu0 0.0
      %1662 = vmatmul.mubr.f32.gmra.mrb[0].mxu0 %v1550
      %v1663 = vpop.f32.mrb[0].mxu0
      %v1664 = vadd.f32 0.0, %v1663
      %v1665 = vpop.f32.mrb[0].mxu0
      %1666 = vmatprep.mubr.f32.mxu0 0.0
      %1667 = vmatmul.mubr.f32.gmra.mrb[0].mxu0 %v1553
      %v1668 = vpop.f32.mrb[0].mxu0
      %v1669 = vadd.f32 0.0, %v1668
      %v1670 = vpop.f32.mrb[0].mxu0
      %1671 = vmatprep.mubr.f32.mxu0 0.0
      %1672 = vmatmul.mubr.f32.gmra.mrb[0].mxu0 %v1556
      %v1673 = vpop.f32.mrb[0].mxu0
      %v1674 = vadd.f32 0.0, %v1673
      %v1675 = vpop.f32.mrb[0].mxu0
      %1676 = vmatprep.mubr.f32.mxu0 0.0
      %1677 = vmatmul.mubr.f32.gmra.mrb[0].mxu0 %v1559
      %v1678 = vpop.f32.mrb[0].mxu0
      %v1679 = vadd.f32 0.0, %v1678
      %v1680 = vpop.f32.mrb[0].mxu0
      %1681 = vmatprep.mubr.f32.mxu0 0.0
      %1682 = vmatmul.mubr.f32.gmra.mrb[0].mxu0 %v1562
      %v1683 = vpop.f32.mrb[0].mxu0
      %v1684 = vadd.f32 0.0, %v1683
      %v1685 = vpop.f32.mrb[0].mxu0
      %1686 = vmatprep.mubr.f32.mxu0 0.0
      %1687 = vmatmul.mubr.f32.gmra.mrb[0].mxu0 %v1565
      %v1688 = vpop.f32.mrb[0].mxu0
      %v1689 = vadd.f32 0.0, %v1688
      %v1690 = vpop.f32.mrb[0].mxu0
      %1691 = vmatprep.mubr.f32.mxu0 0.0
      %1692 = vmatmul.mubr.f32.gmra.mrb[0].mxu0 %v1568
      %v1693 = vpop.f32.mrb[0].mxu0
      %v1694 = vadd.f32 0.0, %v1693
      %v1695 = vpop.f32.mrb[0].mxu0
      %1696 = vmatprep.mubr.f32.mxu0 0.0
      %1697 = vmatmul.mubr.f32.gmra.mrb[0].mxu0 %v1571
      %v1698 = vpop.f32.mrb[0].mxu0
      %v1699 = vadd.f32 0.0, %v1698
      %v1700 = vpop.f32.mrb[0].mxu0
      %1701 = vmatprep.mubr.f32.mxu0 0.0
      %1702 = vmatmul.mubr.f32.gmra.mrb[0].mxu0 %v1574
      %v1703 = vpop.f32.mrb[0].mxu0
      %v1704 = vadd.f32 0.0, %v1703
      %v1705 = vpop.f32.mrb[0].mxu0
      %1706 = vmatprep.mubr.f32.mxu0 0.0
      %1707 = vmatmul.mubr.f32.gmra.mrb[0].mxu0 %v1577
      %v1708 = vpop.f32.mrb[0].mxu0
      %v1709 = vadd.f32 0.0, %v1708
      %v1710 = vpop.f32.mrb[0].mxu0
      %1711 = vmatprep.mubr.f32.mxu0 0.0
      %1712 = vmatmul.mubr.f32.gmra.mrb[0].mxu0 %v1580
      %v1713 = vpop.f32.mrb[0].mxu0
      %v1714 = vadd.f32 0.0, %v1713
      %v1715 = vpop.f32.mrb[0].mxu0
      %1716 = vmatprep.mubr.f32.mxu0 0.0
      %1717 = vmatmul.mubr.f32.gmra.mrb[0].mxu0 %v1583
      %v1718 = vpop.f32.mrb[0].mxu0
      %v1719 = vadd.f32 0.0, %v1718
      %v1720 = vpop.f32.mrb[0].mxu0
      %1721 = vmatprep.mubr.f32.mxu0 0.0
      %1722 = vmatmul.mubr.f32.gmra.mrb[0].mxu0 %v1586
      %v1723 = vpop.f32.mrb[0].mxu0
      %v1724 = vadd.f32 0.0, %v1723
      %v1725 = vpop.f32.mrb[0].mxu0
      %1726 = vmatprep.mubr.f32.mxu0 0.0
      %1727 = vmatmul.mubr.f32.gmra.mrb[0].mxu0 %v1589
      %v1728 = vpop.f32.mrb[0].mxu0
      %v1729 = vadd.f32 0.0, %v1728
      %v1730 = vpop.f32.mrb[0].mxu0
      %1731 = vmatprep.mubr.f32.mxu0 0.0
      %1732 = vmatmul.mubr.f32.gmra.mrb[0].mxu0 %v1592
      %v1733 = vpop.f32.mrb[0].mxu0
      %v1734 = vadd.f32 0.0, %v1733
      %v1735 = vpop.f32.mrb[0].mxu0
      %1736 = vmatprep.mubr.f32.mxu0 0.0
      %1737 = vmatmul.mubr.f32.gmra.mrb[0].mxu0 %v1595
      %v1738 = vpop.f32.mrb[0].mxu0
      %v1739 = vadd.f32 0.0, %v1738
      %v1740 = vpop.f32.mrb[0].mxu0
      %1741 = vdwg.mxu0
      %v1742 = vadd.f32 %v1515, %v1664
      %v1743 = vadd.f32 %v1516, %v1669
      %v1744 = vadd.f32 %v1517, %v1674
      %v1745 = vadd.f32 %v1518, %v1679
      %v1746 = vadd.f32 %v1519, %v1684
      %v1747 = vadd.f32 %v1520, %v1689
      %v1748 = vadd.f32 %v1521, %v1694
      %v1749 = vadd.f32 %v1522, %v1699
      %v1750 = vadd.f32 %v1523, %v1704
      %v1751 = vadd.f32 %v1524, %v1709
      %v1752 = vadd.f32 %v1525, %v1714
      %v1753 = vadd.f32 %v1526, %v1719
      %v1754 = vadd.f32 %v1527, %v1724
      %v1755 = vadd.f32 %v1528, %v1729
      %v1756 = vadd.f32 %v1529, %v1734
      %v1757 = vadd.f32 %v1530, %v1739
      %v1758 = vld [vmem:[%s1303 + $0x2] sm:$0xff]
      %v1759 = vld [vmem:[%s1303 + $0xa] sm:$0xff]
      %v1760 = vld [vmem:[%s1303 + $0x1a] sm:$0xff]
      %v1761 = vld [vmem:[%s1303 + $0x22] sm:$0xff]
      %v1762 = vld [vmem:[%s1303 + $0x32] sm:$0xff]
      %v1763 = vld [vmem:[%s1303 + $0x3a] sm:$0xff]
      %v1764 = vld [vmem:[%s1303 + $0x4a] sm:$0xff]
      %v1765 = vld [vmem:[%s1303 + $0x52] sm:$0xff]
      %v1766 = vld [vmem:[%s1303 + $0x62] sm:$0xff]
      %v1767 = vld [vmem:[%s1303 + $0x6a] sm:$0xff]
      %v1768 = vld [vmem:[%s1303 + $0x7a] sm:$0xff]
      %v1769 = vld [vmem:[%s1303 + $0x82] sm:$0xff]
      %v1770 = vld [vmem:[%s1303 + $0x92] sm:$0xff]
      %v1771 = vld [vmem:[%s1303 + $0x9a] sm:$0xff]
      %v1772 = vld [vmem:[%s1303 + $0xaa] sm:$0xff]
      %v1773 = vld [vmem:[%s1303 + $0xb2] sm:$0xff]
      %s1774 = scalar_lea.vmem %s397, 40
      %v1775 = vld [vmem:[%s1774] sm:$0xff]
      %v1777 = vsel %vm687, %v1758, 0
      %v1780 = vsel %vm687, %v1759, 0
      %v1783 = vsel %vm687, %v1760, 0
      %v1786 = vsel %vm687, %v1761, 0
      %v1789 = vsel %vm687, %v1762, 0
      %v1792 = vsel %vm687, %v1763, 0
      %v1795 = vsel %vm687, %v1764, 0
      %v1798 = vsel %vm687, %v1765, 0
      %v1801 = vsel %vm687, %v1766, 0
      %v1804 = vsel %vm687, %v1767, 0
      %v1807 = vsel %vm687, %v1768, 0
      %v1810 = vsel %vm687, %v1769, 0
      %v1813 = vsel %vm687, %v1770, 0
      %v1816 = vsel %vm687, %v1771, 0
      %v1819 = vsel %vm687, %v1772, 0
      %v1822 = vsel %vm687, %v1773, 0
      %1824 = vmatprep.subr.mxu0 0.0
      %1825 = vmatpush1.msra.mxu0 %v1775
      %1826 = vmatprep.subr.mxu0 0.0
      %1827 = vmatpush1.msra.mxu0 0.0
      %1828 = vmatprep.subr.mxu0 0.0
      %1829 = vmatpush1.msra.mxu0 0.0
      %1830 = vmatprep.subr.mxu0 0.0
      %1831 = vmatpush1.msra.mxu0 0.0
      %1832 = vmatprep.subr.mxu0 0.0
      %1833 = vmatpush1.msra.mxu0 0.0
      %1834 = vmatprep.subr.mxu0 0.0
      %1835 = vmatpush1.msra.mxu0 0.0
      %1836 = vmatprep.subr.mxu0 0.0
      %1837 = vmatpush1.msra.mxu0 0.0
      %1838 = vmatprep.subr.mxu0 0.0
      %1839 = vmatpush1.msra.mxu0 0.0
      %1840 = vmatprep.subr.mxu0 0.0
      %1841 = vmatpush1.msra.mxu0 0.0
      %1842 = vmatprep.subr.mxu0 0.0
      %1843 = vmatpush1.msra.mxu0 0.0
      %1844 = vmatprep.subr.mxu0 0.0
      %1845 = vmatpush1.msra.mxu0 0.0
      %1846 = vmatprep.subr.mxu0 0.0
      %1847 = vmatpush1.msra.mxu0 0.0
      %1848 = vmatprep.subr.mxu0 0.0
      %1849 = vmatpush1.msra.mxu0 0.0
      %1850 = vmatprep.subr.mxu0 0.0
      %1851 = vmatpush1.msra.mxu0 0.0
      %1852 = vmatprep.subr.mxu0 0.0
      %1853 = vmatpush1.msra.mxu0 0.0
      %1854 = vmatprep.subr.mxu0 0.0
      %1855 = vmatpush1.msra.mxu0 0.0
      %1856 = vmatprep.subr.mxu0 0.0
      %1857 = vmatpush1.msra.mxu0 0.0
      %1858 = vmatprep.subr.mxu0 0.0
      %1859 = vmatpush1.msra.mxu0 0.0
      %1860 = vmatprep.subr.mxu0 0.0
      %1861 = vmatpush1.msra.mxu0 0.0
      %1862 = vmatprep.subr.mxu0 0.0
      %1863 = vmatpush1.msra.mxu0 0.0
      %1864 = vmatprep.subr.mxu0 0.0
      %1865 = vmatpush1.msra.mxu0 0.0
      %1866 = vmatprep.subr.mxu0 0.0
      %1867 = vmatpush1.msra.mxu0 0.0
      %1868 = vmatprep.subr.mxu0 0.0
      %1869 = vmatpush1.msra.mxu0 0.0
      %1870 = vmatprep.subr.mxu0 0.0
      %1871 = vmatpush1.msra.mxu0 0.0
      %1872 = vmatprep.subr.mxu0 0.0
      %1873 = vmatpush1.msra.mxu0 0.0
      %1874 = vmatprep.subr.mxu0 0.0
      %1875 = vmatpush1.msra.mxu0 0.0
      %1876 = vmatprep.subr.mxu0 0.0
      %1877 = vmatpush1.msra.mxu0 0.0
      %1878 = vmatprep.subr.mxu0 0.0
      %1879 = vmatpush1.msra.mxu0 0.0
      %1880 = vmatprep.subr.mxu0 0.0
      %1881 = vmatpush1.msra.mxu0 0.0
      %1882 = vmatprep.subr.mxu0 0.0
      %1883 = vmatpush1.msra.mxu0 0.0
      %1884 = vmatprep.subr.mxu0 0.0
      %1885 = vmatpush1.msra.mxu0 0.0
      %1886 = vmatprep.subr.mxu0 0.0
      %1887 = vmatpush1.msra.mxu0 0.0
      %1888 = vmatprep.mubr.f32.mxu0 0.0
      %1889 = vmatmul.mubr.f32.gmra.mrb[0].mxu0 %v1777
      %v1890 = vpop.f32.mrb[0].mxu0
      %v1891 = vadd.f32 0.0, %v1890
      %v1892 = vpop.f32.mrb[0].mxu0
      %1893 = vmatprep.mubr.f32.mxu0 0.0
      %1894 = vmatmul.mubr.f32.gmra.mrb[0].mxu0 %v1780
      %v1895 = vpop.f32.mrb[0].mxu0
      %v1896 = vadd.f32 0.0, %v1895
      %v1897 = vpop.f32.mrb[0].mxu0
      %1898 = vmatprep.mubr.f32.mxu0 0.0
      %1899 = vmatmul.mubr.f32.gmra.mrb[0].mxu0 %v1783
      %v1900 = vpop.f32.mrb[0].mxu0
      %v1901 = vadd.f32 0.0, %v1900
      %v1902 = vpop.f32.mrb[0].mxu0
      %1903 = vmatprep.mubr.f32.mxu0 0.0
      %1904 = vmatmul.mubr.f32.gmra.mrb[0].mxu0 %v1786
      %v1905 = vpop.f32.mrb[0].mxu0
      %v1906 = vadd.f32 0.0, %v1905
      %v1907 = vpop.f32.mrb[0].mxu0
      %1908 = vmatprep.mubr.f32.mxu0 0.0
      %1909 = vmatmul.mubr.f32.gmra.mrb[0].mxu0 %v1789
      %v1910 = vpop.f32.mrb[0].mxu0
      %v1911 = vadd.f32 0.0, %v1910
      %v1912 = vpop.f32.mrb[0].mxu0
      %1913 = vmatprep.mubr.f32.mxu0 0.0
      %1914 = vmatmul.mubr.f32.gmra.mrb[0].mxu0 %v1792
      %v1915 = vpop.f32.mrb[0].mxu0
      %v1916 = vadd.f32 0.0, %v1915
      %v1917 = vpop.f32.mrb[0].mxu0
      %1918 = vmatprep.mubr.f32.mxu0 0.0
      %1919 = vmatmul.mubr.f32.gmra.mrb[0].mxu0 %v1795
      %v1920 = vpop.f32.mrb[0].mxu0
      %v1921 = vadd.f32 0.0, %v1920
      %v1922 = vpop.f32.mrb[0].mxu0
      %1923 = vmatprep.mubr.f32.mxu0 0.0
      %1924 = vmatmul.mubr.f32.gmra.mrb[0].mxu0 %v1798
      %v1925 = vpop.f32.mrb[0].mxu0
      %v1926 = vadd.f32 0.0, %v1925
      %v1927 = vpop.f32.mrb[0].mxu0
      %1928 = vmatprep.mubr.f32.mxu0 0.0
      %1929 = vmatmul.mubr.f32.gmra.mrb[0].mxu0 %v1801
      %v1930 = vpop.f32.mrb[0].mxu0
      %v1931 = vadd.f32 0.0, %v1930
      %v1932 = vpop.f32.mrb[0].mxu0
      %1933 = vmatprep.mubr.f32.mxu0 0.0
      %1934 = vmatmul.mubr.f32.gmra.mrb[0].mxu0 %v1804
      %v1935 = vpop.f32.mrb[0].mxu0
      %v1936 = vadd.f32 0.0, %v1935
      %v1937 = vpop.f32.mrb[0].mxu0
      %1938 = vmatprep.mubr.f32.mxu0 0.0
      %1939 = vmatmul.mubr.f32.gmra.mrb[0].mxu0 %v1807
      %v1940 = vpop.f32.mrb[0].mxu0
      %v1941 = vadd.f32 0.0, %v1940
      %v1942 = vpop.f32.mrb[0].mxu0
      %1943 = vmatprep.mubr.f32.mxu0 0.0
      %1944 = vmatmul.mubr.f32.gmra.mrb[0].mxu0 %v1810
      %v1945 = vpop.f32.mrb[0].mxu0
      %v1946 = vadd.f32 0.0, %v1945
      %v1947 = vpop.f32.mrb[0].mxu0
      %1948 = vmatprep.mubr.f32.mxu0 0.0
      %1949 = vmatmul.mubr.f32.gmra.mrb[0].mxu0 %v1813
      %v1950 = vpop.f32.mrb[0].mxu0
      %v1951 = vadd.f32 0.0, %v1950
      %v1952 = vpop.f32.mrb[0].mxu0
      %1953 = vmatprep.mubr.f32.mxu0 0.0
      %1954 = vmatmul.mubr.f32.gmra.mrb[0].mxu0 %v1816
      %v1955 = vpop.f32.mrb[0].mxu0
      %v1956 = vadd.f32 0.0, %v1955
      %v1957 = vpop.f32.mrb[0].mxu0
      %1958 = vmatprep.mubr.f32.mxu0 0.0
      %1959 = vmatmul.mubr.f32.gmra.mrb[0].mxu0 %v1819
      %v1960 = vpop.f32.mrb[0].mxu0
      %v1961 = vadd.f32 0.0, %v1960
      %v1962 = vpop.f32.mrb[0].mxu0
      %1963 = vmatprep.mubr.f32.mxu0 0.0
      %1964 = vmatmul.mubr.f32.gmra.mrb[0].mxu0 %v1822
      %v1965 = vpop.f32.mrb[0].mxu0
      %v1966 = vadd.f32 0.0, %v1965
      %v1967 = vpop.f32.mrb[0].mxu0
      %1968 = vdwg.mxu0
      %v1969 = vadd.f32 %v1742, %v1891
      %v1970 = vadd.f32 %v1743, %v1896
      %v1971 = vadd.f32 %v1744, %v1901
      %v1972 = vadd.f32 %v1745, %v1906
      %v1973 = vadd.f32 %v1746, %v1911
      %v1974 = vadd.f32 %v1747, %v1916
      %v1975 = vadd.f32 %v1748, %v1921
      %v1976 = vadd.f32 %v1749, %v1926
      %v1977 = vadd.f32 %v1750, %v1931
      %v1978 = vadd.f32 %v1751, %v1936
      %v1979 = vadd.f32 %v1752, %v1941
      %v1980 = vadd.f32 %v1753, %v1946
      %v1981 = vadd.f32 %v1754, %v1951
      %v1982 = vadd.f32 %v1755, %v1956
      %v1983 = vadd.f32 %v1756, %v1961
      %v1984 = vadd.f32 %v1757, %v1966
      %s1985 = sadd.s32 %s649, 2
      %s1986 = smul.u32 %s1985, 24
      %s1987 = scalar_lea.vmem [#allocation2], %s1986
      %v1988 = vld [vmem:[%s1987] sm:$0xff]
      %v1989 = vld [vmem:[%s1987 + $0x8] sm:$0xff]
      %v1990 = vld [vmem:[%s1987 + $0x18] sm:$0xff]
      %v1991 = vld [vmem:[%s1987 + $0x20] sm:$0xff]
      %v1992 = vld [vmem:[%s1987 + $0x30] sm:$0xff]
      %v1993 = vld [vmem:[%s1987 + $0x38] sm:$0xff]
      %v1994 = vld [vmem:[%s1987 + $0x48] sm:$0xff]
      %v1995 = vld [vmem:[%s1987 + $0x50] sm:$0xff]
      %v1996 = vld [vmem:[%s1987 + $0x60] sm:$0xff]
      %v1997 = vld [vmem:[%s1987 + $0x68] sm:$0xff]
      %v1998 = vld [vmem:[%s1987 + $0x78] sm:$0xff]
      %v1999 = vld [vmem:[%s1987 + $0x80] sm:$0xff]
      %v2000 = vld [vmem:[%s1987 + $0x90] sm:$0xff]
      %v2001 = vld [vmem:[%s1987 + $0x98] sm:$0xff]
      %v2002 = vld [vmem:[%s1987 + $0xa8] sm:$0xff]
      %v2003 = vld [vmem:[%s1987 + $0xb0] sm:$0xff]
      %s2004 = scalar_lea.vmem %s397, 48
      %v2005 = vld [vmem:[%s2004] sm:$0xff]
      %v2007 = vsel %vm687, %v1988, 0
      %v2010 = vsel %vm687, %v1989, 0
      %v2013 = vsel %vm687, %v1990, 0
      %v2016 = vsel %vm687, %v1991, 0
      %v2019 = vsel %vm687, %v1992, 0
      %v2022 = vsel %vm687, %v1993, 0
      %v2025 = vsel %vm687, %v1994, 0
      %v2028 = vsel %vm687, %v1995, 0
      %v2031 = vsel %vm687, %v1996, 0
      %v2034 = vsel %vm687, %v1997, 0
      %v2037 = vsel %vm687, %v1998, 0
      %v2040 = vsel %vm687, %v1999, 0
      %v2043 = vsel %vm687, %v2000, 0
      %v2046 = vsel %vm687, %v2001, 0
      %v2049 = vsel %vm687, %v2002, 0
      %v2052 = vsel %vm687, %v2003, 0
      %2054 = vmatprep.subr.mxu0 0.0
      %2055 = vmatpush1.msra.mxu0 %v2005
      %2056 = vmatprep.subr.mxu0 0.0
      %2057 = vmatpush1.msra.mxu0 0.0
      %2058 = vmatprep.subr.mxu0 0.0
      %2059 = vmatpush1.msra.mxu0 0.0
      %2060 = vmatprep.subr.mxu0 0.0
      %2061 = vmatpush1.msra.mxu0 0.0
      %2062 = vmatprep.subr.mxu0 0.0
      %2063 = vmatpush1.msra.mxu0 0.0
      %2064 = vmatprep.subr.mxu0 0.0
      %2065 = vmatpush1.msra.mxu0 0.0
      %2066 = vmatprep.subr.mxu0 0.0
      %2067 = vmatpush1.msra.mxu0 0.0
      %2068 = vmatprep.subr.mxu0 0.0
      %2069 = vmatpush1.msra.mxu0 0.0
      %2070 = vmatprep.subr.mxu0 0.0
      %2071 = vmatpush1.msra.mxu0 0.0
      %2072 = vmatprep.subr.mxu0 0.0
      %2073 = vmatpush1.msra.mxu0 0.0
      %2074 = vmatprep.subr.mxu0 0.0
      %2075 = vmatpush1.msra.mxu0 0.0
      %2076 = vmatprep.subr.mxu0 0.0
      %2077 = vmatpush1.msra.mxu0 0.0
      %2078 = vmatprep.subr.mxu0 0.0
      %2079 = vmatpush1.msra.mxu0 0.0
      %2080 = vmatprep.subr.mxu0 0.0
      %2081 = vmatpush1.msra.mxu0 0.0
      %2082 = vmatprep.subr.mxu0 0.0
      %2083 = vmatpush1.msra.mxu0 0.0
      %2084 = vmatprep.subr.mxu0 0.0
      %2085 = vmatpush1.msra.mxu0 0.0
      %2086 = vmatprep.subr.mxu0 0.0
      %2087 = vmatpush1.msra.mxu0 0.0
      %2088 = vmatprep.subr.mxu0 0.0
      %2089 = vmatpush1.msra.mxu0 0.0
      %2090 = vmatprep.subr.mxu0 0.0
      %2091 = vmatpush1.msra.mxu0 0.0
      %2092 = vmatprep.subr.mxu0 0.0
      %2093 = vmatpush1.msra.mxu0 0.0
      %2094 = vmatprep.subr.mxu0 0.0
      %2095 = vmatpush1.msra.mxu0 0.0
      %2096 = vmatprep.subr.mxu0 0.0
      %2097 = vmatpush1.msra.mxu0 0.0
      %2098 = vmatprep.subr.mxu0 0.0
      %2099 = vmatpush1.msra.mxu0 0.0
      %2100 = vmatprep.subr.mxu0 0.0
      %2101 = vmatpush1.msra.mxu0 0.0
      %2102 = vmatprep.subr.mxu0 0.0
      %2103 = vmatpush1.msra.mxu0 0.0
      %2104 = vmatprep.subr.mxu0 0.0
      %2105 = vmatpush1.msra.mxu0 0.0
      %2106 = vmatprep.subr.mxu0 0.0
      %2107 = vmatpush1.msra.mxu0 0.0
      %2108 = vmatprep.subr.mxu0 0.0
      %2109 = vmatpush1.msra.mxu0 0.0
      %2110 = vmatprep.subr.mxu0 0.0
      %2111 = vmatpush1.msra.mxu0 0.0
      %2112 = vmatprep.subr.mxu0 0.0
      %2113 = vmatpush1.msra.mxu0 0.0
      %2114 = vmatprep.subr.mxu0 0.0
      %2115 = vmatpush1.msra.mxu0 0.0
      %2116 = vmatprep.subr.mxu0 0.0
      %2117 = vmatpush1.msra.mxu0 0.0
      %2118 = vmatprep.mubr.f32.mxu0 0.0
      %2119 = vmatmul.mubr.f32.gmra.mrb[0].mxu0 %v2007
      %v2120 = vpop.f32.mrb[0].mxu0
      %v2121 = vadd.f32 0.0, %v2120
      %v2122 = vpop.f32.mrb[0].mxu0
      %2123 = vmatprep.mubr.f32.mxu0 0.0
      %2124 = vmatmul.mubr.f32.gmra.mrb[0].mxu0 %v2010
      %v2125 = vpop.f32.mrb[0].mxu0
      %v2126 = vadd.f32 0.0, %v2125
      %v2127 = vpop.f32.mrb[0].mxu0
      %2128 = vmatprep.mubr.f32.mxu0 0.0
      %2129 = vmatmul.mubr.f32.gmra.mrb[0].mxu0 %v2013
      %v2130 = vpop.f32.mrb[0].mxu0
      %v2131 = vadd.f32 0.0, %v2130
      %v2132 = vpop.f32.mrb[0].mxu0
      %2133 = vmatprep.mubr.f32.mxu0 0.0
      %2134 = vmatmul.mubr.f32.gmra.mrb[0].mxu0 %v2016
      %v2135 = vpop.f32.mrb[0].mxu0
      %v2136 = vadd.f32 0.0, %v2135
      %v2137 = vpop.f32.mrb[0].mxu0
      %2138 = vmatprep.mubr.f32.mxu0 0.0
      %2139 = vmatmul.mubr.f32.gmra.mrb[0].mxu0 %v2019
      %v2140 = vpop.f32.mrb[0].mxu0
      %v2141 = vadd.f32 0.0, %v2140
      %v2142 = vpop.f32.mrb[0].mxu0
      %2143 = vmatprep.mubr.f32.mxu0 0.0
      %2144 = vmatmul.mubr.f32.gmra.mrb[0].mxu0 %v2022
      %v2145 = vpop.f32.mrb[0].mxu0
      %v2146 = vadd.f32 0.0, %v2145
      %v2147 = vpop.f32.mrb[0].mxu0
      %2148 = vmatprep.mubr.f32.mxu0 0.0
      %2149 = vmatmul.mubr.f32.gmra.mrb[0].mxu0 %v2025
      %v2150 = vpop.f32.mrb[0].mxu0
      %v2151 = vadd.f32 0.0, %v2150
      %v2152 = vpop.f32.mrb[0].mxu0
      %2153 = vmatprep.mubr.f32.mxu0 0.0
      %2154 = vmatmul.mubr.f32.gmra.mrb[0].mxu0 %v2028
      %v2155 = vpop.f32.mrb[0].mxu0
      %v2156 = vadd.f32 0.0, %v2155
      %v2157 = vpop.f32.mrb[0].mxu0
      %2158 = vmatprep.mubr.f32.mxu0 0.0
      %2159 = vmatmul.mubr.f32.gmra.mrb[0].mxu0 %v2031
      %v2160 = vpop.f32.mrb[0].mxu0
      %v2161 = vadd.f32 0.0, %v2160
      %v2162 = vpop.f32.mrb[0].mxu0
      %2163 = vmatprep.mubr.f32.mxu0 0.0
      %2164 = vmatmul.mubr.f32.gmra.mrb[0].mxu0 %v2034
      %v2165 = vpop.f32.mrb[0].mxu0
      %v2166 = vadd.f32 0.0, %v2165
      %v2167 = vpop.f32.mrb[0].mxu0
      %2168 = vmatprep.mubr.f32.mxu0 0.0
      %2169 = vmatmul.mubr.f32.gmra.mrb[0].mxu0 %v2037
      %v2170 = vpop.f32.mrb[0].mxu0
      %v2171 = vadd.f32 0.0, %v2170
      %v2172 = vpop.f32.mrb[0].mxu0
      %2173 = vmatprep.mubr.f32.mxu0 0.0
      %2174 = vmatmul.mubr.f32.gmra.mrb[0].mxu0 %v2040
      %v2175 = vpop.f32.mrb[0].mxu0
      %v2176 = vadd.f32 0.0, %v2175
      %v2177 = vpop.f32.mrb[0].mxu0
      %2178 = vmatprep.mubr.f32.mxu0 0.0
      %2179 = vmatmul.mubr.f32.gmra.mrb[0].mxu0 %v2043
      %v2180 = vpop.f32.mrb[0].mxu0
      %v2181 = vadd.f32 0.0, %v2180
      %v2182 = vpop.f32.mrb[0].mxu0
      %2183 = vmatprep.mubr.f32.mxu0 0.0
      %2184 = vmatmul.mubr.f32.gmra.mrb[0].mxu0 %v2046
      %v2185 = vpop.f32.mrb[0].mxu0
      %v2186 = vadd.f32 0.0, %v2185
      %v2187 = vpop.f32.mrb[0].mxu0
      %2188 = vmatprep.mubr.f32.mxu0 0.0
      %2189 = vmatmul.mubr.f32.gmra.mrb[0].mxu0 %v2049
      %v2190 = vpop.f32.mrb[0].mxu0
      %v2191 = vadd.f32 0.0, %v2190
      %v2192 = vpop.f32.mrb[0].mxu0
      %2193 = vmatprep.mubr.f32.mxu0 0.0
      %2194 = vmatmul.mubr.f32.gmra.mrb[0].mxu0 %v2052
      %v2195 = vpop.f32.mrb[0].mxu0
      %v2196 = vadd.f32 0.0, %v2195
      %v2197 = vpop.f32.mrb[0].mxu0
      %2198 = vdwg.mxu0
      %v2199 = vadd.f32 %v1969, %v2121
      %v2200 = vadd.f32 %v1970, %v2126
      %v2201 = vadd.f32 %v1971, %v2131
      %v2202 = vadd.f32 %v1972, %v2136
      %v2203 = vadd.f32 %v1973, %v2141
      %v2204 = vadd.f32 %v1974, %v2146
      %v2205 = vadd.f32 %v1975, %v2151
      %v2206 = vadd.f32 %v1976, %v2156
      %v2207 = vadd.f32 %v1977, %v2161
      %v2208 = vadd.f32 %v1978, %v2166
      %v2209 = vadd.f32 %v1979, %v2171
      %v2210 = vadd.f32 %v1980, %v2176
      %v2211 = vadd.f32 %v1981, %v2181
      %v2212 = vadd.f32 %v1982, %v2186
      %v2213 = vadd.f32 %v1983, %v2191
      %v2214 = vadd.f32 %v1984, %v2196
      %v2215 = vld [vmem:[%s1987 + $0x1] sm:$0xff]
      %v2216 = vld [vmem:[%s1987 + $0x9] sm:$0xff]
      %v2217 = vld [vmem:[%s1987 + $0x19] sm:$0xff]
      %v2218 = vld [vmem:[%s1987 + $0x21] sm:$0xff]
      %v2219 = vld [vmem:[%s1987 + $0x31] sm:$0xff]
      %v2220 = vld [vmem:[%s1987 + $0x39] sm:$0xff]
      %v2221 = vld [vmem:[%s1987 + $0x49] sm:$0xff]
      %v2222 = vld [vmem:[%s1987 + $0x51] sm:$0xff]
      %v2223 = vld [vmem:[%s1987 + $0x61] sm:$0xff]
      %v2224 = vld [vmem:[%s1987 + $0x69] sm:$0xff]
      %v2225 = vld [vmem:[%s1987 + $0x79] sm:$0xff]
      %v2226 = vld [vmem:[%s1987 + $0x81] sm:$0xff]
      %v2227 = vld [vmem:[%s1987 + $0x91] sm:$0xff]
      %v2228 = vld [vmem:[%s1987 + $0x99] sm:$0xff]
      %v2229 = vld [vmem:[%s1987 + $0xa9] sm:$0xff]
      %v2230 = vld [vmem:[%s1987 + $0xb1] sm:$0xff]
      %s2231 = scalar_lea.vmem %s397, 56
      %v2232 = vld [vmem:[%s2231] sm:$0xff]
      %v2234 = vsel %vm687, %v2215, 0
      %v2237 = vsel %vm687, %v2216, 0
      %v2240 = vsel %vm687, %v2217, 0
      %v2243 = vsel %vm687, %v2218, 0
      %v2246 = vsel %vm687, %v2219, 0
      %v2249 = vsel %vm687, %v2220, 0
      %v2252 = vsel %vm687, %v2221, 0
      %v2255 = vsel %vm687, %v2222, 0
      %v2258 = vsel %vm687, %v2223, 0
      %v2261 = vsel %vm687, %v2224, 0
      %v2264 = vsel %vm687, %v2225, 0
      %v2267 = vsel %vm687, %v2226, 0
      %v2270 = vsel %vm687, %v2227, 0
      %v2273 = vsel %vm687, %v2228, 0
      %v2276 = vsel %vm687, %v2229, 0
      %v2279 = vsel %vm687, %v2230, 0
      %2281 = vmatprep.subr.mxu0 0.0
      %2282 = vmatpush1.msra.mxu0 %v2232
      %2283 = vmatprep.subr.mxu0 0.0
      %2284 = vmatpush1.msra.mxu0 0.0
      %2285 = vmatprep.subr.mxu0 0.0
      %2286 = vmatpush1.msra.mxu0 0.0
      %2287 = vmatprep.subr.mxu0 0.0
      %2288 = vmatpush1.msra.mxu0 0.0
      %2289 = vmatprep.subr.mxu0 0.0
      %2290 = vmatpush1.msra.mxu0 0.0
      %2291 = vmatprep.subr.mxu0 0.0
      %2292 = vmatpush1.msra.mxu0 0.0
      %2293 = vmatprep.subr.mxu0 0.0
      %2294 = vmatpush1.msra.mxu0 0.0
      %2295 = vmatprep.subr.mxu0 0.0
      %2296 = vmatpush1.msra.mxu0 0.0
      %2297 = vmatprep.subr.mxu0 0.0
      %2298 = vmatpush1.msra.mxu0 0.0
      %2299 = vmatprep.subr.mxu0 0.0
      %2300 = vmatpush1.msra.mxu0 0.0
      %2301 = vmatprep.subr.mxu0 0.0
      %2302 = vmatpush1.msra.mxu0 0.0
      %2303 = vmatprep.subr.mxu0 0.0
      %2304 = vmatpush1.msra.mxu0 0.0
      %2305 = vmatprep.subr.mxu0 0.0
      %2306 = vmatpush1.msra.mxu0 0.0
      %2307 = vmatprep.subr.mxu0 0.0
      %2308 = vmatpush1.msra.mxu0 0.0
      %2309 = vmatprep.subr.mxu0 0.0
      %2310 = vmatpush1.msra.mxu0 0.0
      %2311 = vmatprep.subr.mxu0 0.0
      %2312 = vmatpush1.msra.mxu0 0.0
      %2313 = vmatprep.subr.mxu0 0.0
      %2314 = vmatpush1.msra.mxu0 0.0
      %2315 = vmatprep.subr.mxu0 0.0
      %2316 = vmatpush1.msra.mxu0 0.0
      %2317 = vmatprep.subr.mxu0 0.0
      %2318 = vmatpush1.msra.mxu0 0.0
      %2319 = vmatprep.subr.mxu0 0.0
      %2320 = vmatpush1.msra.mxu0 0.0
      %2321 = vmatprep.subr.mxu0 0.0
      %2322 = vmatpush1.msra.mxu0 0.0
      %2323 = vmatprep.subr.mxu0 0.0
      %2324 = vmatpush1.msra.mxu0 0.0
      %2325 = vmatprep.subr.mxu0 0.0
      %2326 = vmatpush1.msra.mxu0 0.0
      %2327 = vmatprep.subr.mxu0 0.0
      %2328 = vmatpush1.msra.mxu0 0.0
      %2329 = vmatprep.subr.mxu0 0.0
      %2330 = vmatpush1.msra.mxu0 0.0
      %2331 = vmatprep.subr.mxu0 0.0
      %2332 = vmatpush1.msra.mxu0 0.0
      %2333 = vmatprep.subr.mxu0 0.0
      %2334 = vmatpush1.msra.mxu0 0.0
      %2335 = vmatprep.subr.mxu0 0.0
      %2336 = vmatpush1.msra.mxu0 0.0
      %2337 = vmatprep.subr.mxu0 0.0
      %2338 = vmatpush1.msra.mxu0 0.0
      %2339 = vmatprep.subr.mxu0 0.0
      %2340 = vmatpush1.msra.mxu0 0.0
      %2341 = vmatprep.subr.mxu0 0.0
      %2342 = vmatpush1.msra.mxu0 0.0
      %2343 = vmatprep.subr.mxu0 0.0
      %2344 = vmatpush1.msra.mxu0 0.0
      %2345 = vmatprep.mubr.f32.mxu0 0.0
      %2346 = vmatmul.mubr.f32.gmra.mrb[0].mxu0 %v2234
      %v2347 = vpop.f32.mrb[0].mxu0
      %v2348 = vadd.f32 0.0, %v2347
      %v2349 = vpop.f32.mrb[0].mxu0
      %2350 = vmatprep.mubr.f32.mxu0 0.0
      %2351 = vmatmul.mubr.f32.gmra.mrb[0].mxu0 %v2237
      %v2352 = vpop.f32.mrb[0].mxu0
      %v2353 = vadd.f32 0.0, %v2352
      %v2354 = vpop.f32.mrb[0].mxu0
      %2355 = vmatprep.mubr.f32.mxu0 0.0
      %2356 = vmatmul.mubr.f32.gmra.mrb[0].mxu0 %v2240
      %v2357 = vpop.f32.mrb[0].mxu0
      %v2358 = vadd.f32 0.0, %v2357
      %v2359 = vpop.f32.mrb[0].mxu0
      %2360 = vmatprep.mubr.f32.mxu0 0.0
      %2361 = vmatmul.mubr.f32.gmra.mrb[0].mxu0 %v2243
      %v2362 = vpop.f32.mrb[0].mxu0
      %v2363 = vadd.f32 0.0, %v2362
      %v2364 = vpop.f32.mrb[0].mxu0
      %2365 = vmatprep.mubr.f32.mxu0 0.0
      %2366 = vmatmul.mubr.f32.gmra.mrb[0].mxu0 %v2246
      %v2367 = vpop.f32.mrb[0].mxu0
      %v2368 = vadd.f32 0.0, %v2367
      %v2369 = vpop.f32.mrb[0].mxu0
      %2370 = vmatprep.mubr.f32.mxu0 0.0
      %2371 = vmatmul.mubr.f32.gmra.mrb[0].mxu0 %v2249
      %v2372 = vpop.f32.mrb[0].mxu0
      %v2373 = vadd.f32 0.0, %v2372
      %v2374 = vpop.f32.mrb[0].mxu0
      %2375 = vmatprep.mubr.f32.mxu0 0.0
      %2376 = vmatmul.mubr.f32.gmra.mrb[0].mxu0 %v2252
      %v2377 = vpop.f32.mrb[0].mxu0
      %v2378 = vadd.f32 0.0, %v2377
      %v2379 = vpop.f32.mrb[0].mxu0
      %2380 = vmatprep.mubr.f32.mxu0 0.0
      %2381 = vmatmul.mubr.f32.gmra.mrb[0].mxu0 %v2255
      %v2382 = vpop.f32.mrb[0].mxu0
      %v2383 = vadd.f32 0.0, %v2382
      %v2384 = vpop.f32.mrb[0].mxu0
      %2385 = vmatprep.mubr.f32.mxu0 0.0
      %2386 = vmatmul.mubr.f32.gmra.mrb[0].mxu0 %v2258
      %v2387 = vpop.f32.mrb[0].mxu0
      %v2388 = vadd.f32 0.0, %v2387
      %v2389 = vpop.f32.mrb[0].mxu0
      %2390 = vmatprep.mubr.f32.mxu0 0.0
      %2391 = vmatmul.mubr.f32.gmra.mrb[0].mxu0 %v2261
      %v2392 = vpop.f32.mrb[0].mxu0
      %v2393 = vadd.f32 0.0, %v2392
      %v2394 = vpop.f32.mrb[0].mxu0
      %2395 = vmatprep.mubr.f32.mxu0 0.0
      %2396 = vmatmul.mubr.f32.gmra.mrb[0].mxu0 %v2264
      %v2397 = vpop.f32.mrb[0].mxu0
      %v2398 = vadd.f32 0.0, %v2397
      %v2399 = vpop.f32.mrb[0].mxu0
      %2400 = vmatprep.mubr.f32.mxu0 0.0
      %2401 = vmatmul.mubr.f32.gmra.mrb[0].mxu0 %v2267
      %v2402 = vpop.f32.mrb[0].mxu0
      %v2403 = vadd.f32 0.0, %v2402
      %v2404 = vpop.f32.mrb[0].mxu0
      %2405 = vmatprep.mubr.f32.mxu0 0.0
      %2406 = vmatmul.mubr.f32.gmra.mrb[0].mxu0 %v2270
      %v2407 = vpop.f32.mrb[0].mxu0
      %v2408 = vadd.f32 0.0, %v2407
      %v2409 = vpop.f32.mrb[0].mxu0
      %2410 = vmatprep.mubr.f32.mxu0 0.0
      %2411 = vmatmul.mubr.f32.gmra.mrb[0].mxu0 %v2273
      %v2412 = vpop.f32.mrb[0].mxu0
      %v2413 = vadd.f32 0.0, %v2412
      %v2414 = vpop.f32.mrb[0].mxu0
      %2415 = vmatprep.mubr.f32.mxu0 0.0
      %2416 = vmatmul.mubr.f32.gmra.mrb[0].mxu0 %v2276
      %v2417 = vpop.f32.mrb[0].mxu0
      %v2418 = vadd.f32 0.0, %v2417
      %v2419 = vpop.f32.mrb[0].mxu0
      %2420 = vmatprep.mubr.f32.mxu0 0.0
      %2421 = vmatmul.mubr.f32.gmra.mrb[0].mxu0 %v2279
      %v2422 = vpop.f32.mrb[0].mxu0
      %v2423 = vadd.f32 0.0, %v2422
      %v2424 = vpop.f32.mrb[0].mxu0
      %2425 = vdwg.mxu0
      %v2426 = vadd.f32 %v2199, %v2348
      %v2427 = vadd.f32 %v2200, %v2353
      %v2428 = vadd.f32 %v2201, %v2358
      %v2429 = vadd.f32 %v2202, %v2363
      %v2430 = vadd.f32 %v2203, %v2368
      %v2431 = vadd.f32 %v2204, %v2373
      %v2432 = vadd.f32 %v2205, %v2378
      %v2433 = vadd.f32 %v2206, %v2383
      %v2434 = vadd.f32 %v2207, %v2388
      %v2435 = vadd.f32 %v2208, %v2393
      %v2436 = vadd.f32 %v2209, %v2398
      %v2437 = vadd.f32 %v2210, %v2403
      %v2438 = vadd.f32 %v2211, %v2408
      %v2439 = vadd.f32 %v2212, %v2413
      %v2440 = vadd.f32 %v2213, %v2418
      %v2441 = vadd.f32 %v2214, %v2423
      %v2442 = vld [vmem:[%s1987 + $0x2] sm:$0xff]
      %v2443 = vld [vmem:[%s1987 + $0xa] sm:$0xff]
      %v2444 = vld [vmem:[%s1987 + $0x1a] sm:$0xff]
      %v2445 = vld [vmem:[%s1987 + $0x22] sm:$0xff]
      %v2446 = vld [vmem:[%s1987 + $0x32] sm:$0xff]
      %v2447 = vld [vmem:[%s1987 + $0x3a] sm:$0xff]
      %v2448 = vld [vmem:[%s1987 + $0x4a] sm:$0xff]
      %v2449 = vld [vmem:[%s1987 + $0x52] sm:$0xff]
      %v2450 = vld [vmem:[%s1987 + $0x62] sm:$0xff]
      %v2451 = vld [vmem:[%s1987 + $0x6a] sm:$0xff]
      %v2452 = vld [vmem:[%s1987 + $0x7a] sm:$0xff]
      %v2453 = vld [vmem:[%s1987 + $0x82] sm:$0xff]
      %v2454 = vld [vmem:[%s1987 + $0x92] sm:$0xff]
      %v2455 = vld [vmem:[%s1987 + $0x9a] sm:$0xff]
      %v2456 = vld [vmem:[%s1987 + $0xaa] sm:$0xff]
      %v2457 = vld [vmem:[%s1987 + $0xb2] sm:$0xff]
      %s2458 = scalar_lea.vmem %s397, 64
      %v2459 = vld [vmem:[%s2458] sm:$0xff]
      %v2461 = vsel %vm687, %v2442, 0
      %v2464 = vsel %vm687, %v2443, 0
      %v2467 = vsel %vm687, %v2444, 0
      %v2470 = vsel %vm687, %v2445, 0
      %v2473 = vsel %vm687, %v2446, 0
      %v2476 = vsel %vm687, %v2447, 0
      %v2479 = vsel %vm687, %v2448, 0
      %v2482 = vsel %vm687, %v2449, 0
      %v2485 = vsel %vm687, %v2450, 0
      %v2488 = vsel %vm687, %v2451, 0
      %v2491 = vsel %vm687, %v2452, 0
      %v2494 = vsel %vm687, %v2453, 0
      %v2497 = vsel %vm687, %v2454, 0
      %v2500 = vsel %vm687, %v2455, 0
      %v2503 = vsel %vm687, %v2456, 0
      %v2506 = vsel %vm687, %v2457, 0
      %2508 = vmatprep.subr.mxu0 0.0
      %2509 = vmatpush1.msra.mxu0 %v2459
      %2510 = vmatprep.subr.mxu0 0.0
      %2511 = vmatpush1.msra.mxu0 0.0
      %2512 = vmatprep.subr.mxu0 0.0
      %2513 = vmatpush1.msra.mxu0 0.0
      %2514 = vmatprep.subr.mxu0 0.0
      %2515 = vmatpush1.msra.mxu0 0.0
      %2516 = vmatprep.subr.mxu0 0.0
      %2517 = vmatpush1.msra.mxu0 0.0
      %2518 = vmatprep.subr.mxu0 0.0
      %2519 = vmatpush1.msra.mxu0 0.0
      %2520 = vmatprep.subr.mxu0 0.0
      %2521 = vmatpush1.msra.mxu0 0.0
      %2522 = vmatprep.subr.mxu0 0.0
      %2523 = vmatpush1.msra.mxu0 0.0
      %2524 = vmatprep.subr.mxu0 0.0
      %2525 = vmatpush1.msra.mxu0 0.0
      %2526 = vmatprep.subr.mxu0 0.0
      %2527 = vmatpush1.msra.mxu0 0.0
      %2528 = vmatprep.subr.mxu0 0.0
      %2529 = vmatpush1.msra.mxu0 0.0
      %2530 = vmatprep.subr.mxu0 0.0
      %2531 = vmatpush1.msra.mxu0 0.0
      %2532 = vmatprep.subr.mxu0 0.0
      %2533 = vmatpush1.msra.mxu0 0.0
      %2534 = vmatprep.subr.mxu0 0.0
      %2535 = vmatpush1.msra.mxu0 0.0
      %2536 = vmatprep.subr.mxu0 0.0
      %2537 = vmatpush1.msra.mxu0 0.0
      %2538 = vmatprep.subr.mxu0 0.0
      %2539 = vmatpush1.msra.mxu0 0.0
      %2540 = vmatprep.subr.mxu0 0.0
      %2541 = vmatpush1.msra.mxu0 0.0
      %2542 = vmatprep.subr.mxu0 0.0
      %2543 = vmatpush1.msra.mxu0 0.0
      %2544 = vmatprep.subr.mxu0 0.0
      %2545 = vmatpush1.msra.mxu0 0.0
      %2546 = vmatprep.subr.mxu0 0.0
      %2547 = vmatpush1.msra.mxu0 0.0
      %2548 = vmatprep.subr.mxu0 0.0
      %2549 = vmatpush1.msra.mxu0 0.0
      %2550 = vmatprep.subr.mxu0 0.0
      %2551 = vmatpush1.msra.mxu0 0.0
      %2552 = vmatprep.subr.mxu0 0.0
      %2553 = vmatpush1.msra.mxu0 0.0
      %2554 = vmatprep.subr.mxu0 0.0
      %2555 = vmatpush1.msra.mxu0 0.0
      %2556 = vmatprep.subr.mxu0 0.0
      %2557 = vmatpush1.msra.mxu0 0.0
      %2558 = vmatprep.subr.mxu0 0.0
      %2559 = vmatpush1.msra.mxu0 0.0
      %2560 = vmatprep.subr.mxu0 0.0
      %2561 = vmatpush1.msra.mxu0 0.0
      %2562 = vmatprep.subr.mxu0 0.0
      %2563 = vmatpush1.msra.mxu0 0.0
      %2564 = vmatprep.subr.mxu0 0.0
      %2565 = vmatpush1.msra.mxu0 0.0
      %2566 = vmatprep.subr.mxu0 0.0
      %2567 = vmatpush1.msra.mxu0 0.0
      %2568 = vmatprep.subr.mxu0 0.0
      %2569 = vmatpush1.msra.mxu0 0.0
      %2570 = vmatprep.subr.mxu0 0.0
      %2571 = vmatpush1.msra.mxu0 0.0
      %2572 = vmatprep.mubr.f32.mxu0 0.0
      %2573 = vmatmul.mubr.f32.gmra.mrb[0].mxu0 %v2461
      %v2574 = vpop.f32.mrb[0].mxu0
      %v2575 = vadd.f32 0.0, %v2574
      %v2576 = vpop.f32.mrb[0].mxu0
      %2577 = vmatprep.mubr.f32.mxu0 0.0
      %2578 = vmatmul.mubr.f32.gmra.mrb[0].mxu0 %v2464
      %v2579 = vpop.f32.mrb[0].mxu0
      %v2580 = vadd.f32 0.0, %v2579
      %v2581 = vpop.f32.mrb[0].mxu0
      %2582 = vmatprep.mubr.f32.mxu0 0.0
      %2583 = vmatmul.mubr.f32.gmra.mrb[0].mxu0 %v2467
      %v2584 = vpop.f32.mrb[0].mxu0
      %v2585 = vadd.f32 0.0, %v2584
      %v2586 = vpop.f32.mrb[0].mxu0
      %2587 = vmatprep.mubr.f32.mxu0 0.0
      %2588 = vmatmul.mubr.f32.gmra.mrb[0].mxu0 %v2470
      %v2589 = vpop.f32.mrb[0].mxu0
      %v2590 = vadd.f32 0.0, %v2589
      %v2591 = vpop.f32.mrb[0].mxu0
      %2592 = vmatprep.mubr.f32.mxu0 0.0
      %2593 = vmatmul.mubr.f32.gmra.mrb[0].mxu0 %v2473
      %v2594 = vpop.f32.mrb[0].mxu0
      %v2595 = vadd.f32 0.0, %v2594
      %v2596 = vpop.f32.mrb[0].mxu0
      %2597 = vmatprep.mubr.f32.mxu0 0.0
      %2598 = vmatmul.mubr.f32.gmra.mrb[0].mxu0 %v2476
      %v2599 = vpop.f32.mrb[0].mxu0
      %v2600 = vadd.f32 0.0, %v2599
      %v2601 = vpop.f32.mrb[0].mxu0
      %2602 = vmatprep.mubr.f32.mxu0 0.0
      %2603 = vmatmul.mubr.f32.gmra.mrb[0].mxu0 %v2479
      %v2604 = vpop.f32.mrb[0].mxu0
      %v2605 = vadd.f32 0.0, %v2604
      %v2606 = vpop.f32.mrb[0].mxu0
      %2607 = vmatprep.mubr.f32.mxu0 0.0
      %2608 = vmatmul.mubr.f32.gmra.mrb[0].mxu0 %v2482
      %v2609 = vpop.f32.mrb[0].mxu0
      %v2610 = vadd.f32 0.0, %v2609
      %v2611 = vpop.f32.mrb[0].mxu0
      %2612 = vmatprep.mubr.f32.mxu0 0.0
      %2613 = vmatmul.mubr.f32.gmra.mrb[0].mxu0 %v2485
      %v2614 = vpop.f32.mrb[0].mxu0
      %v2615 = vadd.f32 0.0, %v2614
      %v2616 = vpop.f32.mrb[0].mxu0
      %2617 = vmatprep.mubr.f32.mxu0 0.0
      %2618 = vmatmul.mubr.f32.gmra.mrb[0].mxu0 %v2488
      %v2619 = vpop.f32.mrb[0].mxu0
      %v2620 = vadd.f32 0.0, %v2619
      %v2621 = vpop.f32.mrb[0].mxu0
      %2622 = vmatprep.mubr.f32.mxu0 0.0
      %2623 = vmatmul.mubr.f32.gmra.mrb[0].mxu0 %v2491
      %v2624 = vpop.f32.mrb[0].mxu0
      %v2625 = vadd.f32 0.0, %v2624
      %v2626 = vpop.f32.mrb[0].mxu0
      %2627 = vmatprep.mubr.f32.mxu0 0.0
      %2628 = vmatmul.mubr.f32.gmra.mrb[0].mxu0 %v2494
      %v2629 = vpop.f32.mrb[0].mxu0
      %v2630 = vadd.f32 0.0, %v2629
      %v2631 = vpop.f32.mrb[0].mxu0
      %2632 = vmatprep.mubr.f32.mxu0 0.0
      %2633 = vmatmul.mubr.f32.gmra.mrb[0].mxu0 %v2497
      %v2634 = vpop.f32.mrb[0].mxu0
      %v2635 = vadd.f32 0.0, %v2634
      %v2636 = vpop.f32.mrb[0].mxu0
      %2637 = vmatprep.mubr.f32.mxu0 0.0
      %2638 = vmatmul.mubr.f32.gmra.mrb[0].mxu0 %v2500
      %v2639 = vpop.f32.mrb[0].mxu0
      %v2640 = vadd.f32 0.0, %v2639
      %v2641 = vpop.f32.mrb[0].mxu0
      %2642 = vmatprep.mubr.f32.mxu0 0.0
      %2643 = vmatmul.mubr.f32.gmra.mrb[0].mxu0 %v2503
      %v2644 = vpop.f32.mrb[0].mxu0
      %v2645 = vadd.f32 0.0, %v2644
      %v2646 = vpop.f32.mrb[0].mxu0
      %2647 = vmatprep.mubr.f32.mxu0 0.0
      %2648 = vmatmul.mubr.f32.gmra.mrb[0].mxu0 %v2506
      %v2649 = vpop.f32.mrb[0].mxu0
      %v2650 = vadd.f32 0.0, %v2649
      %v2651 = vpop.f32.mrb[0].mxu0
      %2652 = vdwg.mxu0
      %v2653 = vadd.f32 %v2426, %v2575
      %v2654 = vadd.f32 %v2427, %v2580
      %v2655 = vadd.f32 %v2428, %v2585
      %v2656 = vadd.f32 %v2429, %v2590
      %v2657 = vadd.f32 %v2430, %v2595
      %v2658 = vadd.f32 %v2431, %v2600
      %v2659 = vadd.f32 %v2432, %v2605
      %v2660 = vadd.f32 %v2433, %v2610
      %v2661 = vadd.f32 %v2434, %v2615
      %v2662 = vadd.f32 %v2435, %v2620
      %v2663 = vadd.f32 %v2436, %v2625
      %v2664 = vadd.f32 %v2437, %v2630
      %v2665 = vadd.f32 %v2438, %v2635
      %v2666 = vadd.f32 %v2439, %v2640
      %v2667 = vadd.f32 %v2440, %v2645
      %v2668 = vadd.f32 %v2441, %v2650
      %v2669 = vld [vmem:[%s400] sm:$0x1]
      %v2671 = vlaneseq
      %v2672 = vshrl.u32 %v2671, 7
      %v2673 = vsub.s32 0, %v2672
      %v2674 = vrot.slane %v2669, %v2673
      %v2676 = vadd.f32 %v2653, %v2674
      %v2677 = vadd.f32 %v2654, %v2674
      %v2678 = vadd.f32 %v2655, %v2674
      %v2679 = vadd.f32 %v2656, %v2674
      %v2680 = vadd.f32 %v2657, %v2674
      %v2681 = vadd.f32 %v2658, %v2674
      %v2682 = vadd.f32 %v2659, %v2674
      %v2683 = vadd.f32 %v2660, %v2674
      %v2684 = vadd.f32 %v2661, %v2674
      %v2685 = vadd.f32 %v2662, %v2674
      %v2686 = vadd.f32 %v2663, %v2674
      %v2687 = vadd.f32 %v2664, %v2674
      %v2688 = vadd.f32 %v2665, %v2674
      %v2689 = vadd.f32 %v2666, %v2674
      %v2690 = vadd.f32 %v2667, %v2674
      %v2691 = vadd.f32 %v2668, %v2674
      %s2692 = smul.u32 %s649, 16
      %s2693 = scalar_lea.vmem %s405, %s2692
      %v2694 = vld [vmem:[%s2693] sm:$0xff]
      %v2695 = vld [vmem:[%s2693 + $0x8] sm:$0xff]
      %v2696 = vld [vmem:[%s2693 + $0x10] sm:$0xff]
      %v2697 = vld [vmem:[%s2693 + $0x18] sm:$0xff]
      %v2698 = vld [vmem:[%s2693 + $0x20] sm:$0xff]
      %v2699 = vld [vmem:[%s2693 + $0x28] sm:$0xff]
      %v2700 = vld [vmem:[%s2693 + $0x30] sm:$0xff]
      %v2701 = vld [vmem:[%s2693 + $0x38] sm:$0xff]
      %v2702 = vld [vmem:[%s2693 + $0x40] sm:$0xff]
      %v2703 = vld [vmem:[%s2693 + $0x48] sm:$0xff]
      %v2704 = vld [vmem:[%s2693 + $0x50] sm:$0xff]
      %v2705 = vld [vmem:[%s2693 + $0x58] sm:$0xff]
      %v2706 = vld [vmem:[%s2693 + $0x60] sm:$0xff]
      %v2707 = vld [vmem:[%s2693 + $0x68] sm:$0xff]
      %v2708 = vld [vmem:[%s2693 + $0x70] sm:$0xff]
      %v2709 = vld [vmem:[%s2693 + $0x78] sm:$0xff]
      %v2710 = vld [vmem:[%s409] sm:$0xf]
      %vm2711 = vcmask 31744
      %v2713 = vsel %vm2711, %v2694, 0
      %v2716 = vsel %vm2711, %v2695, 0
      %v2719 = vsel %vm2711, %v2696, 0
      %v2722 = vsel %vm2711, %v2697, 0
      %v2725 = vsel %vm2711, %v2698, 0
      %v2728 = vsel %vm2711, %v2699, 0
      %v2731 = vsel %vm2711, %v2700, 0
      %v2734 = vsel %vm2711, %v2701, 0
      %v2737 = vsel %vm2711, %v2702, 0
      %v2740 = vsel %vm2711, %v2703, 0
      %v2743 = vsel %vm2711, %v2704, 0
      %v2746 = vsel %vm2711, %v2705, 0
      %v2749 = vsel %vm2711, %v2706, 0
      %v2752 = vsel %vm2711, %v2707, 0
      %v2755 = vsel %vm2711, %v2708, 0
      %v2758 = vsel %vm2711, %v2709, 0
      %vm2760 = vcmask 1043456
      %v2762 = vsel %vm2760, %v2710, 0
      %2764 = vmatprep.subr.mxu0 0.0
      %2765 = vmatpush1.msra.mxu0 %v2762
      %2766 = vmatprep.subr.mxu0 0.0
      %2767 = vmatpush1.msra.mxu0 0.0
      %2768 = vmatprep.subr.mxu0 0.0
      %2769 = vmatpush1.msra.mxu0 0.0
      %2770 = vmatprep.subr.mxu0 0.0
      %2771 = vmatpush1.msra.mxu0 0.0
      %2772 = vmatprep.subr.mxu0 0.0
      %2773 = vmatpush1.msra.mxu0 0.0
      %2774 = vmatprep.subr.mxu0 0.0
      %2775 = vmatpush1.msra.mxu0 0.0
      %2776 = vmatprep.subr.mxu0 0.0
      %2777 = vmatpush1.msra.mxu0 0.0
      %2778 = vmatprep.subr.mxu0 0.0
      %2779 = vmatpush1.msra.mxu0 0.0
      %2780 = vmatprep.subr.mxu0 0.0
      %2781 = vmatpush1.msra.mxu0 0.0
      %2782 = vmatprep.subr.mxu0 0.0
      %2783 = vmatpush1.msra.mxu0 0.0
      %2784 = vmatprep.subr.mxu0 0.0
      %2785 = vmatpush1.msra.mxu0 0.0
      %2786 = vmatprep.subr.mxu0 0.0
      %2787 = vmatpush1.msra.mxu0 0.0
      %2788 = vmatprep.subr.mxu0 0.0
      %2789 = vmatpush1.msra.mxu0 0.0
      %2790 = vmatprep.subr.mxu0 0.0
      %2791 = vmatpush1.msra.mxu0 0.0
      %2792 = vmatprep.subr.mxu0 0.0
      %2793 = vmatpush1.msra.mxu0 0.0
      %2794 = vmatprep.subr.mxu0 0.0
      %2795 = vmatpush1.msra.mxu0 0.0
      %2796 = vmatprep.subr.mxu0 0.0
      %2797 = vmatpush1.msra.mxu0 0.0
      %2798 = vmatprep.subr.mxu0 0.0
      %2799 = vmatpush1.msra.mxu0 0.0
      %2800 = vmatprep.subr.mxu0 0.0
      %2801 = vmatpush1.msra.mxu0 0.0
      %2802 = vmatprep.subr.mxu0 0.0
      %2803 = vmatpush1.msra.mxu0 0.0
      %2804 = vmatprep.subr.mxu0 0.0
      %2805 = vmatpush1.msra.mxu0 0.0
      %2806 = vmatprep.subr.mxu0 0.0
      %2807 = vmatpush1.msra.mxu0 0.0
      %2808 = vmatprep.subr.mxu0 0.0
      %2809 = vmatpush1.msra.mxu0 0.0
      %2810 = vmatprep.subr.mxu0 0.0
      %2811 = vmatpush1.msra.mxu0 0.0
      %2812 = vmatprep.subr.mxu0 0.0
      %2813 = vmatpush1.msra.mxu0 0.0
      %2814 = vmatprep.subr.mxu0 0.0
      %2815 = vmatpush1.msra.mxu0 0.0
      %2816 = vmatprep.subr.mxu0 0.0
      %2817 = vmatpush1.msra.mxu0 0.0
      %2818 = vmatprep.subr.mxu0 0.0
      %2819 = vmatpush1.msra.mxu0 0.0
      %2820 = vmatprep.subr.mxu0 0.0
      %2821 = vmatpush1.msra.mxu0 0.0
      %2822 = vmatprep.subr.mxu0 0.0
      %2823 = vmatpush1.msra.mxu0 0.0
      %2824 = vmatprep.subr.mxu0 0.0
      %2825 = vmatpush1.msra.mxu0 0.0
      %2826 = vmatprep.subr.mxu0 0.0
      %2827 = vmatpush1.msra.mxu0 0.0
      %2828 = vmatprep.mubr.f32.mxu0 0.0
      %2829 = vmatmul.mubr.f32.gmra.mrb[0].mxu0 %v2713
      %v2830 = vpop.f32.mrb[0].mxu0
      %v2831 = vadd.f32 0.0, %v2830
      %v2832 = vpop.f32.mrb[0].mxu0
      %2833 = vmatprep.mubr.f32.mxu0 0.0
      %2834 = vmatmul.mubr.f32.gmra.mrb[0].mxu0 %v2716
      %v2835 = vpop.f32.mrb[0].mxu0
      %v2836 = vadd.f32 0.0, %v2835
      %v2837 = vpop.f32.mrb[0].mxu0
      %2838 = vmatprep.mubr.f32.mxu0 0.0
      %2839 = vmatmul.mubr.f32.gmra.mrb[0].mxu0 %v2719
      %v2840 = vpop.f32.mrb[0].mxu0
      %v2841 = vadd.f32 0.0, %v2840
      %v2842 = vpop.f32.mrb[0].mxu0
      %2843 = vmatprep.mubr.f32.mxu0 0.0
      %2844 = vmatmul.mubr.f32.gmra.mrb[0].mxu0 %v2722
      %v2845 = vpop.f32.mrb[0].mxu0
      %v2846 = vadd.f32 0.0, %v2845
      %v2847 = vpop.f32.mrb[0].mxu0
      %2848 = vmatprep.mubr.f32.mxu0 0.0
      %2849 = vmatmul.mubr.f32.gmra.mrb[0].mxu0 %v2725
      %v2850 = vpop.f32.mrb[0].mxu0
      %v2851 = vadd.f32 0.0, %v2850
      %v2852 = vpop.f32.mrb[0].mxu0
      %2853 = vmatprep.mubr.f32.mxu0 0.0
      %2854 = vmatmul.mubr.f32.gmra.mrb[0].mxu0 %v2728
      %v2855 = vpop.f32.mrb[0].mxu0
      %v2856 = vadd.f32 0.0, %v2855
      %v2857 = vpop.f32.mrb[0].mxu0
      %2858 = vmatprep.mubr.f32.mxu0 0.0
      %2859 = vmatmul.mubr.f32.gmra.mrb[0].mxu0 %v2731
      %v2860 = vpop.f32.mrb[0].mxu0
      %v2861 = vadd.f32 0.0, %v2860
      %v2862 = vpop.f32.mrb[0].mxu0
      %2863 = vmatprep.mubr.f32.mxu0 0.0
      %2864 = vmatmul.mubr.f32.gmra.mrb[0].mxu0 %v2734
      %v2865 = vpop.f32.mrb[0].mxu0
      %v2866 = vadd.f32 0.0, %v2865
      %v2867 = vpop.f32.mrb[0].mxu0
      %2868 = vmatprep.mubr.f32.mxu0 0.0
      %2869 = vmatmul.mubr.f32.gmra.mrb[0].mxu0 %v2737
      %v2870 = vpop.f32.mrb[0].mxu0
      %v2871 = vadd.f32 0.0, %v2870
      %v2872 = vpop.f32.mrb[0].mxu0
      %2873 = vmatprep.mubr.f32.mxu0 0.0
      %2874 = vmatmul.mubr.f32.gmra.mrb[0].mxu0 %v2740
      %v2875 = vpop.f32.mrb[0].mxu0
      %v2876 = vadd.f32 0.0, %v2875
      %v2877 = vpop.f32.mrb[0].mxu0
      %2878 = vmatprep.mubr.f32.mxu0 0.0
      %2879 = vmatmul.mubr.f32.gmra.mrb[0].mxu0 %v2743
      %v2880 = vpop.f32.mrb[0].mxu0
      %v2881 = vadd.f32 0.0, %v2880
      %v2882 = vpop.f32.mrb[0].mxu0
      %2883 = vmatprep.mubr.f32.mxu0 0.0
      %2884 = vmatmul.mubr.f32.gmra.mrb[0].mxu0 %v2746
      %v2885 = vpop.f32.mrb[0].mxu0
      %v2886 = vadd.f32 0.0, %v2885
      %v2887 = vpop.f32.mrb[0].mxu0
      %2888 = vmatprep.mubr.f32.mxu0 0.0
      %2889 = vmatmul.mubr.f32.gmra.mrb[0].mxu0 %v2749
      %v2890 = vpop.f32.mrb[0].mxu0
      %v2891 = vadd.f32 0.0, %v2890
      %v2892 = vpop.f32.mrb[0].mxu0
      %2893 = vmatprep.mubr.f32.mxu0 0.0
      %2894 = vmatmul.mubr.f32.gmra.mrb[0].mxu0 %v2752
      %v2895 = vpop.f32.mrb[0].mxu0
      %v2896 = vadd.f32 0.0, %v2895
      %v2897 = vpop.f32.mrb[0].mxu0
      %2898 = vmatprep.mubr.f32.mxu0 0.0
      %2899 = vmatmul.mubr.f32.gmra.mrb[0].mxu0 %v2755
      %v2900 = vpop.f32.mrb[0].mxu0
      %v2901 = vadd.f32 0.0, %v2900
      %v2902 = vpop.f32.mrb[0].mxu0
      %2903 = vmatprep.mubr.f32.mxu0 0.0
      %2904 = vmatmul.mubr.f32.gmra.mrb[0].mxu0 %v2758
      %v2905 = vpop.f32.mrb[0].mxu0
      %v2906 = vadd.f32 0.0, %v2905
      %v2907 = vpop.f32.mrb[0].mxu0
      %2908 = vdwg.mxu0
      %v2909 = vadd.f32 %v2676, %v2831
      %v2910 = vadd.f32 %v2677, %v2836
      %v2911 = vadd.f32 %v2678, %v2841
      %v2912 = vadd.f32 %v2679, %v2846
      %v2913 = vadd.f32 %v2680, %v2851
      %v2914 = vadd.f32 %v2681, %v2856
      %v2915 = vadd.f32 %v2682, %v2861
      %v2916 = vadd.f32 %v2683, %v2866
      %v2917 = vadd.f32 %v2684, %v2871
      %v2918 = vadd.f32 %v2685, %v2876
      %v2919 = vadd.f32 %v2686, %v2881
      %v2920 = vadd.f32 %v2687, %v2886
      %v2921 = vadd.f32 %v2688, %v2891
      %v2922 = vadd.f32 %v2689, %v2896
      %v2923 = vadd.f32 %v2690, %v2901
      %v2924 = vadd.f32 %v2691, %v2906
      %v2925 = vld [vmem:[%s412] sm:$0x1]
      %v2927 = vlaneseq
      %v2928 = vshrl.u32 %v2927, 7
      %v2929 = vsub.s32 0, %v2928
      %v2930 = vrot.slane %v2925, %v2929
      %v2932 = vadd.f32 %v2909, %v2930
      %v2933 = vadd.f32 %v2910, %v2930
      %v2934 = vadd.f32 %v2911, %v2930
      %v2935 = vadd.f32 %v2912, %v2930
      %v2936 = vadd.f32 %v2913, %v2930
      %v2937 = vadd.f32 %v2914, %v2930
      %v2938 = vadd.f32 %v2915, %v2930
      %v2939 = vadd.f32 %v2916, %v2930
      %v2940 = vadd.f32 %v2917, %v2930
      %v2941 = vadd.f32 %v2918, %v2930
      %v2942 = vadd.f32 %v2919, %v2930
      %v2943 = vadd.f32 %v2920, %v2930
      %v2944 = vadd.f32 %v2921, %v2930
      %v2945 = vadd.f32 %v2922, %v2930
      %v2946 = vadd.f32 %v2923, %v2930
      %v2947 = vadd.f32 %v2924, %v2930
      %2948 = vst.msk [vmem:[%s424] sm:$0xff] %vm687, %v2932
      %2949 = vst.msk [vmem:[%s424 + $0x8] sm:$0xff] %vm687, %v2933
      %2950 = vst.msk [vmem:[%s424 + $0x10] sm:$0xff] %vm687, %v2934
      %2951 = vst.msk [vmem:[%s424 + $0x18] sm:$0xff] %vm687, %v2935
      %2952 = vst.msk [vmem:[%s424 + $0x20] sm:$0xff] %vm687, %v2936
      %2953 = vst.msk [vmem:[%s424 + $0x28] sm:$0xff] %vm687, %v2937
      %2954 = vst.msk [vmem:[%s424 + $0x30] sm:$0xff] %vm687, %v2938
      %2955 = vst.msk [vmem:[%s424 + $0x38] sm:$0xff] %vm687, %v2939
      %2956 = vst.msk [vmem:[%s424 + $0x40] sm:$0xff] %vm687, %v2940
      %2957 = vst.msk [vmem:[%s424 + $0x48] sm:$0xff] %vm687, %v2941
      %2958 = vst.msk [vmem:[%s424 + $0x50] sm:$0xff] %vm687, %v2942
      %2959 = vst.msk [vmem:[%s424 + $0x58] sm:$0xff] %vm687, %v2943
      %2960 = vst.msk [vmem:[%s424 + $0x60] sm:$0xff] %vm687, %v2944
      %2961 = vst.msk [vmem:[%s424 + $0x68] sm:$0xff] %vm687, %v2945
      %2962 = vst.msk [vmem:[%s424 + $0x70] sm:$0xff] %vm687, %v2946
      %2963 = vst.msk [vmem:[%s424 + $0x78] sm:$0xff] %vm687, %v2947
      %s2964 = smul.u32 16, %s25
      %p2965 = scmp.lt.s32.totalorder %s24, 1
      %s2966 = scalar_select %p2965, %s24, 1
      %p2967 = scmp.lt.s32.totalorder %s2964, 31
      %s2968 = scalar_select %p2967, %s2964, 31
      %p2969 = scmp.lt.s32.totalorder %s26, 0
      %s2970 = scalar_select %p2969, %s26, 0
      %s2971 = sadd.s32 %s2970, %s2968
      %s2972 = smul.addr %s2966, 32
      %s2973 = sadd.s32 %s2971, %s2972
      %s2974 = smul.addr %s2973, 8
      %s2975 = scalar_lea.vmem %s8, %s2974
      // Predicated region
      $region57: #{wide_block_forward.3} parent=51 // pred_check
        %p2976 = pneg %p258
      $region58: #{wide_block_forward.3} parent=51 // pred_check_branch
        %2978 = sbr.rel (%p2976) target = $region60
      $region59: #{wide_block_forward.3} parent=51 // pred_region
        %s2979 = smul.u32 16, %s25
      $region60: #{wide_block_forward.3} parent=51 // pred_fallthru
        _
    $region52: #{wide_block_forward.3} parent=5 // pred_fallthru
      _
    %p2980 = scmp.le.s32.totalorder 2, %s14
    // Predicated region
    $region61: #{wide_block_forward.3} parent=5 // pred_check
      %p2981 = pneg %p2980
    $region62: #{wide_block_forward.3} parent=5 // pred_check_branch
      %2983 = sbr.rel (%p2981) target = $region64
    $region63: #{wide_block_forward.3} parent=5 // pred_region
      %s2984 = ssub.s32 %s14, 2
      // Predicated region
      $region65: #{wide_block_forward.3} parent=63 // pred_check
        %p2985 = pneg %p264
      $region66: #{wide_block_forward.3} parent=63 // pred_check_branch
        %2987 = sbr.rel (%p2985) target = $region68
      $region67: #{wide_block_forward.3} parent=63 // pred_region
        %s2988 = smul.u32 16, %s28
        %p2989 = scmp.lt.s32.totalorder %s27, 1
        %s2990 = scalar_select %p2989, %s27, 1
        %p2991 = scmp.lt.s32.totalorder %s2988, 31
        %s2992 = scalar_select %p2991, %s2988, 31
        %p2993 = scmp.lt.s32.totalorder %s29, 0
        %s2994 = scalar_select %p2993, %s29, 0
        %s2995 = sadd.s32 %s2994, %s2992
        %s2996 = smul.addr %s2990, 32
        %s2997 = sadd.s32 %s2995, %s2996
        %s2998 = smul.addr %s2997, 8
        %s2999 = scalar_lea.vmem %s8, %s2998
      $region68: #{wide_block_forward.3} parent=63 // pred_fallthru
        _
    $region64: #{wide_block_forward.3} parent=5 // pred_fallthru
      _
  $region6: #{wide_block_forward.3} parent=0 // loop_footer
    %s18 = sadd.s32 1, %s14
  $region7: #{wide_block_forward.3} parent=0 // loop_footer_branch
    %13 = sbr.rel target = $region3
  $region8: #{wide_block_forward.3} parent=0 // loop_exit
    _

</llo_original>
